<compile_context>
chip_gen: v6e
topology: v6e:2x2x1
jax: 0.10.0
libtpu: 0.0.40
codegen_flags: <defaults>
</compile_context>

<pallas_src>
import jax
import jax.numpy as jnp
from jax.experimental import pallas as pl
from jax.experimental.pallas import tpu as pltpu

N_INPUT = 784
N_HID = 392
N_BOTTLENECK = 8
N_BOT_PAD = 128      # bottleneck padded to one full 128-lane vreg
N_OUTPUT = 784
_TB_MAX = 512        # batch tile cap (multiple of 16)


def _cdiv(a, b):
    return -(-a // b)


def _round_up(n, m):
    return _cdiv(n, m) * m


def _choose_tiling(B, tb_max=_TB_MAX):
    """Pick (tile_batch, n_tiles, padded_batch).

    - tb is a multiple of 16 (safe for bf16 sublane packing) and <= tb_max
    - n_tiles >= 2 and even so the "parallel" grid axis keeps both v7x TCs busy
    - tb sized to ceil(B / n_tiles) to minimise zero-row padding (e.g. B=300 -> pad 4,
      not 212 as with a fixed 256/512 tile)
    """
    b16 = _round_up(max(B, 1), 16)
    n_tiles = max(2, _cdiv(b16, tb_max))
    if n_tiles % 2:
        n_tiles += 1
    tb = min(tb_max, _round_up(_cdiv(b16, n_tiles), 16))
    b_pad = n_tiles * tb
    return tb, n_tiles, b_pad


def _ae_kernel(x_ref, w1_ref, b1_ref, w2_ref, b2_ref, w3_ref, b3_ref,
               w4_ref, b4_ref, o_ref):
    # All four Linear layers fused per (TB, 784) batch tile.
    # bf16 MXU inputs, f32 accumulation, f32 bias/activation math.
    x = x_ref[...].astype(jnp.bfloat16)               # no-op if x already streamed as bf16
    h = jnp.dot(x, w1_ref[...], preferred_element_type=jnp.float32) + b1_ref[...]
    h = jnp.maximum(h, 0.0).astype(jnp.bfloat16)
    z = jnp.dot(h, w2_ref[...], preferred_element_type=jnp.float32) + b2_ref[...]
    z = jnp.maximum(z, 0.0).astype(jnp.bfloat16)      # padded cols: relu(0 + 0) = 0
    d = jnp.dot(z, w3_ref[...], preferred_element_type=jnp.float32) + b3_ref[...]
    d = jnp.maximum(d, 0.0).astype(jnp.bfloat16)
    y = jnp.dot(d, w4_ref[...], preferred_element_type=jnp.float32) + b4_ref[...]
    o_ref[...] = jax.nn.sigmoid(y).astype(o_ref.dtype)


def prepare_params(params):
    """One-time prep: zero-pad the 8-wide bottleneck to 128 and cast weights to bf16.
    Biases stay f32 (added after the f32-accumulated dot)."""
    w1 = params["w1"].astype(jnp.bfloat16)
    b1 = params["b1"].astype(jnp.float32)
    w2 = jnp.zeros((N_HID, N_BOT_PAD), jnp.bfloat16).at[:, :N_BOTTLENECK].set(
        params["w2"].astype(jnp.bfloat16))
    b2 = jnp.zeros((1, N_BOT_PAD), jnp.float32).at[:, :N_BOTTLENECK].set(
        params["b2"].astype(jnp.float32))
    w3 = jnp.zeros((N_BOT_PAD, N_HID), jnp.bfloat16).at[:N_BOTTLENECK, :].set(
        params["w3"].astype(jnp.bfloat16))
    b3 = params["b3"].astype(jnp.float32)
    w4 = params["w4"].astype(jnp.bfloat16)
    b4 = params["b4"].astype(jnp.float32)
    return dict(w1=w1, b1=b1, w2=w2, b2=b2, w3=w3, b3=b3, w4=w4, b4=b4)


def autoencoder_mlp4_forward(x, prep, out_dtype=None):
    """x: (B, 784), f32 or bf16. prep: output of prepare_params.
    out_dtype defaults to x.dtype (pass jnp.bfloat16 to halve output HBM traffic when
    the consumer is already bf16 — casting in a wrapper just moves the traffic)."""
    B = x.shape[0]
    out_dtype = jnp.dtype(x.dtype) if out_dtype is None else jnp.dtype(out_dtype)
    tb, n_tiles, b_pad = _choose_tiling(B)
    if b_pad != B:
        x = jnp.pad(x, ((0, b_pad - B), (0, 0)))

    w1, b1, w2, b2, w3, b3, w4, b4 = (prep[k] for k in
                                      ("w1", "b1", "w2", "b2", "w3", "b3", "w4", "b4"))

    # x/out stream tile-by-tile (Pallas double-buffers the DMA); weights/biases use a
    # constant index_map so their block index never changes and they are not re-DMA'd.
    def resident(arr):
        return pl.BlockSpec(arr.shape, lambda i: (0, 0))   # all params are 2-D

    param_bytes = sum(int(a.size) * a.dtype.itemsize
                      for a in (w1, b1, w2, b2, w3, b3, w4, b4))
    x_bytes = b_pad * N_INPUT * jnp.dtype(x.dtype).itemsize
    out_bytes = b_pad * N_OUTPUT * out_dtype.itemsize
    flops = 2 * b_pad * (N_INPUT * N_HID + N_HID * N_BOT_PAD
                         + N_BOT_PAD * N_HID + N_HID * N_OUTPUT)
    cost = pl.CostEstimate(flops=flops,
                           transcendentals=b_pad * N_OUTPUT,
                           bytes_accessed=x_bytes + out_bytes + param_bytes)

    out = pl.pallas_call(
        _ae_kernel,
        out_shape=jax.ShapeDtypeStruct((b_pad, N_OUTPUT), out_dtype),
        grid=(n_tiles,),
        in_specs=[
            pl.BlockSpec((tb, N_INPUT), lambda i: (i, 0)),
            resident(w1), resident(b1),
            resident(w2), resident(b2),
            resident(w3), resident(b3),
            resident(w4), resident(b4),
        ],
        out_specs=pl.BlockSpec((tb, N_OUTPUT), lambda i: (i, 0)),
        compiler_params=pltpu.CompilerParams(
            dimension_semantics=("parallel",)),
        cost_estimate=cost,
    )(x, w1, b1, w2, b2, w3, b3, w4, b4)

    return out[:B] if b_pad != B else out


def init_params(key):
    """Deterministic init mimicking nn.Linear default: U(-1/sqrt(fan_in), 1/sqrt(fan_in)).
    Weights are stored transposed as (in, out)."""
    dims = [(N_INPUT, N_HID), (N_HID, N_BOTTLENECK), (N_BOTTLENECK, N_HID), (N_HID, N_OUTPUT)]
    params = {}
    for i, (fan_in, fan_out) in enumerate(dims, start=1):
        key, kw, kb = jax.random.split(key, 3)
        bound = 1.0 / jnp.sqrt(jnp.float32(fan_in))
        params[f"w{i}"] = jax.random.uniform(kw, (fan_in, fan_out), jnp.float32, -bound, bound)
        params[f"b{i}"] = jax.random.uniform(kb, (1, fan_out), jnp.float32, -bound, bound)
    return params


def reference_forward(x, p):
    h = jnp.maximum(x @ p["w1"] + p["b1"], 0.0)
    z = jnp.maximum(h @ p["w2"] + p["b2"], 0.0)
    d = jnp.maximum(z @ p["w3"] + p["b3"], 0.0)
    return jax.nn.sigmoid(d @ p["w4"] + p["b4"])


if __name__ == "__main__":
    key = jax.random.PRNGKey(0)
    key, kx = jax.random.split(key)
    B = 2
    x = jax.random.normal(kx, (B, N_INPUT), jnp.float32)
    params = init_params(key)
    prep = prepare_params(params)
    ref = reference_forward(x, params)        # full-f32 reference

    # f32-I/O path (default: out dtype follows input dtype).
    out = jax.block_until_ready(autoencoder_mlp4_forward(x, prep))
    assert out.shape == (B, N_OUTPUT) and out.dtype == jnp.float32
    # bf16 weights/activations inside the kernel -> relaxed tolerance vs f32 reference.
    assert jnp.allclose(out, ref, atol=2e-2, rtol=2e-2), "f32-I/O mismatch vs JAX reference"

    # bf16 streaming path (producer/consumer already bf16) — halves x/out HBM traffic.
    out_bf16 = jax.block_until_ready(
        autoencoder_mlp4_forward(x.astype(jnp.bfloat16), prep, out_dtype=jnp.bfloat16))
    assert out_bf16.shape == (B, N_OUTPUT) and out_bf16.dtype == jnp.bfloat16
    assert jnp.allclose(out_bf16.astype(jnp.float32), ref, atol=3e-2, rtol=3e-2), \
        "bf16-I/O mismatch vs JAX reference"

    print("KERNEL_OK")
</pallas_src>

<mosaic_0001>
module attributes {stable_mosaic.version = 11 : i64} {
  func.func @_ae_kernel(%arg0: i32, %arg1: memref<16x784xf32, #tpu.memory_space<vmem>>, %arg2: memref<784x392xbf16, #tpu.memory_space<vmem>>, %arg3: memref<1x392xf32, #tpu.memory_space<vmem>>, %arg4: memref<392x128xbf16, #tpu.memory_space<vmem>>, %arg5: memref<1x128xf32, #tpu.memory_space<vmem>>, %arg6: memref<128x392xbf16, #tpu.memory_space<vmem>>, %arg7: memref<1x392xf32, #tpu.memory_space<vmem>>, %arg8: memref<392x784xbf16, #tpu.memory_space<vmem>>, %arg9: memref<1x784xf32, #tpu.memory_space<vmem>>, %arg10: memref<16x784xf32, #tpu.memory_space<vmem>>) attributes {dimension_semantics = [#tpu.dimension_semantics<parallel>], iteration_bounds = array<i64: 2>, scalar_prefetch = 0 : i64, scratch_operands = 0 : i64, tpu.core_type = #tpu.core_type<tc>, window_params = [{transform_indices = @transform_0, window_bounds = array<i64: 16, 784>}, {pipeline_mode = #tpu.pipeline_mode<synchronous>, transform_indices = @transform_1, window_bounds = array<i64: 784, 392>}, {pipeline_mode = #tpu.pipeline_mode<synchronous>, transform_indices = @transform_2, window_bounds = array<i64: 1, 392>}, {pipeline_mode = #tpu.pipeline_mode<synchronous>, transform_indices = @transform_3, window_bounds = array<i64: 392, 128>}, {pipeline_mode = #tpu.pipeline_mode<synchronous>, transform_indices = @transform_4, window_bounds = array<i64: 1, 128>}, {pipeline_mode = #tpu.pipeline_mode<synchronous>, transform_indices = @transform_5, window_bounds = array<i64: 128, 392>}, {pipeline_mode = #tpu.pipeline_mode<synchronous>, transform_indices = @transform_6, window_bounds = array<i64: 1, 392>}, {pipeline_mode = #tpu.pipeline_mode<synchronous>, transform_indices = @transform_7, window_bounds = array<i64: 392, 784>}, {pipeline_mode = #tpu.pipeline_mode<synchronous>, transform_indices = @transform_8, window_bounds = array<i64: 1, 784>}, {transform_indices = @transform_9, window_bounds = array<i64: 16, 784>}]} {
    %c0 = arith.constant 0 : index
    %c0_0 = arith.constant 0 : index
    %0 = vector.load %arg1[%c0, %c0_0] : memref<16x784xf32, #tpu.memory_space<vmem>>, vector<16x784xf32>
    %1 = arith.truncf %0 : vector<16x784xf32> to vector<16x784xbf16>
    %c0_1 = arith.constant 0 : index
    %c0_2 = arith.constant 0 : index
    %2 = vector.load %arg2[%c0_1, %c0_2] : memref<784x392xbf16, #tpu.memory_space<vmem>>, vector<784x392xbf16>
    %cst = arith.constant dense<0.000000e+00> : vector<16x392xf32>
    %3 = tpu.matmul %1, %2, %cst {dimension_numbers = #tpu.dot_dimension_numbers<[1], [0], [0], [1], [0, 0, 1, 1], [], []>} : vector<16x784xbf16>, vector<784x392xbf16>, vector<16x392xf32> -> vector<16x392xf32>
    %c0_3 = arith.constant 0 : index
    %c0_4 = arith.constant 0 : index
    %4 = vector.load %arg3[%c0_3, %c0_4] : memref<1x392xf32, #tpu.memory_space<vmem>>, vector<1x392xf32>
    %5 = vector.broadcast %4 : vector<1x392xf32> to vector<16x392xf32>
    %6 = arith.addf %3, %5 : vector<16x392xf32>
    %cst_5 = arith.constant 0.000000e+00 : f32
    %7 = vector.broadcast %cst_5 : f32 to vector<16x392xf32>
    %8 = arith.maximumf %6, %7 : vector<16x392xf32>
    %9 = arith.truncf %8 : vector<16x392xf32> to vector<16x392xbf16>
    %c0_6 = arith.constant 0 : index
    %c0_7 = arith.constant 0 : index
    %10 = vector.load %arg4[%c0_6, %c0_7] : memref<392x128xbf16, #tpu.memory_space<vmem>>, vector<392x128xbf16>
    %cst_8 = arith.constant dense<0.000000e+00> : vector<16x128xf32>
    %11 = tpu.matmul %9, %10, %cst_8 {dimension_numbers = #tpu.dot_dimension_numbers<[1], [0], [0], [1], [0, 0, 1, 1], [], []>} : vector<16x392xbf16>, vector<392x128xbf16>, vector<16x128xf32> -> vector<16x128xf32>
    %c0_9 = arith.constant 0 : index
    %c0_10 = arith.constant 0 : index
    %12 = vector.load %arg5[%c0_9, %c0_10] : memref<1x128xf32, #tpu.memory_space<vmem>>, vector<1x128xf32>
    %13 = vector.broadcast %12 : vector<1x128xf32> to vector<16x128xf32>
    %14 = arith.addf %11, %13 : vector<16x128xf32>
    %cst_11 = arith.constant 0.000000e+00 : f32
    %15 = vector.broadcast %cst_11 : f32 to vector<16x128xf32>
    %16 = arith.maximumf %14, %15 : vector<16x128xf32>
    %17 = arith.truncf %16 : vector<16x128xf32> to vector<16x128xbf16>
    %c0_12 = arith.constant 0 : index
    %c0_13 = arith.constant 0 : index
    %18 = vector.load %arg6[%c0_12, %c0_13] : memref<128x392xbf16, #tpu.memory_space<vmem>>, vector<128x392xbf16>
    %cst_14 = arith.constant dense<0.000000e+00> : vector<16x392xf32>
    %19 = tpu.matmul %17, %18, %cst_14 {dimension_numbers = #tpu.dot_dimension_numbers<[1], [0], [0], [1], [0, 0, 1, 1], [], []>} : vector<16x128xbf16>, vector<128x392xbf16>, vector<16x392xf32> -> vector<16x392xf32>
    %c0_15 = arith.constant 0 : index
    %c0_16 = arith.constant 0 : index
    %20 = vector.load %arg7[%c0_15, %c0_16] : memref<1x392xf32, #tpu.memory_space<vmem>>, vector<1x392xf32>
    %21 = vector.broadcast %20 : vector<1x392xf32> to vector<16x392xf32>
    %22 = arith.addf %19, %21 : vector<16x392xf32>
    %cst_17 = arith.constant 0.000000e+00 : f32
    %23 = vector.broadcast %cst_17 : f32 to vector<16x392xf32>
    %24 = arith.maximumf %22, %23 : vector<16x392xf32>
    %25 = arith.truncf %24 : vector<16x392xf32> to vector<16x392xbf16>
    %c0_18 = arith.constant 0 : index
    %c0_19 = arith.constant 0 : index
    %26 = vector.load %arg8[%c0_18, %c0_19] : memref<392x784xbf16, #tpu.memory_space<vmem>>, vector<392x784xbf16>
    %cst_20 = arith.constant dense<0.000000e+00> : vector<16x784xf32>
    %27 = tpu.matmul %25, %26, %cst_20 {dimension_numbers = #tpu.dot_dimension_numbers<[1], [0], [0], [1], [0, 0, 1, 1], [], []>} : vector<16x392xbf16>, vector<392x784xbf16>, vector<16x784xf32> -> vector<16x784xf32>
    %c0_21 = arith.constant 0 : index
    %c0_22 = arith.constant 0 : index
    %28 = vector.load %arg9[%c0_21, %c0_22] : memref<1x784xf32, #tpu.memory_space<vmem>>, vector<1x784xf32>
    %29 = vector.broadcast %28 : vector<1x784xf32> to vector<16x784xf32>
    %30 = arith.addf %27, %29 : vector<16x784xf32>
    %31 = arith.negf %30 : vector<16x784xf32>
    %32 = math.exp %31 : vector<16x784xf32>
    %cst_23 = arith.constant 1.000000e+00 : f32
    %33 = vector.broadcast %cst_23 : f32 to vector<16x784xf32>
    %34 = arith.addf %33, %32 : vector<16x784xf32>
    %35 = arith.divf %33, %34 : vector<16x784xf32>
    %c0_24 = arith.constant 0 : index
    %c0_25 = arith.constant 0 : index
    %36 = vector.load %arg10[%c0_24, %c0_25] : memref<16x784xf32, #tpu.memory_space<vmem>>, vector<16x784xf32>
    tpu.vector_store %arg10[%c0_24, %c0_25], %35 {strides = array<i32>} : memref<16x784xf32, #tpu.memory_space<vmem>>, vector<16x784xf32>,
    return
  }
  func.func @transform_0(%arg0: i32) -> (i32, i32) {
    %c0_i32 = arith.constant 0 : i32
    %c0_i32_0 = arith.constant 0 : i32
    return %arg0, %c0_i32 : i32, i32
  }
  func.func @transform_1(%arg0: i32) -> (i32, i32) {
    %c0_i32 = arith.constant 0 : i32
    %c0_i32_0 = arith.constant 0 : i32
    %c0_i32_1 = arith.constant 0 : i32
    return %c0_i32, %c0_i32_0 : i32, i32
  }
  func.func @transform_2(%arg0: i32) -> (i32, i32) {
    %c0_i32 = arith.constant 0 : i32
    %c0_i32_0 = arith.constant 0 : i32
    %c0_i32_1 = arith.constant 0 : i32
    return %c0_i32, %c0_i32_0 : i32, i32
  }
  func.func @transform_3(%arg0: i32) -> (i32, i32) {
    %c0_i32 = arith.constant 0 : i32
    %c0_i32_0 = arith.constant 0 : i32
    %c0_i32_1 = arith.constant 0 : i32
    return %c0_i32, %c0_i32_0 : i32, i32
  }
  func.func @transform_4(%arg0: i32) -> (i32, i32) {
    %c0_i32 = arith.constant 0 : i32
    %c0_i32_0 = arith.constant 0 : i32
    %c0_i32_1 = arith.constant 0 : i32
    return %c0_i32, %c0_i32_0 : i32, i32
  }
  func.func @transform_5(%arg0: i32) -> (i32, i32) {
    %c0_i32 = arith.constant 0 : i32
    %c0_i32_0 = arith.constant 0 : i32
    %c0_i32_1 = arith.constant 0 : i32
    return %c0_i32, %c0_i32_0 : i32, i32
  }
  func.func @transform_6(%arg0: i32) -> (i32, i32) {
    %c0_i32 = arith.constant 0 : i32
    %c0_i32_0 = arith.constant 0 : i32
    %c0_i32_1 = arith.constant 0 : i32
    return %c0_i32, %c0_i32_0 : i32, i32
  }
  func.func @transform_7(%arg0: i32) -> (i32, i32) {
    %c0_i32 = arith.constant 0 : i32
    %c0_i32_0 = arith.constant 0 : i32
    %c0_i32_1 = arith.constant 0 : i32
    return %c0_i32, %c0_i32_0 : i32, i32
  }
  func.func @transform_8(%arg0: i32) -> (i32, i32) {
    %c0_i32 = arith.constant 0 : i32
    %c0_i32_0 = arith.constant 0 : i32
    %c0_i32_1 = arith.constant 0 : i32
    return %c0_i32, %c0_i32_0 : i32, i32
  }
  func.func @transform_9(%arg0: i32) -> (i32, i32) {
    %c0_i32 = arith.constant 0 : i32
    %c0_i32_0 = arith.constant 0 : i32
    return %arg0, %c0_i32 : i32, i32
  }
}

</mosaic_0001>

<llo_original>
// kernel: tpu_custom_call.1
$region0: #{tpu_custom_call.1}
  #allocation0 [shape = 'u32[]', space=smem, size = 0x4, offset = 0x4, fixed_abs, tag = 'smem constant byte address 0x4 - core index']
  #allocation1 [shape = 'u32[144,128]{1,0:T(1,128)}', space=vmem, size = 0x12000, scoped, tag = 'internal scratch']
  %s0 = inlined_call_operand.vmem [shape: f32[32,784], index: 0, kind: input, shape index: {}]
  %s1 = inlined_call_operand.vmem [shape: bf16[784,392], index: 1, kind: input, shape index: {}]
  %s2 = inlined_call_operand.vmem [shape: f32[1,392], index: 2, kind: input, shape index: {}]
  %s3 = inlined_call_operand.vmem [shape: bf16[392,128], index: 3, kind: input, shape index: {}]
  %s4 = inlined_call_operand.vmem [shape: f32[1,128], index: 4, kind: input, shape index: {}]
  %s5 = inlined_call_operand.vmem [shape: bf16[128,392], index: 5, kind: input, shape index: {}]
  %s6 = inlined_call_operand.vmem [shape: f32[1,392], index: 6, kind: input, shape index: {}]
  %s7 = inlined_call_operand.vmem [shape: bf16[392,784], index: 7, kind: input, shape index: {}]
  %s8 = inlined_call_operand.vmem [shape: f32[1,784], index: 8, kind: input, shape index: {}]
  %s9 = inlined_call_operand.hbm [shape: f32[32,784], index: 9, kind: output, shape index: {}]
  %s10 = sld [smem:[#allocation0]]
  $region69: #{tpu_custom_call.1} parent=0
    _
  %s12 = ssub.s32 1, %s10
  %s13 = scalar_select 0, %s12, %s10
  $region1: #{tpu_custom_call.1} parent=0
    #allocation2 [shape = 'u8[114688]{0}', space=vmem, size = 0x1c000, scoped, tag = 'output window, operand 0']
    #allocation3 [shape = 's32[2]{0}', space=sflag, size = 0x8, scoped, tag = 'scoped memory for tpu_custom_call.1']
    %14 = vsyncpa [#allocation3], 0
    %s15 = scalar_lea.sflag [#allocation3], 1
    %16 = vsyncpa %s15, 0
    loop: start=0, step=1, limit=4
    $region2: #{tpu_custom_call.1} parent=1 // loop_pre_header
      _
    $region3: #{tpu_custom_call.1} parent=1 // loop_header
      %s18 = sphi 0, %s22
      %p19 = scmp.ge.s32.totalorder %s18, 4
      %s28 = sphi 0, %s30
      %s31 = sphi 0, %s28
      %s32 = sphi 0, %s31
      %s48 = sphi 0, %s32
      %s52 = sphi 0, %s52
      %s54 = sphi 0, %s52
      %s55 = sphi 0, %s54
      %s69 = sphi 0, %s55
      %s73 = sphi 0, %s73
      %s75 = sphi 0, %s73
      %s76 = sphi 0, %s75
      %s90 = sphi 0, %s76
      %s94 = sphi 0, %s94
      %s96 = sphi 0, %s94
      %s97 = sphi 0, %s96
      %s111 = sphi 0, %s97
      %s115 = sphi 0, %s115
      %s117 = sphi 0, %s115
      %s118 = sphi 0, %s117
      %s132 = sphi 0, %s118
      %s136 = sphi 0, %s136
      %s138 = sphi 0, %s136
      %s139 = sphi 0, %s138
      %s153 = sphi 0, %s139
      %s157 = sphi 0, %s157
      %s159 = sphi 0, %s157
      %s160 = sphi 0, %s159
      %s174 = sphi 0, %s160
      %s178 = sphi 0, %s178
      %s180 = sphi 0, %s178
      %s181 = sphi 0, %s180
      %s195 = sphi 0, %s181
      %s199 = sphi 0, %s199
      %s201 = sphi 0, %s199
      %s202 = sphi 0, %s201
      %s216 = sphi 0, %s202
      %s222 = sphi 0, %s224
      %s225 = sphi 0, %s222
      %s226 = sphi 0, %s225
      %s242 = sphi 0, %s226
    $region4: #{tpu_custom_call.1} parent=1 // loop_header_branch
      %21 = sbr.rel (%p19) target = $region8
    $region5: #{tpu_custom_call.1} parent=1 // loop_body
      %s23 = ssub.s32 %s18, 1
      %s24 = ssub.s32 %s18, 2
      %s25 = sadd.s32 %s18, 1
      %s26 = ssub.s32 %s18, %s25
      %p27 = scmp.eq.s32.totalorder %s26, 0
      %s29 = sadd.s32 %s28, 1
      %s30 = scalar_select %p27, %s28, %s29
      %p33 = pneg %p27
      %p34 = scmp.eq.s32.totalorder %s18, 1
      %p35 = por %p33, %p34
      %p36 = scmp.ne.s32.totalorder %s28, %s31
      %p37 = scmp.eq.s32.totalorder %s18, 0
      %p38 = por %p36, %p37
      %p39 = scmp.ne.s32.totalorder %s28, %s31
      %p40 = scmp.eq.s32.totalorder %s23, 1
      %p41 = por %p39, %p40
      %p42 = scmp.ne.s32.totalorder %s31, %s32
      %p43 = scmp.eq.s32.totalorder %s23, 0
      %p44 = por %p42, %p43
      %p45 = scmp.ne.s32.totalorder %s31, %s32
      %p46 = scmp.eq.s32.totalorder %s24, 1
      %p47 = por %p45, %p46
      %p49 = scmp.ne.s32.totalorder %s32, %s48
      %p50 = scmp.eq.s32.totalorder %s24, 0
      %p51 = por %p49, %p50
      %s53 = sadd.s32 %s52, 1
      %p56 = scmp.eq.s32.totalorder %s18, 1
      %p57 = scmp.ne.s32.totalorder %s52, %s54
      %p58 = scmp.eq.s32.totalorder %s18, 0
      %p59 = por %p57, %p58
      %p60 = scmp.ne.s32.totalorder %s52, %s54
      %p61 = scmp.eq.s32.totalorder %s23, 1
      %p62 = por %p60, %p61
      %p63 = scmp.ne.s32.totalorder %s54, %s55
      %p64 = scmp.eq.s32.totalorder %s23, 0
      %p65 = por %p63, %p64
      %p66 = scmp.ne.s32.totalorder %s54, %s55
      %p67 = scmp.eq.s32.totalorder %s24, 1
      %p68 = por %p66, %p67
      %p70 = scmp.ne.s32.totalorder %s55, %s69
      %p71 = scmp.eq.s32.totalorder %s24, 0
      %p72 = por %p70, %p71
      %s74 = sadd.s32 %s73, 1
      %p77 = scmp.eq.s32.totalorder %s18, 1
      %p78 = scmp.ne.s32.totalorder %s73, %s75
      %p79 = scmp.eq.s32.totalorder %s18, 0
      %p80 = por %p78, %p79
      %p81 = scmp.ne.s32.totalorder %s73, %s75
      %p82 = scmp.eq.s32.totalorder %s23, 1
      %p83 = por %p81, %p82
      %p84 = scmp.ne.s32.totalorder %s75, %s76
      %p85 = scmp.eq.s32.totalorder %s23, 0
      %p86 = por %p84, %p85
      %p87 = scmp.ne.s32.totalorder %s75, %s76
      %p88 = scmp.eq.s32.totalorder %s24, 1
      %p89 = por %p87, %p88
      %p91 = scmp.ne.s32.totalorder %s76, %s90
      %p92 = scmp.eq.s32.totalorder %s24, 0
      %p93 = por %p91, %p92
      %s95 = sadd.s32 %s94, 1
      %p98 = scmp.eq.s32.totalorder %s18, 1
      %p99 = scmp.ne.s32.totalorder %s94, %s96
      %p100 = scmp.eq.s32.totalorder %s18, 0
      %p101 = por %p99, %p100
      %p102 = scmp.ne.s32.totalorder %s94, %s96
      %p103 = scmp.eq.s32.totalorder %s23, 1
      %p104 = por %p102, %p103
      %p105 = scmp.ne.s32.totalorder %s96, %s97
      %p106 = scmp.eq.s32.totalorder %s23, 0
      %p107 = por %p105, %p106
      %p108 = scmp.ne.s32.totalorder %s96, %s97
      %p109 = scmp.eq.s32.totalorder %s24, 1
      %p110 = por %p108, %p109
      %p112 = scmp.ne.s32.totalorder %s97, %s111
      %p113 = scmp.eq.s32.totalorder %s24, 0
      %p114 = por %p112, %p113
      %s116 = sadd.s32 %s115, 1
      %p119 = scmp.eq.s32.totalorder %s18, 1
      %p120 = scmp.ne.s32.totalorder %s115, %s117
      %p121 = scmp.eq.s32.totalorder %s18, 0
      %p122 = por %p120, %p121
      %p123 = scmp.ne.s32.totalorder %s115, %s117
      %p124 = scmp.eq.s32.totalorder %s23, 1
      %p125 = por %p123, %p124
      %p126 = scmp.ne.s32.totalorder %s117, %s118
      %p127 = scmp.eq.s32.totalorder %s23, 0
      %p128 = por %p126, %p127
      %p129 = scmp.ne.s32.totalorder %s117, %s118
      %p130 = scmp.eq.s32.totalorder %s24, 1
      %p131 = por %p129, %p130
      %p133 = scmp.ne.s32.totalorder %s118, %s132
      %p134 = scmp.eq.s32.totalorder %s24, 0
      %p135 = por %p133, %p134
      %s137 = sadd.s32 %s136, 1
      %p140 = scmp.eq.s32.totalorder %s18, 1
      %p141 = scmp.ne.s32.totalorder %s136, %s138
      %p142 = scmp.eq.s32.totalorder %s18, 0
      %p143 = por %p141, %p142
      %p144 = scmp.ne.s32.totalorder %s136, %s138
      %p145 = scmp.eq.s32.totalorder %s23, 1
      %p146 = por %p144, %p145
      %p147 = scmp.ne.s32.totalorder %s138, %s139
      %p148 = scmp.eq.s32.totalorder %s23, 0
      %p149 = por %p147, %p148
      %p150 = scmp.ne.s32.totalorder %s138, %s139
      %p151 = scmp.eq.s32.totalorder %s24, 1
      %p152 = por %p150, %p151
      %p154 = scmp.ne.s32.totalorder %s139, %s153
      %p155 = scmp.eq.s32.totalorder %s24, 0
      %p156 = por %p154, %p155
      %s158 = sadd.s32 %s157, 1
      %p161 = scmp.eq.s32.totalorder %s18, 1
      %p162 = scmp.ne.s32.totalorder %s157, %s159
      %p163 = scmp.eq.s32.totalorder %s18, 0
      %p164 = por %p162, %p163
      %p165 = scmp.ne.s32.totalorder %s157, %s159
      %p166 = scmp.eq.s32.totalorder %s23, 1
      %p167 = por %p165, %p166
      %p168 = scmp.ne.s32.totalorder %s159, %s160
      %p169 = scmp.eq.s32.totalorder %s23, 0
      %p170 = por %p168, %p169
      %p171 = scmp.ne.s32.totalorder %s159, %s160
      %p172 = scmp.eq.s32.totalorder %s24, 1
      %p173 = por %p171, %p172
      %p175 = scmp.ne.s32.totalorder %s160, %s174
      %p176 = scmp.eq.s32.totalorder %s24, 0
      %p177 = por %p175, %p176
      %s179 = sadd.s32 %s178, 1
      %p182 = scmp.eq.s32.totalorder %s18, 1
      %p183 = scmp.ne.s32.totalorder %s178, %s180
      %p184 = scmp.eq.s32.totalorder %s18, 0
      %p185 = por %p183, %p184
      %p186 = scmp.ne.s32.totalorder %s178, %s180
      %p187 = scmp.eq.s32.totalorder %s23, 1
      %p188 = por %p186, %p187
      %p189 = scmp.ne.s32.totalorder %s180, %s181
      %p190 = scmp.eq.s32.totalorder %s23, 0
      %p191 = por %p189, %p190
      %p192 = scmp.ne.s32.totalorder %s180, %s181
      %p193 = scmp.eq.s32.totalorder %s24, 1
      %p194 = por %p192, %p193
      %p196 = scmp.ne.s32.totalorder %s181, %s195
      %p197 = scmp.eq.s32.totalorder %s24, 0
      %p198 = por %p196, %p197
      %s200 = sadd.s32 %s199, 1
      %p203 = scmp.eq.s32.totalorder %s18, 1
      %p204 = scmp.ne.s32.totalorder %s199, %s201
      %p205 = scmp.eq.s32.totalorder %s18, 0
      %p206 = por %p204, %p205
      %p207 = scmp.ne.s32.totalorder %s199, %s201
      %p208 = scmp.eq.s32.totalorder %s23, 1
      %p209 = por %p207, %p208
      %p210 = scmp.ne.s32.totalorder %s201, %s202
      %p211 = scmp.eq.s32.totalorder %s23, 0
      %p212 = por %p210, %p211
      %p213 = scmp.ne.s32.totalorder %s201, %s202
      %p214 = scmp.eq.s32.totalorder %s24, 1
      %p215 = por %p213, %p214
      %p217 = scmp.ne.s32.totalorder %s202, %s216
      %p218 = scmp.eq.s32.totalorder %s24, 0
      %p219 = por %p217, %p218
      %s220 = ssub.s32 %s18, %s25
      %p221 = scmp.eq.s32.totalorder %s220, 0
      %s223 = sadd.s32 %s222, 1
      %s224 = scalar_select %p221, %s222, %s223
      %p227 = pneg %p221
      %p228 = scmp.eq.s32.totalorder %s18, 1
      %p229 = por %p227, %p228
      %p230 = scmp.ne.s32.totalorder %s222, %s225
      %p231 = scmp.eq.s32.totalorder %s18, 0
      %p232 = por %p230, %p231
      %p233 = scmp.ne.s32.totalorder %s222, %s225
      %p234 = scmp.eq.s32.totalorder %s23, 1
      %p235 = por %p233, %p234
      %p236 = scmp.ne.s32.totalorder %s225, %s226
      %p237 = scmp.eq.s32.totalorder %s23, 0
      %p238 = por %p236, %p237
      %p239 = scmp.ne.s32.totalorder %s225, %s226
      %p240 = scmp.eq.s32.totalorder %s24, 1
      %p241 = por %p239, %p240
      %p243 = scmp.ne.s32.totalorder %s226, %s242
      %p244 = scmp.eq.s32.totalorder %s24, 0
      %p245 = por %p243, %p244
      %p246 = scmp.le.s32.totalorder 1, %s18
      %p247 = scmp.lt.s32.totalorder %s18, 3
      %p248 = pnand %p246, %p247
      %p249 = pneg %p248
      // Predicated region
      $region9: #{tpu_custom_call.1} parent=5 // pred_check
        _
      $region10: #{tpu_custom_call.1} parent=5 // pred_check_branch
        %251 = sbr.rel (%p248) target = $region12
      $region11: #{tpu_custom_call.1} parent=5 // pred_region
        %s252 = ssub.s32 %s18, 1
        // Predicated region
        $region13: #{tpu_custom_call.1} parent=11 // pred_check
          %p253 = pneg %p65
        $region14: #{tpu_custom_call.1} parent=11 // pred_check_branch
          %255 = sbr.rel (%p253) target = $region16
        $region15: #{tpu_custom_call.1} parent=11 // pred_region
          _
        $region16: #{tpu_custom_call.1} parent=11 // pred_fallthru
          _
        // Predicated region
        $region17: #{tpu_custom_call.1} parent=11 // pred_check
          %p256 = pneg %p86
        $region18: #{tpu_custom_call.1} parent=11 // pred_check_branch
          %258 = sbr.rel (%p256) target = $region20
        $region19: #{tpu_custom_call.1} parent=11 // pred_region
          _
        $region20: #{tpu_custom_call.1} parent=11 // pred_fallthru
          _
        // Predicated region
        $region21: #{tpu_custom_call.1} parent=11 // pred_check
          %p259 = pneg %p107
        $region22: #{tpu_custom_call.1} parent=11 // pred_check_branch
          %261 = sbr.rel (%p259) target = $region24
        $region23: #{tpu_custom_call.1} parent=11 // pred_region
          _
        $region24: #{tpu_custom_call.1} parent=11 // pred_fallthru
          _
        // Predicated region
        $region25: #{tpu_custom_call.1} parent=11 // pred_check
          %p262 = pneg %p128
        $region26: #{tpu_custom_call.1} parent=11 // pred_check_branch
          %264 = sbr.rel (%p262) target = $region28
        $region27: #{tpu_custom_call.1} parent=11 // pred_region
          _
        $region28: #{tpu_custom_call.1} parent=11 // pred_fallthru
          _
        // Predicated region
        $region29: #{tpu_custom_call.1} parent=11 // pred_check
          %p265 = pneg %p149
        $region30: #{tpu_custom_call.1} parent=11 // pred_check_branch
          %267 = sbr.rel (%p265) target = $region32
        $region31: #{tpu_custom_call.1} parent=11 // pred_region
          _
        $region32: #{tpu_custom_call.1} parent=11 // pred_fallthru
          _
        // Predicated region
        $region33: #{tpu_custom_call.1} parent=11 // pred_check
          %p268 = pneg %p170
        $region34: #{tpu_custom_call.1} parent=11 // pred_check_branch
          %270 = sbr.rel (%p268) target = $region36
        $region35: #{tpu_custom_call.1} parent=11 // pred_region
          _
        $region36: #{tpu_custom_call.1} parent=11 // pred_fallthru
          _
        // Predicated region
        $region37: #{tpu_custom_call.1} parent=11 // pred_check
          %p271 = pneg %p191
        $region38: #{tpu_custom_call.1} parent=11 // pred_check_branch
          %273 = sbr.rel (%p271) target = $region40
        $region39: #{tpu_custom_call.1} parent=11 // pred_region
          _
        $region40: #{tpu_custom_call.1} parent=11 // pred_fallthru
          _
        // Predicated region
        $region41: #{tpu_custom_call.1} parent=11 // pred_check
          %p274 = pneg %p212
        $region42: #{tpu_custom_call.1} parent=11 // pred_check_branch
          %276 = sbr.rel (%p274) target = $region44
        $region43: #{tpu_custom_call.1} parent=11 // pred_region
          _
        $region44: #{tpu_custom_call.1} parent=11 // pred_fallthru
          _
      $region12: #{tpu_custom_call.1} parent=5 // pred_fallthru
        _
      %p277 = scmp.lt.s32.totalorder %s18, 2
      // Predicated region
      $region45: #{tpu_custom_call.1} parent=5 // pred_check
        %p278 = pneg %p277
      $region46: #{tpu_custom_call.1} parent=5 // pred_check_branch
        %280 = sbr.rel (%p278) target = $region48
      $region47: #{tpu_custom_call.1} parent=5 // pred_region
        // Predicated region
        $region49: #{tpu_custom_call.1} parent=47 // pred_check
          %p281 = pneg %p38
        $region50: #{tpu_custom_call.1} parent=47 // pred_check_branch
          %283 = sbr.rel (%p281) target = $region52
        $region51: #{tpu_custom_call.1} parent=47 // pred_region
          %s284 = smul.u32 2, %s18
          %p285 = scmp.lt.s32.totalorder %s284, 3
          %s286 = scalar_select %p285, %s284, 3
          %s287 = smul.addr %s286, 7
          %s288 = smul.addr %s287, 8
          %s289 = scalar_lea.vmem %s0, %s288
          %s290 = smul.u32 2, %s18
        $region52: #{tpu_custom_call.1} parent=47 // pred_fallthru
          _
      $region48: #{tpu_custom_call.1} parent=5 // pred_fallthru
        _
      %p291 = scmp.le.s32.totalorder 1, %s18
      %p292 = scmp.lt.s32.totalorder %s18, 3
      %p293 = pnand %p291, %p292
      %p294 = pneg %p293
      // Predicated region
      $region53: #{tpu_custom_call.1} parent=5 // pred_check
        _
      $region54: #{tpu_custom_call.1} parent=5 // pred_check_branch
        %296 = sbr.rel (%p293) target = $region56
      $region55: #{tpu_custom_call.1} parent=5 // pred_region
        %s297 = ssub.s32 %s18, 1
        %s298 = smul.u32 2, %s23
        %p299 = scmp.lt.s32.totalorder %s298, 3
        %s300 = scalar_select %p299, %s298, 3
        %s301 = smul.addr %s300, 7
        %s302 = smul.addr %s301, 8
        %s303 = scalar_lea.vmem %s0, %s302
        %p304 = pneg %p44
        %p305 = pneg %p41
        %p306 = pneg %p65
        %p307 = pneg %p62
        %p308 = pneg %p86
        %p309 = pneg %p83
        %p310 = pneg %p107
        %p311 = pneg %p104
        %p312 = pneg %p128
        %p313 = pneg %p125
        %p314 = pneg %p149
        %p315 = pneg %p146
        %p316 = pneg %p170
        %p317 = pneg %p167
        %p318 = pneg %p191
        %p319 = pneg %p188
        %p320 = pneg %p212
        %p321 = pneg %p209
        %p322 = pneg %p238
        %p323 = pneg %p235
        %s324 = sand.u32 %s225, 1
        %s325 = scalar_lea.sflag [#allocation3], %s324
        %s326 = sand.u32 %s225, 1
        %s327 = smul.addr %s326, 112
        %s328 = scalar_lea.vmem [#allocation2], %s327
        %s329 = smul.u32 2, %s23
        %p330 = scmp.lt.s32.totalorder %s329, 3
        %s331 = scalar_select %p330, %s329, 3
        %s332 = smul.addr %s331, 7
        %s333 = smul.addr %s332, 8
        %s334 = scalar_lea.vmem %s0, %s333
        %s335 = smul.u32 2, %s23
        %s336 = smul.u32 2, %s23
        %v338 = vld [vmem:[%s334] sm:$0xff]
        %v339 = vld [vmem:[%s334 + $0x8] sm:$0xff]
        %v340 = vld [vmem:[%s334 + $0x10] sm:$0xff]
        %v341 = vld [vmem:[%s334 + $0x18] sm:$0xff]
        %v342 = vld [vmem:[%s334 + $0x20] sm:$0xff]
        %v343 = vld [vmem:[%s334 + $0x28] sm:$0xff]
        %v344 = vld [vmem:[%s334 + $0x30] sm:$0xff]
        %v345 = vld [vmem:[%s334 + $0x38] sm:$0xff]
        %v346 = vld [vmem:[%s334 + $0x40] sm:$0xff]
        %v347 = vld [vmem:[%s334 + $0x48] sm:$0xff]
        %v348 = vld [vmem:[%s334 + $0x50] sm:$0xff]
        %v349 = vld [vmem:[%s334 + $0x58] sm:$0xff]
        %v350 = vld [vmem:[%s334 + $0x60] sm:$0xff]
        %v351 = vld [vmem:[%s334 + $0x68] sm:$0xff]
        %v352 = vpack.c.bf16 %v345, %v338
        %v353 = vpack.c.bf16 %v346, %v339
        %v354 = vpack.c.bf16 %v347, %v340
        %v355 = vpack.c.bf16 %v348, %v341
        %v356 = vpack.c.bf16 %v349, %v342
        %v357 = vpack.c.bf16 %v350, %v343
        %v358 = vpack.c.bf16 %v351, %v344
        %v359 = vld [vmem:[%s1] sm:$0xff]
        %v360 = vld [vmem:[%s1 + $0x8] sm:$0xff]
        %v361 = vld [vmem:[%s1 + $0x10] sm:$0xff]
        %v362 = vld [vmem:[%s1 + $0x18] sm:$0xff]
        %v363 = vld [vmem:[%s1 + $0x20] sm:$0xff]
        %v364 = vld [vmem:[%s1 + $0x28] sm:$0xff]
        %v365 = vld [vmem:[%s1 + $0x30] sm:$0xff]
        %v366 = vld [vmem:[%s1 + $0x38] sm:$0xff]
        %v367 = vld [vmem:[%s1 + $0x40] sm:$0xff]
        %v368 = vld [vmem:[%s1 + $0x48] sm:$0xff]
        %v369 = vld [vmem:[%s1 + $0x50] sm:$0xff]
        %v370 = vld [vmem:[%s1 + $0x58] sm:$0xff]
        %v371 = vld [vmem:[%s1 + $0x60] sm:$0xff]
        %v372 = vld [vmem:[%s1 + $0x68] sm:$0xff]
        %v373 = vld [vmem:[%s1 + $0x70] sm:$0xff]
        %v374 = vld [vmem:[%s1 + $0x78] sm:$0xff]
        %v375 = vld [vmem:[%s1 + $0x80] sm:$0xff]
        %v376 = vld [vmem:[%s1 + $0x88] sm:$0xff]
        %v377 = vld [vmem:[%s1 + $0x90] sm:$0xff]
        %v378 = vld [vmem:[%s1 + $0x98] sm:$0xff]
        %v379 = vld [vmem:[%s1 + $0xa0] sm:$0xff]
        %v380 = vld [vmem:[%s1 + $0xa8] sm:$0xff]
        %v381 = vld [vmem:[%s1 + $0xb0] sm:$0xff]
        %v382 = vld [vmem:[%s1 + $0xb8] sm:$0xff]
        %v383 = vld [vmem:[%s1 + $0xc0] sm:$0xff]
        %v384 = vld [vmem:[%s1 + $0xc8] sm:$0xff]
        %v385 = vld [vmem:[%s1 + $0xd0] sm:$0xff]
        %v386 = vld [vmem:[%s1 + $0xd8] sm:$0xff]
        %v387 = vld [vmem:[%s1 + $0xe0] sm:$0xff]
        %v388 = vld [vmem:[%s1 + $0xe8] sm:$0xff]
        %v389 = vld [vmem:[%s1 + $0xf0] sm:$0xff]
        %v390 = vld [vmem:[%s1 + $0xf8] sm:$0xff]
        %v391 = vld [vmem:[%s1 + $0x100] sm:$0xff]
        %v392 = vld [vmem:[%s1 + $0x108] sm:$0xff]
        %v393 = vld [vmem:[%s1 + $0x110] sm:$0xff]
        %v394 = vld [vmem:[%s1 + $0x118] sm:$0xff]
        %v395 = vld [vmem:[%s1 + $0x120] sm:$0xff]
        %v396 = vld [vmem:[%s1 + $0x128] sm:$0xff]
        %v397 = vld [vmem:[%s1 + $0x130] sm:$0xff]
        %v398 = vld [vmem:[%s1 + $0x138] sm:$0xff]
        %v399 = vld [vmem:[%s1 + $0x140] sm:$0xff]
        %v400 = vld [vmem:[%s1 + $0x148] sm:$0xff]
        %v401 = vld [vmem:[%s1 + $0x150] sm:$0xff]
        %v402 = vld [vmem:[%s1 + $0x158] sm:$0xff]
        %v403 = vld [vmem:[%s1 + $0x160] sm:$0xff]
        %v404 = vld [vmem:[%s1 + $0x168] sm:$0xff]
        %v405 = vld [vmem:[%s1 + $0x170] sm:$0xff]
        %v406 = vld [vmem:[%s1 + $0x178] sm:$0xff]
        %v407 = vld [vmem:[%s1 + $0x180] sm:$0xff]
        %v408 = vld [vmem:[%s1 + $0x188] sm:$0xff]
        %v409 = vld [vmem:[%s1 + $0x190] sm:$0xff]
        %v410 = vld [vmem:[%s1 + $0x198] sm:$0xff]
        %v411 = vld [vmem:[%s1 + $0x1a0] sm:$0xff]
        %v412 = vld [vmem:[%s1 + $0x1a8] sm:$0xff]
        %v413 = vld [vmem:[%s1 + $0x1b0] sm:$0xff]
        %v414 = vld [vmem:[%s1 + $0x1b8] sm:$0xff]
        %v415 = vld [vmem:[%s1 + $0x1c0] sm:$0xff]
        %v416 = vld [vmem:[%s1 + $0x1c8] sm:$0xff]
        %v417 = vld [vmem:[%s1 + $0x1d0] sm:$0xff]
        %v418 = vld [vmem:[%s1 + $0x1d8] sm:$0xff]
        %v419 = vld [vmem:[%s1 + $0x1e0] sm:$0xff]
        %v420 = vld [vmem:[%s1 + $0x1e8] sm:$0xff]
        %v421 = vld [vmem:[%s1 + $0x1f0] sm:$0xff]
        %v422 = vld [vmem:[%s1 + $0x1f8] sm:$0xff]
        %v423 = vld [vmem:[%s1 + $0x200] sm:$0xff]
        %v424 = vld [vmem:[%s1 + $0x208] sm:$0xff]
        %v425 = vld [vmem:[%s1 + $0x210] sm:$0xff]
        %v426 = vld [vmem:[%s1 + $0x218] sm:$0xff]
        %v427 = vld [vmem:[%s1 + $0x220] sm:$0xff]
        %v428 = vld [vmem:[%s1 + $0x228] sm:$0xff]
        %v429 = vld [vmem:[%s1 + $0x230] sm:$0xff]
        %v430 = vld [vmem:[%s1 + $0x238] sm:$0xff]
        %v431 = vld [vmem:[%s1 + $0x240] sm:$0xff]
        %v432 = vld [vmem:[%s1 + $0x248] sm:$0xff]
        %v433 = vld [vmem:[%s1 + $0x250] sm:$0xff]
        %v434 = vld [vmem:[%s1 + $0x258] sm:$0xff]
        %v435 = vld [vmem:[%s1 + $0x260] sm:$0xff]
        %v436 = vld [vmem:[%s1 + $0x268] sm:$0xff]
        %v437 = vld [vmem:[%s1 + $0x270] sm:$0xff]
        %v438 = vld [vmem:[%s1 + $0x278] sm:$0xff]
        %v439 = vld [vmem:[%s1 + $0x280] sm:$0xff]
        %v440 = vld [vmem:[%s1 + $0x288] sm:$0xff]
        %v441 = vld [vmem:[%s1 + $0x290] sm:$0xff]
        %v442 = vld [vmem:[%s1 + $0x298] sm:$0xff]
        %v443 = vld [vmem:[%s1 + $0x2a0] sm:$0xff]
        %v444 = vld [vmem:[%s1 + $0x2a8] sm:$0xff]
        %v445 = vld [vmem:[%s1 + $0x2b0] sm:$0xff]
        %v446 = vld [vmem:[%s1 + $0x2b8] sm:$0xff]
        %v447 = vld [vmem:[%s1 + $0x2c0] sm:$0xff]
        %v448 = vld [vmem:[%s1 + $0x2c8] sm:$0xff]
        %v449 = vld [vmem:[%s1 + $0x2d0] sm:$0xff]
        %v450 = vld [vmem:[%s1 + $0x2d8] sm:$0xff]
        %v451 = vld [vmem:[%s1 + $0x2e0] sm:$0xff]
        %v452 = vld [vmem:[%s1 + $0x2e8] sm:$0xff]
        %v453 = vld [vmem:[%s1 + $0x2f0] sm:$0xff]
        %v454 = vld [vmem:[%s1 + $0x2f8] sm:$0xff]
        %v455 = vld [vmem:[%s1 + $0x300] sm:$0xff]
        %v456 = vld [vmem:[%s1 + $0x308] sm:$0xff]
        %v457 = vld [vmem:[%s1 + $0x310] sm:$0xff]
        %v458 = vld [vmem:[%s1 + $0x318] sm:$0xff]
        %v459 = vld [vmem:[%s1 + $0x320] sm:$0xff]
        %v460 = vld [vmem:[%s1 + $0x328] sm:$0xff]
        %v461 = vld [vmem:[%s1 + $0x330] sm:$0xff]
        %v462 = vld [vmem:[%s1 + $0x338] sm:$0xff]
        %v463 = vld [vmem:[%s1 + $0x340] sm:$0xff]
        %v464 = vld [vmem:[%s1 + $0x348] sm:$0xff]
        %v465 = vld [vmem:[%s1 + $0x350] sm:$0xff]
        %v466 = vld [vmem:[%s1 + $0x358] sm:$0xff]
        %v467 = vld [vmem:[%s1 + $0x360] sm:$0xff]
        %v468 = vld [vmem:[%s1 + $0x368] sm:$0xff]
        %v469 = vld [vmem:[%s1 + $0x370] sm:$0xff]
        %v470 = vld [vmem:[%s1 + $0x378] sm:$0xff]
        %v471 = vld [vmem:[%s1 + $0x380] sm:$0xff]
        %v472 = vld [vmem:[%s1 + $0x388] sm:$0xff]
        %v473 = vld [vmem:[%s1 + $0x390] sm:$0xff]
        %v474 = vld [vmem:[%s1 + $0x398] sm:$0xff]
        %v475 = vld [vmem:[%s1 + $0x3a0] sm:$0xff]
        %v476 = vld [vmem:[%s1 + $0x3a8] sm:$0xff]
        %v477 = vld [vmem:[%s1 + $0x3b0] sm:$0xff]
        %v478 = vld [vmem:[%s1 + $0x3b8] sm:$0xff]
        %v479 = vld [vmem:[%s1 + $0x3c0] sm:$0xff]
        %v480 = vld [vmem:[%s1 + $0x3c8] sm:$0xff]
        %v481 = vld [vmem:[%s1 + $0x3d0] sm:$0xff]
        %v482 = vld [vmem:[%s1 + $0x3d8] sm:$0xff]
        %v483 = vld [vmem:[%s1 + $0x3e0] sm:$0xff]
        %v484 = vld [vmem:[%s1 + $0x3e8] sm:$0xff]
        %v485 = vld [vmem:[%s1 + $0x3f0] sm:$0xff]
        %v486 = vld [vmem:[%s1 + $0x3f8] sm:$0xff]
        %v487 = vld [vmem:[%s1 + $0x400] sm:$0xff]
        %v488 = vld [vmem:[%s1 + $0x408] sm:$0xff]
        %v489 = vld [vmem:[%s1 + $0x410] sm:$0xff]
        %v490 = vld [vmem:[%s1 + $0x418] sm:$0xff]
        %v491 = vld [vmem:[%s1 + $0x420] sm:$0xff]
        %v492 = vld [vmem:[%s1 + $0x428] sm:$0xff]
        %v493 = vld [vmem:[%s1 + $0x430] sm:$0xff]
        %v494 = vld [vmem:[%s1 + $0x438] sm:$0xff]
        %v495 = vld [vmem:[%s1 + $0x440] sm:$0xff]
        %v496 = vld [vmem:[%s1 + $0x448] sm:$0xff]
        %v497 = vld [vmem:[%s1 + $0x450] sm:$0xff]
        %v498 = vld [vmem:[%s1 + $0x458] sm:$0xff]
        %v499 = vld [vmem:[%s1 + $0x460] sm:$0xff]
        %v500 = vld [vmem:[%s1 + $0x468] sm:$0xff]
        %v501 = vld [vmem:[%s1 + $0x470] sm:$0xff]
        %v502 = vld [vmem:[%s1 + $0x478] sm:$0xff]
        %v503 = vld [vmem:[%s1 + $0x480] sm:$0xff]
        %v504 = vld [vmem:[%s1 + $0x488] sm:$0xff]
        %v505 = vld [vmem:[%s1 + $0x490] sm:$0xff]
        %v506 = vld [vmem:[%s1 + $0x498] sm:$0xff]
        %v507 = vld [vmem:[%s1 + $0x4a0] sm:$0xff]
        %v508 = vld [vmem:[%s1 + $0x4a8] sm:$0xff]
        %v509 = vld [vmem:[%s1 + $0x4b0] sm:$0xff]
        %v510 = vld [vmem:[%s1 + $0x4b8] sm:$0xff]
        %v511 = vld [vmem:[%s1 + $0x4c0] sm:$0xff]
        %v512 = vld [vmem:[%s1 + $0x4c8] sm:$0xff]
        %v513 = vld [vmem:[%s1 + $0x4d0] sm:$0xff]
        %v514 = vld [vmem:[%s1 + $0x4d8] sm:$0xff]
        %v515 = vld [vmem:[%s1 + $0x4e0] sm:$0xff]
        %v516 = vld [vmem:[%s1 + $0x4e8] sm:$0xff]
        %v517 = vld [vmem:[%s1 + $0x4f0] sm:$0xff]
        %v518 = vld [vmem:[%s1 + $0x4f8] sm:$0xff]
        %v519 = vld [vmem:[%s1 + $0x500] sm:$0xff]
        %v520 = vld [vmem:[%s1 + $0x508] sm:$0xff]
        %v521 = vld [vmem:[%s1 + $0x510] sm:$0xff]
        %v522 = vld [vmem:[%s1 + $0x518] sm:$0xff]
        %v523 = vld [vmem:[%s1 + $0x520] sm:$0xff]
        %v524 = vld [vmem:[%s1 + $0x528] sm:$0xff]
        %v525 = vld [vmem:[%s1 + $0x530] sm:$0xff]
        %v526 = vld [vmem:[%s1 + $0x538] sm:$0xff]
        %v527 = vld [vmem:[%s1 + $0x540] sm:$0xff]
        %v528 = vld [vmem:[%s1 + $0x548] sm:$0xff]
        %v529 = vld [vmem:[%s1 + $0x550] sm:$0xff]
        %v530 = vld [vmem:[%s1 + $0x558] sm:$0xff]
        %v531 = vld [vmem:[%s1 + $0x560] sm:$0xff]
        %v532 = vld [vmem:[%s1 + $0x568] sm:$0xff]
        %v533 = vld [vmem:[%s1 + $0x570] sm:$0xff]
        %v534 = vld [vmem:[%s1 + $0x578] sm:$0xff]
        %v535 = vld [vmem:[%s1 + $0x580] sm:$0xff]
        %v536 = vld [vmem:[%s1 + $0x588] sm:$0xff]
        %v537 = vld [vmem:[%s1 + $0x590] sm:$0xff]
        %v538 = vld [vmem:[%s1 + $0x598] sm:$0xff]
        %v539 = vld [vmem:[%s1 + $0x5a0] sm:$0xff]
        %v540 = vld [vmem:[%s1 + $0x5a8] sm:$0xff]
        %v541 = vld [vmem:[%s1 + $0x5b0] sm:$0xff]
        %v542 = vld [vmem:[%s1 + $0x5b8] sm:$0xff]
        %v543 = vld [vmem:[%s1 + $0x5c0] sm:$0xff]
        %v544 = vld [vmem:[%s1 + $0x5c8] sm:$0xff]
        %v545 = vld [vmem:[%s1 + $0x5d0] sm:$0xff]
        %v546 = vld [vmem:[%s1 + $0x5d8] sm:$0xff]
        %v547 = vld [vmem:[%s1 + $0x5e0] sm:$0xff]
        %v548 = vld [vmem:[%s1 + $0x5e8] sm:$0xff]
        %v549 = vld [vmem:[%s1 + $0x5f0] sm:$0xff]
        %v550 = vld [vmem:[%s1 + $0x5f8] sm:$0xff]
        %v551 = vld [vmem:[%s1 + $0x600] sm:$0xff]
        %v552 = vld [vmem:[%s1 + $0x608] sm:$0xff]
        %v553 = vld [vmem:[%s1 + $0x610] sm:$0xff]
        %v554 = vld [vmem:[%s1 + $0x618] sm:$0xff]
        %v555 = vld [vmem:[%s2] sm:$0xf]
        %v557 = vlaneseq
        %v558 = vshrl.u32 %v557, 7
        %v559 = vsub.s32 0, %v558
        %v560 = vrot.slane %v555, %v559
        %v561 = vlaneseq
        %v562 = vshrl.u32 %v561, 7
        %v563 = vsub.s32 1, %v562
        %v564 = vrot.slane %v555, %v563
        %v565 = vlaneseq
        %v566 = vshrl.u32 %v565, 7
        %v567 = vsub.s32 2, %v566
        %v568 = vrot.slane %v555, %v567
        %v569 = vlaneseq
        %v570 = vshrl.u32 %v569, 7
        %v571 = vsub.s32 3, %v570
        %v572 = vrot.slane %v555, %v571
        %v773 = vunpack.c.l.b16 %v359
        %v774 = vunpack.c.h.b16 %v359
        %v775 = vunpack.c.l.b16 %v360
        %v776 = vunpack.c.h.b16 %v360
        %v777 = vunpack.c.l.b16 %v361
        %v778 = vunpack.c.h.b16 %v361
        %v779 = vunpack.c.l.b16 %v362
        %v780 = vunpack.c.h.b16 %v362
        %v781 = vunpack.c.l.b16 %v363
        %v782 = vunpack.c.h.b16 %v363
        %v783 = vunpack.c.l.b16 %v364
        %v784 = vunpack.c.h.b16 %v364
        %v785 = vunpack.c.l.b16 %v365
        %v786 = vunpack.c.h.b16 %v365
        %v787 = vunpack.c.l.b16 %v366
        %v788 = vunpack.c.h.b16 %v366
        %v789 = vunpack.c.l.b16 %v367
        %v790 = vunpack.c.h.b16 %v367
        %v791 = vunpack.c.l.b16 %v368
        %v792 = vunpack.c.h.b16 %v368
        %v793 = vunpack.c.l.b16 %v369
        %v794 = vunpack.c.h.b16 %v369
        %v795 = vunpack.c.l.b16 %v370
        %v796 = vunpack.c.h.b16 %v370
        %v797 = vunpack.c.l.b16 %v371
        %v798 = vunpack.c.h.b16 %v371
        %v799 = vunpack.c.l.b16 %v372
        %v800 = vunpack.c.h.b16 %v372
        %v801 = vunpack.c.l.b16 %v373
        %v802 = vunpack.c.h.b16 %v373
        %v803 = vunpack.c.l.b16 %v374
        %v804 = vunpack.c.h.b16 %v374
        %v805 = vunpack.c.l.b16 %v375
        %v806 = vunpack.c.h.b16 %v375
        %v807 = vunpack.c.l.b16 %v376
        %v808 = vunpack.c.h.b16 %v376
        %v809 = vunpack.c.l.b16 %v377
        %v810 = vunpack.c.h.b16 %v377
        %v811 = vunpack.c.l.b16 %v378
        %v812 = vunpack.c.h.b16 %v378
        %v813 = vunpack.c.l.b16 %v379
        %v814 = vunpack.c.h.b16 %v379
        %v815 = vunpack.c.l.b16 %v380
        %v816 = vunpack.c.h.b16 %v380
        %v817 = vunpack.c.l.b16 %v381
        %v818 = vunpack.c.h.b16 %v381
        %v819 = vunpack.c.l.b16 %v382
        %v820 = vunpack.c.h.b16 %v382
        %v821 = vunpack.c.l.b16 %v383
        %v822 = vunpack.c.h.b16 %v383
        %v823 = vunpack.c.l.b16 %v384
        %v824 = vunpack.c.h.b16 %v384
        %v825 = vunpack.c.l.b16 %v385
        %v826 = vunpack.c.h.b16 %v385
        %v827 = vunpack.c.l.b16 %v386
        %v828 = vunpack.c.h.b16 %v386
        %v829 = vunpack.c.l.b16 %v387
        %v830 = vunpack.c.h.b16 %v387
        %v831 = vunpack.c.l.b16 %v388
        %v832 = vunpack.c.h.b16 %v388
        %v833 = vunpack.c.l.b16 %v389
        %v834 = vunpack.c.h.b16 %v389
        %v835 = vunpack.c.l.b16 %v390
        %v836 = vunpack.c.h.b16 %v390
        %v837 = vunpack.c.l.b16 %v391
        %v838 = vunpack.c.h.b16 %v391
        %v839 = vunpack.c.l.b16 %v392
        %v840 = vunpack.c.h.b16 %v392
        %v841 = vunpack.c.l.b16 %v393
        %v842 = vunpack.c.h.b16 %v393
        %v843 = vunpack.c.l.b16 %v394
        %v844 = vunpack.c.h.b16 %v394
        %v845 = vunpack.c.l.b16 %v395
        %v846 = vunpack.c.h.b16 %v395
        %v847 = vunpack.c.l.b16 %v396
        %v848 = vunpack.c.h.b16 %v396
        %v849 = vunpack.c.l.b16 %v397
        %v850 = vunpack.c.h.b16 %v397
        %v851 = vunpack.c.l.b16 %v398
        %v852 = vunpack.c.h.b16 %v398
        %v853 = vunpack.c.l.b16 %v399
        %v854 = vunpack.c.h.b16 %v399
        %v855 = vunpack.c.l.b16 %v400
        %v856 = vunpack.c.h.b16 %v400
        %v857 = vunpack.c.l.b16 %v401
        %v858 = vunpack.c.h.b16 %v401
        %v859 = vunpack.c.l.b16 %v402
        %v860 = vunpack.c.h.b16 %v402
        %v861 = vunpack.c.l.b16 %v403
        %v862 = vunpack.c.h.b16 %v403
        %v863 = vunpack.c.l.b16 %v404
        %v864 = vunpack.c.h.b16 %v404
        %v865 = vunpack.c.l.b16 %v405
        %v866 = vunpack.c.h.b16 %v405
        %v867 = vunpack.c.l.b16 %v406
        %v868 = vunpack.c.h.b16 %v406
        %v869 = vunpack.c.l.b16 %v407
        %v870 = vunpack.c.h.b16 %v407
        %v871 = vunpack.c.l.b16 %v408
        %v872 = vunpack.c.h.b16 %v408
        %v873 = vunpack.c.l.b16 %v409
        %v874 = vunpack.c.h.b16 %v409
        %v875 = vunpack.c.l.b16 %v410
        %v876 = vunpack.c.h.b16 %v410
        %v877 = vunpack.c.l.b16 %v411
        %v878 = vunpack.c.h.b16 %v411
        %v879 = vunpack.c.l.b16 %v412
        %v880 = vunpack.c.h.b16 %v412
        %v881 = vunpack.c.l.b16 %v413
        %v882 = vunpack.c.h.b16 %v413
        %v883 = vunpack.c.l.b16 %v414
        %v884 = vunpack.c.h.b16 %v414
        %v885 = vunpack.c.l.b16 %v415
        %v886 = vunpack.c.h.b16 %v415
        %v887 = vunpack.c.l.b16 %v416
        %v888 = vunpack.c.h.b16 %v416
        %v889 = vunpack.c.l.b16 %v417
        %v890 = vunpack.c.h.b16 %v417
        %v891 = vunpack.c.l.b16 %v418
        %v892 = vunpack.c.h.b16 %v418
        %v893 = vunpack.c.l.b16 %v419
        %v894 = vunpack.c.h.b16 %v419
        %v895 = vunpack.c.l.b16 %v420
        %v896 = vunpack.c.h.b16 %v420
        %v897 = vunpack.c.l.b16 %v421
        %v898 = vunpack.c.h.b16 %v421
        %v899 = vunpack.c.l.b16 %v422
        %v900 = vunpack.c.h.b16 %v422
        %v901 = vunpack.c.l.b16 %v423
        %v902 = vunpack.c.h.b16 %v423
        %v903 = vunpack.c.l.b16 %v424
        %v904 = vunpack.c.h.b16 %v424
        %v905 = vunpack.c.l.b16 %v425
        %v906 = vunpack.c.h.b16 %v425
        %v907 = vunpack.c.l.b16 %v426
        %v908 = vunpack.c.h.b16 %v426
        %v909 = vunpack.c.l.b16 %v427
        %v910 = vunpack.c.h.b16 %v427
        %v911 = vunpack.c.l.b16 %v428
        %v912 = vunpack.c.h.b16 %v428
        %v913 = vunpack.c.l.b16 %v429
        %v914 = vunpack.c.h.b16 %v429
        %v915 = vunpack.c.l.b16 %v430
        %v916 = vunpack.c.h.b16 %v430
        %v917 = vunpack.c.l.b16 %v431
        %v918 = vunpack.c.h.b16 %v431
        %v919 = vunpack.c.l.b16 %v432
        %v920 = vunpack.c.h.b16 %v432
        %v921 = vunpack.c.l.b16 %v433
        %v922 = vunpack.c.h.b16 %v433
        %v923 = vunpack.c.l.b16 %v434
        %v924 = vunpack.c.h.b16 %v434
        %v925 = vunpack.c.l.b16 %v435
        %v926 = vunpack.c.h.b16 %v435
        %v927 = vunpack.c.l.b16 %v436
        %v928 = vunpack.c.h.b16 %v436
        %v929 = vunpack.c.l.b16 %v437
        %v930 = vunpack.c.h.b16 %v437
        %v931 = vunpack.c.l.b16 %v438
        %v932 = vunpack.c.h.b16 %v438
        %v933 = vunpack.c.l.b16 %v439
        %v934 = vunpack.c.h.b16 %v439
        %v935 = vunpack.c.l.b16 %v440
        %v936 = vunpack.c.h.b16 %v440
        %v937 = vunpack.c.l.b16 %v441
        %v938 = vunpack.c.h.b16 %v441
        %v939 = vunpack.c.l.b16 %v442
        %v940 = vunpack.c.h.b16 %v442
        %v941 = vunpack.c.l.b16 %v443
        %v942 = vunpack.c.h.b16 %v443
        %v943 = vunpack.c.l.b16 %v444
        %v944 = vunpack.c.h.b16 %v444
        %v945 = vunpack.c.l.b16 %v445
        %v946 = vunpack.c.h.b16 %v445
        %v947 = vunpack.c.l.b16 %v446
        %v948 = vunpack.c.h.b16 %v446
        %v949 = vunpack.c.l.b16 %v447
        %v950 = vunpack.c.h.b16 %v447
        %v951 = vunpack.c.l.b16 %v448
        %v952 = vunpack.c.h.b16 %v448
        %v953 = vunpack.c.l.b16 %v449
        %v954 = vunpack.c.h.b16 %v449
        %v955 = vunpack.c.l.b16 %v450
        %v956 = vunpack.c.h.b16 %v450
        %v957 = vunpack.c.l.b16 %v451
        %v958 = vunpack.c.h.b16 %v451
        %v959 = vunpack.c.l.b16 %v452
        %v960 = vunpack.c.h.b16 %v452
        %v961 = vunpack.c.l.b16 %v453
        %v962 = vunpack.c.h.b16 %v453
        %v963 = vunpack.c.l.b16 %v454
        %v964 = vunpack.c.h.b16 %v454
        %v965 = vunpack.c.l.b16 %v455
        %v966 = vunpack.c.h.b16 %v455
        %v967 = vunpack.c.l.b16 %v456
        %v968 = vunpack.c.h.b16 %v456
        %v969 = vunpack.c.l.b16 %v457
        %v970 = vunpack.c.h.b16 %v457
        %v971 = vunpack.c.l.b16 %v458
        %v972 = vunpack.c.h.b16 %v458
        %v973 = vunpack.c.l.b16 %v459
        %v974 = vunpack.c.h.b16 %v459
        %v975 = vunpack.c.l.b16 %v460
        %v976 = vunpack.c.h.b16 %v460
        %v977 = vunpack.c.l.b16 %v461
        %v978 = vunpack.c.h.b16 %v461
        %v979 = vunpack.c.l.b16 %v462
        %v980 = vunpack.c.h.b16 %v462
        %v981 = vunpack.c.l.b16 %v463
        %v982 = vunpack.c.h.b16 %v463
        %v983 = vunpack.c.l.b16 %v464
        %v984 = vunpack.c.h.b16 %v464
        %v985 = vunpack.c.l.b16 %v465
        %v986 = vunpack.c.h.b16 %v465
        %v987 = vunpack.c.l.b16 %v466
        %v988 = vunpack.c.h.b16 %v466
        %v989 = vunpack.c.l.b16 %v467
        %v990 = vunpack.c.h.b16 %v467
        %v991 = vunpack.c.l.b16 %v468
        %v992 = vunpack.c.h.b16 %v468
        %v993 = vunpack.c.l.b16 %v469
        %v994 = vunpack.c.h.b16 %v469
        %v995 = vunpack.c.l.b16 %v470
        %v996 = vunpack.c.h.b16 %v470
        %v997 = vunpack.c.l.b16 %v471
        %v998 = vunpack.c.h.b16 %v471
        %v999 = vunpack.c.l.b16 %v472
        %v1000 = vunpack.c.h.b16 %v472
        %v1001 = vunpack.c.l.b16 %v473
        %v1002 = vunpack.c.h.b16 %v473
        %v1003 = vunpack.c.l.b16 %v474
        %v1004 = vunpack.c.h.b16 %v474
        %v1005 = vunpack.c.l.b16 %v475
        %v1006 = vunpack.c.h.b16 %v475
        %v1007 = vunpack.c.l.b16 %v476
        %v1008 = vunpack.c.h.b16 %v476
        %v1009 = vunpack.c.l.b16 %v477
        %v1010 = vunpack.c.h.b16 %v477
        %v1011 = vunpack.c.l.b16 %v478
        %v1012 = vunpack.c.h.b16 %v478
        %v1013 = vunpack.c.l.b16 %v479
        %v1014 = vunpack.c.h.b16 %v479
        %v1015 = vunpack.c.l.b16 %v480
        %v1016 = vunpack.c.h.b16 %v480
        %v1017 = vunpack.c.l.b16 %v481
        %v1018 = vunpack.c.h.b16 %v481
        %v1019 = vunpack.c.l.b16 %v482
        %v1020 = vunpack.c.h.b16 %v482
        %v1021 = vunpack.c.l.b16 %v483
        %v1022 = vunpack.c.h.b16 %v483
        %v1023 = vunpack.c.l.b16 %v484
        %v1024 = vunpack.c.h.b16 %v484
        %v1025 = vunpack.c.l.b16 %v485
        %v1026 = vunpack.c.h.b16 %v485
        %v1027 = vunpack.c.l.b16 %v486
        %v1028 = vunpack.c.h.b16 %v486
        %v1029 = vunpack.c.l.b16 %v487
        %v1030 = vunpack.c.h.b16 %v487
        %v1031 = vunpack.c.l.b16 %v488
        %v1032 = vunpack.c.h.b16 %v488
        %v1033 = vunpack.c.l.b16 %v489
        %v1034 = vunpack.c.h.b16 %v489
        %v1035 = vunpack.c.l.b16 %v490
        %v1036 = vunpack.c.h.b16 %v490
        %v1037 = vunpack.c.l.b16 %v491
        %v1038 = vunpack.c.h.b16 %v491
        %v1039 = vunpack.c.l.b16 %v492
        %v1040 = vunpack.c.h.b16 %v492
        %v1041 = vunpack.c.l.b16 %v493
        %v1042 = vunpack.c.h.b16 %v493
        %v1043 = vunpack.c.l.b16 %v494
        %v1044 = vunpack.c.h.b16 %v494
        %v1045 = vunpack.c.l.b16 %v495
        %v1046 = vunpack.c.h.b16 %v495
        %v1047 = vunpack.c.l.b16 %v496
        %v1048 = vunpack.c.h.b16 %v496
        %v1049 = vunpack.c.l.b16 %v497
        %v1050 = vunpack.c.h.b16 %v497
        %v1051 = vunpack.c.l.b16 %v498
        %v1052 = vunpack.c.h.b16 %v498
        %v1053 = vunpack.c.l.b16 %v499
        %v1054 = vunpack.c.h.b16 %v499
        %v1055 = vunpack.c.l.b16 %v500
        %v1056 = vunpack.c.h.b16 %v500
        %v1057 = vunpack.c.l.b16 %v501
        %v1058 = vunpack.c.h.b16 %v501
        %v1059 = vunpack.c.l.b16 %v502
        %v1060 = vunpack.c.h.b16 %v502
        %v1061 = vunpack.c.l.b16 %v503
        %v1062 = vunpack.c.h.b16 %v503
        %v1063 = vunpack.c.l.b16 %v504
        %v1064 = vunpack.c.h.b16 %v504
        %v1065 = vunpack.c.l.b16 %v505
        %v1066 = vunpack.c.h.b16 %v505
        %v1067 = vunpack.c.l.b16 %v506
        %v1068 = vunpack.c.h.b16 %v506
        %v1069 = vunpack.c.l.b16 %v507
        %v1070 = vunpack.c.h.b16 %v507
        %v1071 = vunpack.c.l.b16 %v508
        %v1072 = vunpack.c.h.b16 %v508
        %v1073 = vunpack.c.l.b16 %v509
        %v1074 = vunpack.c.h.b16 %v509
        %v1075 = vunpack.c.l.b16 %v510
        %v1076 = vunpack.c.h.b16 %v510
        %v1077 = vunpack.c.l.b16 %v511
        %v1078 = vunpack.c.h.b16 %v511
        %v1079 = vunpack.c.l.b16 %v512
        %v1080 = vunpack.c.h.b16 %v512
        %v1081 = vunpack.c.l.b16 %v513
        %v1082 = vunpack.c.h.b16 %v513
        %v1083 = vunpack.c.l.b16 %v514
        %v1084 = vunpack.c.h.b16 %v514
        %v1085 = vunpack.c.l.b16 %v515
        %v1086 = vunpack.c.h.b16 %v515
        %v1087 = vunpack.c.l.b16 %v516
        %v1088 = vunpack.c.h.b16 %v516
        %v1089 = vunpack.c.l.b16 %v517
        %v1090 = vunpack.c.h.b16 %v517
        %v1091 = vunpack.c.l.b16 %v518
        %v1092 = vunpack.c.h.b16 %v518
        %v1093 = vunpack.c.l.b16 %v519
        %v1094 = vunpack.c.h.b16 %v519
        %v1095 = vunpack.c.l.b16 %v520
        %v1096 = vunpack.c.h.b16 %v520
        %v1097 = vunpack.c.l.b16 %v521
        %v1098 = vunpack.c.h.b16 %v521
        %v1099 = vunpack.c.l.b16 %v522
        %v1100 = vunpack.c.h.b16 %v522
        %v1101 = vunpack.c.l.b16 %v523
        %v1102 = vunpack.c.h.b16 %v523
        %v1103 = vunpack.c.l.b16 %v524
        %v1104 = vunpack.c.h.b16 %v524
        %v1105 = vunpack.c.l.b16 %v525
        %v1106 = vunpack.c.h.b16 %v525
        %v1107 = vunpack.c.l.b16 %v526
        %v1108 = vunpack.c.h.b16 %v526
        %v1109 = vunpack.c.l.b16 %v527
        %v1110 = vunpack.c.h.b16 %v527
        %v1111 = vunpack.c.l.b16 %v528
        %v1112 = vunpack.c.h.b16 %v528
        %v1113 = vunpack.c.l.b16 %v529
        %v1114 = vunpack.c.h.b16 %v529
        %v1115 = vunpack.c.l.b16 %v530
        %v1116 = vunpack.c.h.b16 %v530
        %v1117 = vunpack.c.l.b16 %v531
        %v1118 = vunpack.c.h.b16 %v531
        %v1119 = vunpack.c.l.b16 %v532
        %v1120 = vunpack.c.h.b16 %v532
        %v1121 = vunpack.c.l.b16 %v533
        %v1122 = vunpack.c.h.b16 %v533
        %v1123 = vunpack.c.l.b16 %v534
        %v1124 = vunpack.c.h.b16 %v534
        %v1125 = vunpack.c.l.b16 %v535
        %v1126 = vunpack.c.h.b16 %v535
        %v1127 = vunpack.c.l.b16 %v536
        %v1128 = vunpack.c.h.b16 %v536
        %v1129 = vunpack.c.l.b16 %v537
        %v1130 = vunpack.c.h.b16 %v537
        %v1131 = vunpack.c.l.b16 %v538
        %v1132 = vunpack.c.h.b16 %v538
        %v1133 = vunpack.c.l.b16 %v539
        %v1134 = vunpack.c.h.b16 %v539
        %v1135 = vunpack.c.l.b16 %v540
        %v1136 = vunpack.c.h.b16 %v540
        %v1137 = vunpack.c.l.b16 %v541
        %v1138 = vunpack.c.h.b16 %v541
        %v1139 = vunpack.c.l.b16 %v542
        %v1140 = vunpack.c.h.b16 %v542
        %v1141 = vunpack.c.l.b16 %v543
        %v1142 = vunpack.c.h.b16 %v543
        %v1143 = vunpack.c.l.b16 %v544
        %v1144 = vunpack.c.h.b16 %v544
        %v1145 = vunpack.c.l.b16 %v545
        %v1146 = vunpack.c.h.b16 %v545
        %v1147 = vunpack.c.l.b16 %v546
        %v1148 = vunpack.c.h.b16 %v546
        %v1149 = vunpack.c.l.b16 %v547
        %v1150 = vunpack.c.h.b16 %v547
        %v1151 = vunpack.c.l.b16 %v548
        %v1152 = vunpack.c.h.b16 %v548
        %v1153 = vunpack.c.l.b16 %v549
        %v1154 = vunpack.c.h.b16 %v549
        %v1155 = vunpack.c.l.b16 %v550
        %v1156 = vunpack.c.h.b16 %v550
        %v1157 = vunpack.c.l.b16 %v551
        %v1158 = vunpack.c.h.b16 %v551
        %v1159 = vunpack.c.l.b16 %v552
        %v1160 = vunpack.c.h.b16 %v552
        %v1161 = vunpack.c.l.b16 %v553
        %v1162 = vunpack.c.h.b16 %v553
        %v1163 = vunpack.c.l.b16 %v554
        %v1164 = vunpack.c.h.b16 %v554
        %v1165 = vpack.c.b16 %v777, %v773
        %v1166 = vpack.c.b16 %v778, %v774
        %v1167 = vpack.c.b16 %v779, %v775
        %v1168 = vpack.c.b16 %v780, %v776
        %v1169 = vpack.c.b16 %v785, %v781
        %v1170 = vpack.c.b16 %v786, %v782
        %v1171 = vpack.c.b16 %v787, %v783
        %v1172 = vpack.c.b16 %v788, %v784
        %v1173 = vpack.c.b16 %v793, %v789
        %v1174 = vpack.c.b16 %v794, %v790
        %v1175 = vpack.c.b16 %v795, %v791
        %v1176 = vpack.c.b16 %v796, %v792
        %v1177 = vpack.c.b16 %v801, %v797
        %v1178 = vpack.c.b16 %v802, %v798
        %v1179 = vpack.c.b16 %v803, %v799
        %v1180 = vpack.c.b16 %v804, %v800
        %v1181 = vpack.c.b16 %v809, %v805
        %v1182 = vpack.c.b16 %v810, %v806
        %v1183 = vpack.c.b16 %v811, %v807
        %v1184 = vpack.c.b16 %v812, %v808
        %v1185 = vpack.c.b16 %v817, %v813
        %v1186 = vpack.c.b16 %v818, %v814
        %v1187 = vpack.c.b16 %v819, %v815
        %v1188 = vpack.c.b16 %v820, %v816
        %v1189 = vpack.c.b16 %v825, %v821
        %v1190 = vpack.c.b16 %v826, %v822
        %v1191 = vpack.c.b16 %v827, %v823
        %v1192 = vpack.c.b16 %v828, %v824
        %v1193 = vpack.c.b16 %v833, %v829
        %v1194 = vpack.c.b16 %v834, %v830
        %v1195 = vpack.c.b16 %v835, %v831
        %v1196 = vpack.c.b16 %v836, %v832
        %v1197 = vpack.c.b16 %v841, %v837
        %v1198 = vpack.c.b16 %v842, %v838
        %v1199 = vpack.c.b16 %v843, %v839
        %v1200 = vpack.c.b16 %v844, %v840
        %v1201 = vpack.c.b16 %v849, %v845
        %v1202 = vpack.c.b16 %v850, %v846
        %v1203 = vpack.c.b16 %v851, %v847
        %v1204 = vpack.c.b16 %v852, %v848
        %v1205 = vpack.c.b16 %v857, %v853
        %v1206 = vpack.c.b16 %v858, %v854
        %v1207 = vpack.c.b16 %v859, %v855
        %v1208 = vpack.c.b16 %v860, %v856
        %v1209 = vpack.c.b16 %v865, %v861
        %v1210 = vpack.c.b16 %v866, %v862
        %v1211 = vpack.c.b16 %v867, %v863
        %v1212 = vpack.c.b16 %v868, %v864
        %v1213 = vpack.c.b16 %v873, %v869
        %v1214 = vpack.c.b16 %v874, %v870
        %v1215 = vpack.c.b16 %v875, %v871
        %v1216 = vpack.c.b16 %v876, %v872
        %v1217 = vpack.c.b16 %v881, %v877
        %v1218 = vpack.c.b16 %v882, %v878
        %v1219 = vpack.c.b16 %v883, %v879
        %v1220 = vpack.c.b16 %v884, %v880
        %v1221 = vpack.c.b16 %v889, %v885
        %v1222 = vpack.c.b16 %v890, %v886
        %v1223 = vpack.c.b16 %v891, %v887
        %v1224 = vpack.c.b16 %v892, %v888
        %v1225 = vpack.c.b16 %v897, %v893
        %v1226 = vpack.c.b16 %v898, %v894
        %v1227 = vpack.c.b16 %v899, %v895
        %v1228 = vpack.c.b16 %v900, %v896
        %v1229 = vpack.c.b16 %v905, %v901
        %v1230 = vpack.c.b16 %v906, %v902
        %v1231 = vpack.c.b16 %v907, %v903
        %v1232 = vpack.c.b16 %v908, %v904
        %v1233 = vpack.c.b16 %v913, %v909
        %v1234 = vpack.c.b16 %v914, %v910
        %v1235 = vpack.c.b16 %v915, %v911
        %v1236 = vpack.c.b16 %v916, %v912
        %v1237 = vpack.c.b16 %v921, %v917
        %v1238 = vpack.c.b16 %v922, %v918
        %v1239 = vpack.c.b16 %v923, %v919
        %v1240 = vpack.c.b16 %v924, %v920
        %v1241 = vpack.c.b16 %v929, %v925
        %v1242 = vpack.c.b16 %v930, %v926
        %v1243 = vpack.c.b16 %v931, %v927
        %v1244 = vpack.c.b16 %v932, %v928
        %v1245 = vpack.c.b16 %v937, %v933
        %v1246 = vpack.c.b16 %v938, %v934
        %v1247 = vpack.c.b16 %v939, %v935
        %v1248 = vpack.c.b16 %v940, %v936
        %v1249 = vpack.c.b16 %v945, %v941
        %v1250 = vpack.c.b16 %v946, %v942
        %v1251 = vpack.c.b16 %v947, %v943
        %v1252 = vpack.c.b16 %v948, %v944
        %v1253 = vpack.c.b16 %v953, %v949
        %v1254 = vpack.c.b16 %v954, %v950
        %v1255 = vpack.c.b16 %v955, %v951
        %v1256 = vpack.c.b16 %v956, %v952
        %v1257 = vpack.c.b16 %v961, %v957
        %v1258 = vpack.c.b16 %v962, %v958
        %v1259 = vpack.c.b16 %v963, %v959
        %v1260 = vpack.c.b16 %v964, %v960
        %v1261 = vpack.c.b16 %v969, %v965
        %v1262 = vpack.c.b16 %v970, %v966
        %v1263 = vpack.c.b16 %v971, %v967
        %v1264 = vpack.c.b16 %v972, %v968
        %v1265 = vpack.c.b16 %v977, %v973
        %v1266 = vpack.c.b16 %v978, %v974
        %v1267 = vpack.c.b16 %v979, %v975
        %v1268 = vpack.c.b16 %v980, %v976
        %v1269 = vpack.c.b16 %v985, %v981
        %v1270 = vpack.c.b16 %v986, %v982
        %v1271 = vpack.c.b16 %v987, %v983
        %v1272 = vpack.c.b16 %v988, %v984
        %v1273 = vpack.c.b16 %v993, %v989
        %v1274 = vpack.c.b16 %v994, %v990
        %v1275 = vpack.c.b16 %v995, %v991
        %v1276 = vpack.c.b16 %v996, %v992
        %v1277 = vpack.c.b16 %v1001, %v997
        %v1278 = vpack.c.b16 %v1002, %v998
        %v1279 = vpack.c.b16 %v1003, %v999
        %v1280 = vpack.c.b16 %v1004, %v1000
        %v1281 = vpack.c.b16 %v1009, %v1005
        %v1282 = vpack.c.b16 %v1010, %v1006
        %v1283 = vpack.c.b16 %v1011, %v1007
        %v1284 = vpack.c.b16 %v1012, %v1008
        %v1285 = vpack.c.b16 %v1017, %v1013
        %v1286 = vpack.c.b16 %v1018, %v1014
        %v1287 = vpack.c.b16 %v1019, %v1015
        %v1288 = vpack.c.b16 %v1020, %v1016
        %v1289 = vpack.c.b16 %v1025, %v1021
        %v1290 = vpack.c.b16 %v1026, %v1022
        %v1291 = vpack.c.b16 %v1027, %v1023
        %v1292 = vpack.c.b16 %v1028, %v1024
        %v1293 = vpack.c.b16 %v1033, %v1029
        %v1294 = vpack.c.b16 %v1034, %v1030
        %v1295 = vpack.c.b16 %v1035, %v1031
        %v1296 = vpack.c.b16 %v1036, %v1032
        %v1297 = vpack.c.b16 %v1041, %v1037
        %v1298 = vpack.c.b16 %v1042, %v1038
        %v1299 = vpack.c.b16 %v1043, %v1039
        %v1300 = vpack.c.b16 %v1044, %v1040
        %v1301 = vpack.c.b16 %v1049, %v1045
        %v1302 = vpack.c.b16 %v1050, %v1046
        %v1303 = vpack.c.b16 %v1051, %v1047
        %v1304 = vpack.c.b16 %v1052, %v1048
        %v1305 = vpack.c.b16 %v1057, %v1053
        %v1306 = vpack.c.b16 %v1058, %v1054
        %v1307 = vpack.c.b16 %v1059, %v1055
        %v1308 = vpack.c.b16 %v1060, %v1056
        %v1309 = vpack.c.b16 %v1065, %v1061
        %v1310 = vpack.c.b16 %v1066, %v1062
        %v1311 = vpack.c.b16 %v1067, %v1063
        %v1312 = vpack.c.b16 %v1068, %v1064
        %v1313 = vpack.c.b16 %v1073, %v1069
        %v1314 = vpack.c.b16 %v1074, %v1070
        %v1315 = vpack.c.b16 %v1075, %v1071
        %v1316 = vpack.c.b16 %v1076, %v1072
        %v1317 = vpack.c.b16 %v1081, %v1077
        %v1318 = vpack.c.b16 %v1082, %v1078
        %v1319 = vpack.c.b16 %v1083, %v1079
        %v1320 = vpack.c.b16 %v1084, %v1080
        %v1321 = vpack.c.b16 %v1089, %v1085
        %v1322 = vpack.c.b16 %v1090, %v1086
        %v1323 = vpack.c.b16 %v1091, %v1087
        %v1324 = vpack.c.b16 %v1092, %v1088
        %v1325 = vpack.c.b16 %v1097, %v1093
        %v1326 = vpack.c.b16 %v1098, %v1094
        %v1327 = vpack.c.b16 %v1099, %v1095
        %v1328 = vpack.c.b16 %v1100, %v1096
        %v1329 = vpack.c.b16 %v1105, %v1101
        %v1330 = vpack.c.b16 %v1106, %v1102
        %v1331 = vpack.c.b16 %v1107, %v1103
        %v1332 = vpack.c.b16 %v1108, %v1104
        %v1333 = vpack.c.b16 %v1113, %v1109
        %v1334 = vpack.c.b16 %v1114, %v1110
        %v1335 = vpack.c.b16 %v1115, %v1111
        %v1336 = vpack.c.b16 %v1116, %v1112
        %v1337 = vpack.c.b16 %v1121, %v1117
        %v1338 = vpack.c.b16 %v1122, %v1118
        %v1339 = vpack.c.b16 %v1123, %v1119
        %v1340 = vpack.c.b16 %v1124, %v1120
        %v1341 = vpack.c.b16 %v1129, %v1125
        %v1342 = vpack.c.b16 %v1130, %v1126
        %v1343 = vpack.c.b16 %v1131, %v1127
        %v1344 = vpack.c.b16 %v1132, %v1128
        %v1345 = vpack.c.b16 %v1137, %v1133
        %v1346 = vpack.c.b16 %v1138, %v1134
        %v1347 = vpack.c.b16 %v1139, %v1135
        %v1348 = vpack.c.b16 %v1140, %v1136
        %v1349 = vpack.c.b16 %v1145, %v1141
        %v1350 = vpack.c.b16 %v1146, %v1142
        %v1351 = vpack.c.b16 %v1147, %v1143
        %v1352 = vpack.c.b16 %v1148, %v1144
        %v1353 = vpack.c.b16 %v1153, %v1149
        %v1354 = vpack.c.b16 %v1154, %v1150
        %v1355 = vpack.c.b16 %v1155, %v1151
        %v1356 = vpack.c.b16 %v1156, %v1152
        %v1357 = vpack.c.b16 %v1161, %v1157
        %v1358 = vpack.c.b16 %v1162, %v1158
        %v1359 = vpack.c.b16 %v1163, %v1159
        %v1360 = vpack.c.b16 %v1164, %v1160
        %vm1557 = vcmask 130048
        %v1559 = vsel %vm1557, %v358, 0
        %1561 = vmatprep.subr.bf16.mxu0 %v1194
        %1562 = vmatpush1.bf16.msra.mxu0 %v1193
        %1563 = vmatprep.subr.bf16.mxu0 %v1190
        %1564 = vmatpush1.bf16.msra.mxu0 %v1189
        %1565 = vmatprep.subr.bf16.mxu0 %v1186
        %1566 = vmatpush1.bf16.msra.mxu0 %v1185
        %1567 = vmatprep.subr.bf16.mxu0 %v1182
        %1568 = vmatpush1.bf16.msra.mxu0 %v1181
        %1569 = vmatprep.subr.bf16.mxu0 %v1178
        %1570 = vmatpush1.bf16.msra.mxu0 %v1177
        %1571 = vmatprep.subr.bf16.mxu0 %v1174
        %1572 = vmatpush1.bf16.msra.mxu0 %v1173
        %1573 = vmatprep.subr.bf16.mxu0 %v1170
        %1574 = vmatpush1.bf16.msra.mxu0 %v1169
        %1575 = vmatprep.subr.bf16.mxu0 %v1166
        %1576 = vmatpush1.bf16.msra.mxu0 %v1165
        %1577 = vmatprep.subr.bf16.mxu0 %v1226
        %1578 = vmatpush2.bf16.msra.mxu0 %v1225
        %1579 = vmatprep.subr.bf16.mxu0 %v1222
        %1580 = vmatpush2.bf16.msra.mxu0 %v1221
        %1581 = vmatprep.subr.bf16.mxu0 %v1218
        %1582 = vmatpush2.bf16.msra.mxu0 %v1217
        %1583 = vmatprep.subr.bf16.mxu0 %v1214
        %1584 = vmatpush2.bf16.msra.mxu0 %v1213
        %1585 = vmatprep.subr.bf16.mxu0 %v1210
        %1586 = vmatpush2.bf16.msra.mxu0 %v1209
        %1587 = vmatprep.subr.bf16.mxu0 %v1206
        %1588 = vmatpush2.bf16.msra.mxu0 %v1205
        %1589 = vmatprep.subr.bf16.mxu0 %v1202
        %1590 = vmatpush2.bf16.msra.mxu0 %v1201
        %1591 = vmatprep.subr.bf16.mxu0 %v1198
        %1592 = vmatpush2.bf16.msra.mxu0 %v1197
        %1593 = vmatprep.mubr.bf16.mxu0 %v353
        %1594 = vmatmul.mubr.bf16.gmra.mxu0 %v352
        %v1595 = vpop.f32.mrf.mxu0
        %v1596 = vadd.f32 %v560, %v1595
        %v1597 = vpop.f32.mrf.mxu0
        %v1598 = vadd.f32 %v564, %v1597
        %v1599 = vpop.f32.mrf.mxu0
        %v1600 = vadd.f32 %v560, %v1599
        %v1601 = vpop.f32.mrf.mxu0
        %v1602 = vadd.f32 %v564, %v1601
        %1603 = vdwg.mxu0
        %1604 = vmatprep.subr.bf16.mxu0 %v1258
        %1605 = vmatpush1.bf16.msra.mxu0 %v1257
        %1606 = vmatprep.subr.bf16.mxu0 %v1254
        %1607 = vmatpush1.bf16.msra.mxu0 %v1253
        %1608 = vmatprep.subr.bf16.mxu0 %v1250
        %1609 = vmatpush1.bf16.msra.mxu0 %v1249
        %1610 = vmatprep.subr.bf16.mxu0 %v1246
        %1611 = vmatpush1.bf16.msra.mxu0 %v1245
        %1612 = vmatprep.subr.bf16.mxu0 %v1242
        %1613 = vmatpush1.bf16.msra.mxu0 %v1241
        %1614 = vmatprep.subr.bf16.mxu0 %v1238
        %1615 = vmatpush1.bf16.msra.mxu0 %v1237
        %1616 = vmatprep.subr.bf16.mxu0 %v1234
        %1617 = vmatpush1.bf16.msra.mxu0 %v1233
        %1618 = vmatprep.subr.bf16.mxu0 %v1230
        %1619 = vmatpush1.bf16.msra.mxu0 %v1229
        %1620 = vmatprep.subr.bf16.mxu0 %v1290
        %1621 = vmatpush2.bf16.msra.mxu0 %v1289
        %1622 = vmatprep.subr.bf16.mxu0 %v1286
        %1623 = vmatpush2.bf16.msra.mxu0 %v1285
        %1624 = vmatprep.subr.bf16.mxu0 %v1282
        %1625 = vmatpush2.bf16.msra.mxu0 %v1281
        %1626 = vmatprep.subr.bf16.mxu0 %v1278
        %1627 = vmatpush2.bf16.msra.mxu0 %v1277
        %1628 = vmatprep.subr.bf16.mxu0 %v1274
        %1629 = vmatpush2.bf16.msra.mxu0 %v1273
        %1630 = vmatprep.subr.bf16.mxu0 %v1270
        %1631 = vmatpush2.bf16.msra.mxu0 %v1269
        %1632 = vmatprep.subr.bf16.mxu0 %v1266
        %1633 = vmatpush2.bf16.msra.mxu0 %v1265
        %1634 = vmatprep.subr.bf16.mxu0 %v1262
        %1635 = vmatpush2.bf16.msra.mxu0 %v1261
        %1636 = vmatprep.mubr.bf16.mxu0 %v355
        %1637 = vmatmul.mubr.bf16.gmra.mxu0 %v354
        %v1638 = vpop.f32.mrf.mxu0
        %v1639 = vadd.f32 %v1596, %v1638
        %v1640 = vpop.f32.mrf.mxu0
        %v1641 = vadd.f32 %v1598, %v1640
        %v1642 = vpop.f32.mrf.mxu0
        %v1643 = vadd.f32 %v1600, %v1642
        %v1644 = vpop.f32.mrf.mxu0
        %v1645 = vadd.f32 %v1602, %v1644
        %1646 = vdwg.mxu0
        %1647 = vmatprep.subr.bf16.mxu0 %v1322
        %1648 = vmatpush1.bf16.msra.mxu0 %v1321
        %1649 = vmatprep.subr.bf16.mxu0 %v1318
        %1650 = vmatpush1.bf16.msra.mxu0 %v1317
        %1651 = vmatprep.subr.bf16.mxu0 %v1314
        %1652 = vmatpush1.bf16.msra.mxu0 %v1313
        %1653 = vmatprep.subr.bf16.mxu0 %v1310
        %1654 = vmatpush1.bf16.msra.mxu0 %v1309
        %1655 = vmatprep.subr.bf16.mxu0 %v1306
        %1656 = vmatpush1.bf16.msra.mxu0 %v1305
        %1657 = vmatprep.subr.bf16.mxu0 %v1302
        %1658 = vmatpush1.bf16.msra.mxu0 %v1301
        %1659 = vmatprep.subr.bf16.mxu0 %v1298
        %1660 = vmatpush1.bf16.msra.mxu0 %v1297
        %1661 = vmatprep.subr.bf16.mxu0 %v1294
        %1662 = vmatpush1.bf16.msra.mxu0 %v1293
        %1663 = vmatprep.subr.bf16.mxu0 %v1354
        %1664 = vmatpush2.bf16.msra.mxu0 %v1353
        %1665 = vmatprep.subr.bf16.mxu0 %v1350
        %1666 = vmatpush2.bf16.msra.mxu0 %v1349
        %1667 = vmatprep.subr.bf16.mxu0 %v1346
        %1668 = vmatpush2.bf16.msra.mxu0 %v1345
        %1669 = vmatprep.subr.bf16.mxu0 %v1342
        %1670 = vmatpush2.bf16.msra.mxu0 %v1341
        %1671 = vmatprep.subr.bf16.mxu0 %v1338
        %1672 = vmatpush2.bf16.msra.mxu0 %v1337
        %1673 = vmatprep.subr.bf16.mxu0 %v1334
        %1674 = vmatpush2.bf16.msra.mxu0 %v1333
        %1675 = vmatprep.subr.bf16.mxu0 %v1330
        %1676 = vmatpush2.bf16.msra.mxu0 %v1329
        %1677 = vmatprep.subr.bf16.mxu0 %v1326
        %1678 = vmatpush2.bf16.msra.mxu0 %v1325
        %1679 = vmatprep.mubr.bf16.mxu0 %v357
        %1680 = vmatmul.mubr.bf16.gmra.mxu0 %v356
        %v1681 = vpop.f32.mrf.mxu0
        %v1682 = vadd.f32 %v1639, %v1681
        %v1683 = vpop.f32.mrf.mxu0
        %v1684 = vadd.f32 %v1641, %v1683
        %v1685 = vpop.f32.mrf.mxu0
        %v1686 = vadd.f32 %v1643, %v1685
        %v1687 = vpop.f32.mrf.mxu0
        %v1688 = vadd.f32 %v1645, %v1687
        %1689 = vdwg.mxu0
        %1690 = vmatprep.subr.bf16.mxu0 0
        %1691 = vmatpush1.bf16.msra.mxu0 0
        %1692 = vmatprep.subr.bf16.mxu0 0
        %1693 = vmatpush1.bf16.msra.mxu0 0
        %1694 = vmatprep.subr.bf16.mxu0 0
        %1695 = vmatpush1.bf16.msra.mxu0 0
        %1696 = vmatprep.subr.bf16.mxu0 0
        %1697 = vmatpush1.bf16.msra.mxu0 0
        %1698 = vmatprep.subr.bf16.mxu0 0
        %1699 = vmatpush1.bf16.msra.mxu0 0
        %1700 = vmatprep.subr.bf16.mxu0 0
        %1701 = vmatpush1.bf16.msra.mxu0 0
        %1702 = vmatprep.subr.bf16.mxu0 0
        %1703 = vmatpush1.bf16.msra.mxu0 0
        %1704 = vmatprep.subr.bf16.mxu0 %v1358
        %1705 = vmatpush1.bf16.msra.mxu0 %v1357
        %1706 = vmatprep.subr.bf16.mxu0 0
        %1707 = vmatpush2.bf16.msra.mxu0 0
        %1708 = vmatprep.subr.bf16.mxu0 0
        %1709 = vmatpush2.bf16.msra.mxu0 0
        %1710 = vmatprep.subr.bf16.mxu0 0
        %1711 = vmatpush2.bf16.msra.mxu0 0
        %1712 = vmatprep.subr.bf16.mxu0 0
        %1713 = vmatpush2.bf16.msra.mxu0 0
        %1714 = vmatprep.subr.bf16.mxu0 0
        %1715 = vmatpush2.bf16.msra.mxu0 0
        %1716 = vmatprep.subr.bf16.mxu0 0
        %1717 = vmatpush2.bf16.msra.mxu0 0
        %1718 = vmatprep.subr.bf16.mxu0 0
        %1719 = vmatpush2.bf16.msra.mxu0 0
        %1720 = vmatprep.subr.bf16.mxu0 0
        %1721 = vmatpush2.bf16.msra.mxu0 0
        %1722 = vmatprep.mubr.bf16.mxu0 0
        %1723 = vmatmul.mubr.bf16.gmra.mxu0 %v1559
        %v1724 = vpop.f32.mrf.mxu0
        %v1725 = vadd.f32 %v1682, %v1724
        %v1726 = vpop.f32.mrf.mxu0
        %v1727 = vadd.f32 %v1684, %v1726
        %v1728 = vpop.f32.mrf.mxu0
        %v1729 = vadd.f32 %v1686, %v1728
        %v1730 = vpop.f32.mrf.mxu0
        %v1731 = vadd.f32 %v1688, %v1730
        %1732 = vdwg.mxu0
        %1733 = vmatprep.subr.bf16.mxu0 %v1196
        %1734 = vmatpush1.bf16.msra.mxu0 %v1195
        %1735 = vmatprep.subr.bf16.mxu0 %v1192
        %1736 = vmatpush1.bf16.msra.mxu0 %v1191
        %1737 = vmatprep.subr.bf16.mxu0 %v1188
        %1738 = vmatpush1.bf16.msra.mxu0 %v1187
        %1739 = vmatprep.subr.bf16.mxu0 %v1184
        %1740 = vmatpush1.bf16.msra.mxu0 %v1183
        %1741 = vmatprep.subr.bf16.mxu0 %v1180
        %1742 = vmatpush1.bf16.msra.mxu0 %v1179
        %1743 = vmatprep.subr.bf16.mxu0 %v1176
        %1744 = vmatpush1.bf16.msra.mxu0 %v1175
        %1745 = vmatprep.subr.bf16.mxu0 %v1172
        %1746 = vmatpush1.bf16.msra.mxu0 %v1171
        %1747 = vmatprep.subr.bf16.mxu0 %v1168
        %1748 = vmatpush1.bf16.msra.mxu0 %v1167
        %1749 = vmatprep.subr.bf16.mxu0 %v1228
        %1750 = vmatpush2.bf16.msra.mxu0 %v1227
        %1751 = vmatprep.subr.bf16.mxu0 %v1224
        %1752 = vmatpush2.bf16.msra.mxu0 %v1223
        %1753 = vmatprep.subr.bf16.mxu0 %v1220
        %1754 = vmatpush2.bf16.msra.mxu0 %v1219
        %1755 = vmatprep.subr.bf16.mxu0 %v1216
        %1756 = vmatpush2.bf16.msra.mxu0 %v1215
        %1757 = vmatprep.subr.bf16.mxu0 %v1212
        %1758 = vmatpush2.bf16.msra.mxu0 %v1211
        %1759 = vmatprep.subr.bf16.mxu0 %v1208
        %1760 = vmatpush2.bf16.msra.mxu0 %v1207
        %1761 = vmatprep.subr.bf16.mxu0 %v1204
        %1762 = vmatpush2.bf16.msra.mxu0 %v1203
        %1763 = vmatprep.subr.bf16.mxu0 %v1200
        %1764 = vmatpush2.bf16.msra.mxu0 %v1199
        %1765 = vmatprep.mubr.bf16.mxu0 %v353
        %1766 = vmatmul.mubr.bf16.gmra.mxu0 %v352
        %v1767 = vpop.f32.mrf.mxu0
        %v1768 = vadd.f32 %v568, %v1767
        %v1769 = vpop.f32.mrf.mxu0
        %v1770 = vadd.f32 %v572, %v1769
        %v1771 = vpop.f32.mrf.mxu0
        %v1772 = vadd.f32 %v568, %v1771
        %v1773 = vpop.f32.mrf.mxu0
        %v1774 = vadd.f32 %v572, %v1773
        %1775 = vdwg.mxu0
        %1776 = vmatprep.subr.bf16.mxu0 %v1260
        %1777 = vmatpush1.bf16.msra.mxu0 %v1259
        %1778 = vmatprep.subr.bf16.mxu0 %v1256
        %1779 = vmatpush1.bf16.msra.mxu0 %v1255
        %1780 = vmatprep.subr.bf16.mxu0 %v1252
        %1781 = vmatpush1.bf16.msra.mxu0 %v1251
        %1782 = vmatprep.subr.bf16.mxu0 %v1248
        %1783 = vmatpush1.bf16.msra.mxu0 %v1247
        %1784 = vmatprep.subr.bf16.mxu0 %v1244
        %1785 = vmatpush1.bf16.msra.mxu0 %v1243
        %1786 = vmatprep.subr.bf16.mxu0 %v1240
        %1787 = vmatpush1.bf16.msra.mxu0 %v1239
        %1788 = vmatprep.subr.bf16.mxu0 %v1236
        %1789 = vmatpush1.bf16.msra.mxu0 %v1235
        %1790 = vmatprep.subr.bf16.mxu0 %v1232
        %1791 = vmatpush1.bf16.msra.mxu0 %v1231
        %1792 = vmatprep.subr.bf16.mxu0 %v1292
        %1793 = vmatpush2.bf16.msra.mxu0 %v1291
        %1794 = vmatprep.subr.bf16.mxu0 %v1288
        %1795 = vmatpush2.bf16.msra.mxu0 %v1287
        %1796 = vmatprep.subr.bf16.mxu0 %v1284
        %1797 = vmatpush2.bf16.msra.mxu0 %v1283
        %1798 = vmatprep.subr.bf16.mxu0 %v1280
        %1799 = vmatpush2.bf16.msra.mxu0 %v1279
        %1800 = vmatprep.subr.bf16.mxu0 %v1276
        %1801 = vmatpush2.bf16.msra.mxu0 %v1275
        %1802 = vmatprep.subr.bf16.mxu0 %v1272
        %1803 = vmatpush2.bf16.msra.mxu0 %v1271
        %1804 = vmatprep.subr.bf16.mxu0 %v1268
        %1805 = vmatpush2.bf16.msra.mxu0 %v1267
        %1806 = vmatprep.subr.bf16.mxu0 %v1264
        %1807 = vmatpush2.bf16.msra.mxu0 %v1263
        %1808 = vmatprep.mubr.bf16.mxu0 %v355
        %1809 = vmatmul.mubr.bf16.gmra.mxu0 %v354
        %v1810 = vpop.f32.mrf.mxu0
        %v1811 = vadd.f32 %v1768, %v1810
        %v1812 = vpop.f32.mrf.mxu0
        %v1813 = vadd.f32 %v1770, %v1812
        %v1814 = vpop.f32.mrf.mxu0
        %v1815 = vadd.f32 %v1772, %v1814
        %v1816 = vpop.f32.mrf.mxu0
        %v1817 = vadd.f32 %v1774, %v1816
        %1818 = vdwg.mxu0
        %1819 = vmatprep.subr.bf16.mxu0 %v1324
        %1820 = vmatpush1.bf16.msra.mxu0 %v1323
        %1821 = vmatprep.subr.bf16.mxu0 %v1320
        %1822 = vmatpush1.bf16.msra.mxu0 %v1319
        %1823 = vmatprep.subr.bf16.mxu0 %v1316
        %1824 = vmatpush1.bf16.msra.mxu0 %v1315
        %1825 = vmatprep.subr.bf16.mxu0 %v1312
        %1826 = vmatpush1.bf16.msra.mxu0 %v1311
        %1827 = vmatprep.subr.bf16.mxu0 %v1308
        %1828 = vmatpush1.bf16.msra.mxu0 %v1307
        %1829 = vmatprep.subr.bf16.mxu0 %v1304
        %1830 = vmatpush1.bf16.msra.mxu0 %v1303
        %1831 = vmatprep.subr.bf16.mxu0 %v1300
        %1832 = vmatpush1.bf16.msra.mxu0 %v1299
        %1833 = vmatprep.subr.bf16.mxu0 %v1296
        %1834 = vmatpush1.bf16.msra.mxu0 %v1295
        %1835 = vmatprep.subr.bf16.mxu0 %v1356
        %1836 = vmatpush2.bf16.msra.mxu0 %v1355
        %1837 = vmatprep.subr.bf16.mxu0 %v1352
        %1838 = vmatpush2.bf16.msra.mxu0 %v1351
        %1839 = vmatprep.subr.bf16.mxu0 %v1348
        %1840 = vmatpush2.bf16.msra.mxu0 %v1347
        %1841 = vmatprep.subr.bf16.mxu0 %v1344
        %1842 = vmatpush2.bf16.msra.mxu0 %v1343
        %1843 = vmatprep.subr.bf16.mxu0 %v1340
        %1844 = vmatpush2.bf16.msra.mxu0 %v1339
        %1845 = vmatprep.subr.bf16.mxu0 %v1336
        %1846 = vmatpush2.bf16.msra.mxu0 %v1335
        %1847 = vmatprep.subr.bf16.mxu0 %v1332
        %1848 = vmatpush2.bf16.msra.mxu0 %v1331
        %1849 = vmatprep.subr.bf16.mxu0 %v1328
        %1850 = vmatpush2.bf16.msra.mxu0 %v1327
        %1851 = vmatprep.mubr.bf16.mxu0 %v357
        %1852 = vmatmul.mubr.bf16.gmra.mxu0 %v356
        %v1853 = vpop.f32.mrf.mxu0
        %v1854 = vadd.f32 %v1811, %v1853
        %v1855 = vpop.f32.mrf.mxu0
        %v1856 = vadd.f32 %v1813, %v1855
        %v1857 = vpop.f32.mrf.mxu0
        %v1858 = vadd.f32 %v1815, %v1857
        %v1859 = vpop.f32.mrf.mxu0
        %v1860 = vadd.f32 %v1817, %v1859
        %1861 = vdwg.mxu0
        %1862 = vmatprep.subr.bf16.mxu0 0
        %1863 = vmatpush1.bf16.msra.mxu0 0
        %1864 = vmatprep.subr.bf16.mxu0 0
        %1865 = vmatpush1.bf16.msra.mxu0 0
        %1866 = vmatprep.subr.bf16.mxu0 0
        %1867 = vmatpush1.bf16.msra.mxu0 0
        %1868 = vmatprep.subr.bf16.mxu0 0
        %1869 = vmatpush1.bf16.msra.mxu0 0
        %1870 = vmatprep.subr.bf16.mxu0 0
        %1871 = vmatpush1.bf16.msra.mxu0 0
        %1872 = vmatprep.subr.bf16.mxu0 0
        %1873 = vmatpush1.bf16.msra.mxu0 0
        %1874 = vmatprep.subr.bf16.mxu0 0
        %1875 = vmatpush1.bf16.msra.mxu0 0
        %1876 = vmatprep.subr.bf16.mxu0 %v1360
        %1877 = vmatpush1.bf16.msra.mxu0 %v1359
        %1878 = vmatprep.subr.bf16.mxu0 0
        %1879 = vmatpush2.bf16.msra.mxu0 0
        %1880 = vmatprep.subr.bf16.mxu0 0
        %1881 = vmatpush2.bf16.msra.mxu0 0
        %1882 = vmatprep.subr.bf16.mxu0 0
        %1883 = vmatpush2.bf16.msra.mxu0 0
        %1884 = vmatprep.subr.bf16.mxu0 0
        %1885 = vmatpush2.bf16.msra.mxu0 0
        %1886 = vmatprep.subr.bf16.mxu0 0
        %1887 = vmatpush2.bf16.msra.mxu0 0
        %1888 = vmatprep.subr.bf16.mxu0 0
        %1889 = vmatpush2.bf16.msra.mxu0 0
        %1890 = vmatprep.subr.bf16.mxu0 0
        %1891 = vmatpush2.bf16.msra.mxu0 0
        %1892 = vmatprep.subr.bf16.mxu0 0
        %1893 = vmatpush2.bf16.msra.mxu0 0
        %1894 = vmatprep.mubr.bf16.mxu0 0
        %1895 = vmatmul.mubr.bf16.gmra.mxu0 %v1559
        %v1896 = vpop.f32.mrf.mxu0
        %v1897 = vadd.f32 %v1854, %v1896
        %v1898 = vpop.f32.mrf.mxu0
        %v1899 = vadd.f32 %v1856, %v1898
        %v1900 = vpop.f32.mrf.mxu0
        %v1901 = vadd.f32 %v1858, %v1900
        %v1902 = vpop.f32.mrf.mxu0
        %v1903 = vadd.f32 %v1860, %v1902
        %1904 = vdwg.mxu0
        %v1905 = vmax.f32 %v1725, 0.0
        %v1906 = vmax.f32 %v1727, 0.0
        %v1907 = vmax.f32 %v1897, 0.0
        %v1908 = vmax.f32 %v1899, 0.0
        %v1909 = vmax.f32 %v1729, 0.0
        %v1910 = vmax.f32 %v1731, 0.0
        %v1911 = vmax.f32 %v1901, 0.0
        %v1912 = vmax.f32 %v1903, 0.0
        %v1913 = vpack.c.bf16 %v1909, %v1905
        %v1914 = vpack.c.bf16 %v1910, %v1906
        %v1915 = vpack.c.bf16 %v1911, %v1907
        %v1916 = vpack.c.bf16 %v1912, %v1908
        %v1917 = vld [vmem:[%s3] sm:$0xf]
        %v1918 = vld [vmem:[%s3 + $0x4] sm:$0xf]
        %v1919 = vld [vmem:[%s3 + $0x8] sm:$0xf]
        %v1920 = vld [vmem:[%s3 + $0xc] sm:$0xf]
        %v1921 = vld [vmem:[%s3 + $0x10] sm:$0xf]
        %v1922 = vld [vmem:[%s3 + $0x14] sm:$0xf]
        %v1923 = vld [vmem:[%s3 + $0x18] sm:$0xf]
        %v1924 = vld [vmem:[%s3 + $0x1c] sm:$0xf]
        %v1925 = vld [vmem:[%s3 + $0x20] sm:$0xf]
        %v1926 = vld [vmem:[%s3 + $0x24] sm:$0xf]
        %v1927 = vld [vmem:[%s3 + $0x28] sm:$0xf]
        %v1928 = vld [vmem:[%s3 + $0x2c] sm:$0xf]
        %v1929 = vld [vmem:[%s3 + $0x30] sm:$0xf]
        %v1930 = vld [vmem:[%s3 + $0x34] sm:$0xf]
        %v1931 = vld [vmem:[%s3 + $0x38] sm:$0xf]
        %v1932 = vld [vmem:[%s3 + $0x3c] sm:$0xf]
        %v1933 = vld [vmem:[%s3 + $0x40] sm:$0xf]
        %v1934 = vld [vmem:[%s3 + $0x44] sm:$0xf]
        %v1935 = vld [vmem:[%s3 + $0x48] sm:$0xf]
        %v1936 = vld [vmem:[%s3 + $0x4c] sm:$0xf]
        %v1937 = vld [vmem:[%s3 + $0x50] sm:$0xf]
        %v1938 = vld [vmem:[%s3 + $0x54] sm:$0xf]
        %v1939 = vld [vmem:[%s3 + $0x58] sm:$0xf]
        %v1940 = vld [vmem:[%s3 + $0x5c] sm:$0xf]
        %v1941 = vld [vmem:[%s3 + $0x60] sm:$0xf]
        %v1942 = vld [vmem:[%s3 + $0x64] sm:$0xf]
        %v1943 = vld [vmem:[%s3 + $0x68] sm:$0xf]
        %v1944 = vld [vmem:[%s3 + $0x6c] sm:$0xf]
        %v1945 = vld [vmem:[%s3 + $0x70] sm:$0xf]
        %v1946 = vld [vmem:[%s3 + $0x74] sm:$0xf]
        %v1947 = vld [vmem:[%s3 + $0x78] sm:$0xf]
        %v1948 = vld [vmem:[%s3 + $0x7c] sm:$0xf]
        %v1949 = vld [vmem:[%s3 + $0x80] sm:$0xf]
        %v1950 = vld [vmem:[%s3 + $0x84] sm:$0xf]
        %v1951 = vld [vmem:[%s3 + $0x88] sm:$0xf]
        %v1952 = vld [vmem:[%s3 + $0x8c] sm:$0xf]
        %v1953 = vld [vmem:[%s3 + $0x90] sm:$0xf]
        %v1954 = vld [vmem:[%s3 + $0x94] sm:$0xf]
        %v1955 = vld [vmem:[%s3 + $0x98] sm:$0xf]
        %v1956 = vld [vmem:[%s3 + $0x9c] sm:$0xf]
        %v1957 = vld [vmem:[%s3 + $0xa0] sm:$0xf]
        %v1958 = vld [vmem:[%s3 + $0xa4] sm:$0xf]
        %v1959 = vld [vmem:[%s3 + $0xa8] sm:$0xf]
        %v1960 = vld [vmem:[%s3 + $0xac] sm:$0xf]
        %v1961 = vld [vmem:[%s3 + $0xb0] sm:$0xf]
        %v1962 = vld [vmem:[%s3 + $0xb4] sm:$0xf]
        %v1963 = vld [vmem:[%s3 + $0xb8] sm:$0xf]
        %v1964 = vld [vmem:[%s3 + $0xbc] sm:$0xf]
        %v1965 = vld [vmem:[%s3 + $0xc0] sm:$0xf]
        %v1966 = vld [vmem:[%s4] sm:$0x1]
        %v1968 = vlaneseq
        %v1969 = vshrl.u32 %v1968, 7
        %v1970 = vsub.s32 0, %v1969
        %v1971 = vrot.slane %v1966, %v1970
        %v2022 = vunpack.c.l.b16 %v1917
        %v2023 = vunpack.c.l.b16 %v1918
        %v2024 = vunpack.c.l.b16 %v1919
        %v2025 = vunpack.c.l.b16 %v1920
        %v2026 = vunpack.c.l.b16 %v1921
        %v2027 = vunpack.c.l.b16 %v1922
        %v2028 = vunpack.c.l.b16 %v1923
        %v2029 = vunpack.c.l.b16 %v1924
        %v2030 = vunpack.c.l.b16 %v1925
        %v2031 = vunpack.c.l.b16 %v1926
        %v2032 = vunpack.c.l.b16 %v1927
        %v2033 = vunpack.c.l.b16 %v1928
        %v2034 = vunpack.c.l.b16 %v1929
        %v2035 = vunpack.c.l.b16 %v1930
        %v2036 = vunpack.c.l.b16 %v1931
        %v2037 = vunpack.c.l.b16 %v1932
        %v2038 = vunpack.c.l.b16 %v1933
        %v2039 = vunpack.c.l.b16 %v1934
        %v2040 = vunpack.c.l.b16 %v1935
        %v2041 = vunpack.c.l.b16 %v1936
        %v2042 = vunpack.c.l.b16 %v1937
        %v2043 = vunpack.c.l.b16 %v1938
        %v2044 = vunpack.c.l.b16 %v1939
        %v2045 = vunpack.c.l.b16 %v1940
        %v2046 = vunpack.c.l.b16 %v1941
        %v2047 = vunpack.c.l.b16 %v1942
        %v2048 = vunpack.c.l.b16 %v1943
        %v2049 = vunpack.c.l.b16 %v1944
        %v2050 = vunpack.c.l.b16 %v1945
        %v2051 = vunpack.c.l.b16 %v1946
        %v2052 = vunpack.c.l.b16 %v1947
        %v2053 = vunpack.c.l.b16 %v1948
        %v2054 = vunpack.c.l.b16 %v1949
        %v2055 = vunpack.c.l.b16 %v1950
        %v2056 = vunpack.c.l.b16 %v1951
        %v2057 = vunpack.c.l.b16 %v1952
        %v2058 = vunpack.c.l.b16 %v1953
        %v2059 = vunpack.c.l.b16 %v1954
        %v2060 = vunpack.c.l.b16 %v1955
        %v2061 = vunpack.c.l.b16 %v1956
        %v2062 = vunpack.c.l.b16 %v1957
        %v2063 = vunpack.c.l.b16 %v1958
        %v2064 = vunpack.c.l.b16 %v1959
        %v2065 = vunpack.c.l.b16 %v1960
        %v2066 = vunpack.c.l.b16 %v1961
        %v2067 = vunpack.c.l.b16 %v1962
        %v2068 = vunpack.c.l.b16 %v1963
        %v2069 = vunpack.c.l.b16 %v1964
        %v2070 = vunpack.c.l.b16 %v1965
        %v2071 = vpack.c.b16 %v2023, %v2022
        %v2072 = vpack.c.b16 %v2025, %v2024
        %v2073 = vpack.c.b16 %v2027, %v2026
        %v2074 = vpack.c.b16 %v2029, %v2028
        %v2075 = vpack.c.b16 %v2031, %v2030
        %v2076 = vpack.c.b16 %v2033, %v2032
        %v2077 = vpack.c.b16 %v2035, %v2034
        %v2078 = vpack.c.b16 %v2037, %v2036
        %v2079 = vpack.c.b16 %v2039, %v2038
        %v2080 = vpack.c.b16 %v2041, %v2040
        %v2081 = vpack.c.b16 %v2043, %v2042
        %v2082 = vpack.c.b16 %v2045, %v2044
        %v2083 = vpack.c.b16 %v2047, %v2046
        %v2084 = vpack.c.b16 %v2049, %v2048
        %v2085 = vpack.c.b16 %v2051, %v2050
        %v2086 = vpack.c.b16 %v2053, %v2052
        %v2087 = vpack.c.b16 %v2055, %v2054
        %v2088 = vpack.c.b16 %v2057, %v2056
        %v2089 = vpack.c.b16 %v2059, %v2058
        %v2090 = vpack.c.b16 %v2061, %v2060
        %v2091 = vpack.c.b16 %v2063, %v2062
        %v2092 = vpack.c.b16 %v2065, %v2064
        %v2093 = vpack.c.b16 %v2067, %v2066
        %v2094 = vpack.c.b16 %v2069, %v2068
        %v2095 = vpack.c.b16 %v2070, %v2070
        %vm2120 = vcmask 64512
        %v2122 = vsel %vm2120, %v1916, 0
        %vm2124 = vcmask 1043456
        %v2126 = vsel %vm2124, %v2095, 0
        %2128 = vmatprep.subr.bf16.mxu0 0
        %2129 = vmatpush1.bf16.msra.mxu0 %v2078
        %2130 = vmatprep.subr.bf16.mxu0 0
        %2131 = vmatpush1.bf16.msra.mxu0 %v2077
        %2132 = vmatprep.subr.bf16.mxu0 0
        %2133 = vmatpush1.bf16.msra.mxu0 %v2076
        %2134 = vmatprep.subr.bf16.mxu0 0
        %2135 = vmatpush1.bf16.msra.mxu0 %v2075
        %2136 = vmatprep.subr.bf16.mxu0 0
        %2137 = vmatpush1.bf16.msra.mxu0 %v2074
        %2138 = vmatprep.subr.bf16.mxu0 0
        %2139 = vmatpush1.bf16.msra.mxu0 %v2073
        %2140 = vmatprep.subr.bf16.mxu0 0
        %2141 = vmatpush1.bf16.msra.mxu0 %v2072
        %2142 = vmatprep.subr.bf16.mxu0 0
        %2143 = vmatpush1.bf16.msra.mxu0 %v2071
        %2144 = vmatprep.subr.bf16.mxu0 0
        %2145 = vmatpush2.bf16.msra.mxu0 %v2086
        %2146 = vmatprep.subr.bf16.mxu0 0
        %2147 = vmatpush2.bf16.msra.mxu0 %v2085
        %2148 = vmatprep.subr.bf16.mxu0 0
        %2149 = vmatpush2.bf16.msra.mxu0 %v2084
        %2150 = vmatprep.subr.bf16.mxu0 0
        %2151 = vmatpush2.bf16.msra.mxu0 %v2083
        %2152 = vmatprep.subr.bf16.mxu0 0
        %2153 = vmatpush2.bf16.msra.mxu0 %v2082
        %2154 = vmatprep.subr.bf16.mxu0 0
        %2155 = vmatpush2.bf16.msra.mxu0 %v2081
        %2156 = vmatprep.subr.bf16.mxu0 0
        %2157 = vmatpush2.bf16.msra.mxu0 %v2080
        %2158 = vmatprep.subr.bf16.mxu0 0
        %2159 = vmatpush2.bf16.msra.mxu0 %v2079
        %2160 = vmatprep.mubr.bf16.mxu0 %v1914
        %2161 = vmatmul.mubr.bf16.gmra.mxu0 %v1913
        %v2162 = vpop.f32.mrf.mxu0
        %v2163 = vadd.f32 %v1971, %v2162
        %v2164 = vpop.f32.mrf.mxu0
        %v2165 = vpop.f32.mrf.mxu0
        %v2166 = vadd.f32 %v1971, %v2165
        %v2167 = vpop.f32.mrf.mxu0
        %2168 = vdwg.mxu0
        %2169 = vmatprep.subr.bf16.mxu0 0
        %2170 = vmatpush1.bf16.msra.mxu0 %v2094
        %2171 = vmatprep.subr.bf16.mxu0 0
        %2172 = vmatpush1.bf16.msra.mxu0 %v2093
        %2173 = vmatprep.subr.bf16.mxu0 0
        %2174 = vmatpush1.bf16.msra.mxu0 %v2092
        %2175 = vmatprep.subr.bf16.mxu0 0
        %2176 = vmatpush1.bf16.msra.mxu0 %v2091
        %2177 = vmatprep.subr.bf16.mxu0 0
        %2178 = vmatpush1.bf16.msra.mxu0 %v2090
        %2179 = vmatprep.subr.bf16.mxu0 0
        %2180 = vmatpush1.bf16.msra.mxu0 %v2089
        %2181 = vmatprep.subr.bf16.mxu0 0
        %2182 = vmatpush1.bf16.msra.mxu0 %v2088
        %2183 = vmatprep.subr.bf16.mxu0 0
        %2184 = vmatpush1.bf16.msra.mxu0 %v2087
        %2185 = vmatprep.subr.bf16.mxu0 0
        %2186 = vmatpush2.bf16.msra.mxu0 0
        %2187 = vmatprep.subr.bf16.mxu0 0
        %2188 = vmatpush2.bf16.msra.mxu0 0
        %2189 = vmatprep.subr.bf16.mxu0 0
        %2190 = vmatpush2.bf16.msra.mxu0 0
        %2191 = vmatprep.subr.bf16.mxu0 0
        %2192 = vmatpush2.bf16.msra.mxu0 0
        %2193 = vmatprep.subr.bf16.mxu0 0
        %2194 = vmatpush2.bf16.msra.mxu0 0
        %2195 = vmatprep.subr.bf16.mxu0 0
        %2196 = vmatpush2.bf16.msra.mxu0 0
        %2197 = vmatprep.subr.bf16.mxu0 0
        %2198 = vmatpush2.bf16.msra.mxu0 0
        %2199 = vmatprep.subr.bf16.mxu0 0
        %2200 = vmatpush2.bf16.msra.mxu0 %v2126
        %2201 = vmatprep.mubr.bf16.mxu0 %v2122
        %2202 = vmatmul.mubr.bf16.gmra.mxu0 %v1915
        %v2203 = vpop.f32.mrf.mxu0
        %v2204 = vadd.f32 %v2163, %v2203
        %v2205 = vpop.f32.mrf.mxu0
        %v2206 = vpop.f32.mrf.mxu0
        %v2207 = vadd.f32 %v2166, %v2206
        %v2208 = vpop.f32.mrf.mxu0
        %2209 = vdwg.mxu0
        %v2210 = vmax.f32 %v2204, 0.0
        %v2211 = vmax.f32 %v2207, 0.0
        %v2212 = vpack.c.bf16 %v2211, %v2210
        %v2213 = vld [vmem:[%s5] sm:$0xff]
        %v2214 = vld [vmem:[%s5 + $0x8] sm:$0xff]
        %v2215 = vld [vmem:[%s5 + $0x10] sm:$0xff]
        %v2216 = vld [vmem:[%s5 + $0x18] sm:$0xff]
        %v2217 = vld [vmem:[%s5 + $0x20] sm:$0xff]
        %v2218 = vld [vmem:[%s5 + $0x28] sm:$0xff]
        %v2219 = vld [vmem:[%s5 + $0x30] sm:$0xff]
        %v2220 = vld [vmem:[%s5 + $0x38] sm:$0xff]
        %v2221 = vld [vmem:[%s5 + $0x40] sm:$0xff]
        %v2222 = vld [vmem:[%s5 + $0x48] sm:$0xff]
        %v2223 = vld [vmem:[%s5 + $0x50] sm:$0xff]
        %v2224 = vld [vmem:[%s5 + $0x58] sm:$0xff]
        %v2225 = vld [vmem:[%s5 + $0x60] sm:$0xff]
        %v2226 = vld [vmem:[%s5 + $0x68] sm:$0xff]
        %v2227 = vld [vmem:[%s5 + $0x70] sm:$0xff]
        %v2228 = vld [vmem:[%s5 + $0x78] sm:$0xff]
        %v2229 = vld [vmem:[%s5 + $0x80] sm:$0xff]
        %v2230 = vld [vmem:[%s5 + $0x88] sm:$0xff]
        %v2231 = vld [vmem:[%s5 + $0x90] sm:$0xff]
        %v2232 = vld [vmem:[%s5 + $0x98] sm:$0xff]
        %v2233 = vld [vmem:[%s5 + $0xa0] sm:$0xff]
        %v2234 = vld [vmem:[%s5 + $0xa8] sm:$0xff]
        %v2235 = vld [vmem:[%s5 + $0xb0] sm:$0xff]
        %v2236 = vld [vmem:[%s5 + $0xb8] sm:$0xff]
        %v2237 = vld [vmem:[%s5 + $0xc0] sm:$0xff]
        %v2238 = vld [vmem:[%s5 + $0xc8] sm:$0xff]
        %v2239 = vld [vmem:[%s5 + $0xd0] sm:$0xff]
        %v2240 = vld [vmem:[%s5 + $0xd8] sm:$0xff]
        %v2241 = vld [vmem:[%s5 + $0xe0] sm:$0xff]
        %v2242 = vld [vmem:[%s5 + $0xe8] sm:$0xff]
        %v2243 = vld [vmem:[%s5 + $0xf0] sm:$0xff]
        %v2244 = vld [vmem:[%s5 + $0xf8] sm:$0xff]
        %v2245 = vld [vmem:[%s6] sm:$0xf]
        %v2247 = vlaneseq
        %v2248 = vshrl.u32 %v2247, 7
        %v2249 = vsub.s32 0, %v2248
        %v2250 = vrot.slane %v2245, %v2249
        %v2251 = vlaneseq
        %v2252 = vshrl.u32 %v2251, 7
        %v2253 = vsub.s32 1, %v2252
        %v2254 = vrot.slane %v2245, %v2253
        %v2255 = vlaneseq
        %v2256 = vshrl.u32 %v2255, 7
        %v2257 = vsub.s32 2, %v2256
        %v2258 = vrot.slane %v2245, %v2257
        %v2259 = vlaneseq
        %v2260 = vshrl.u32 %v2259, 7
        %v2261 = vsub.s32 3, %v2260
        %v2262 = vrot.slane %v2245, %v2261
        %v2299 = vunpack.c.l.b16 %v2213
        %v2300 = vunpack.c.h.b16 %v2213
        %v2301 = vunpack.c.l.b16 %v2214
        %v2302 = vunpack.c.h.b16 %v2214
        %v2303 = vunpack.c.l.b16 %v2215
        %v2304 = vunpack.c.h.b16 %v2215
        %v2305 = vunpack.c.l.b16 %v2216
        %v2306 = vunpack.c.h.b16 %v2216
        %v2307 = vunpack.c.l.b16 %v2217
        %v2308 = vunpack.c.h.b16 %v2217
        %v2309 = vunpack.c.l.b16 %v2218
        %v2310 = vunpack.c.h.b16 %v2218
        %v2311 = vunpack.c.l.b16 %v2219
        %v2312 = vunpack.c.h.b16 %v2219
        %v2313 = vunpack.c.l.b16 %v2220
        %v2314 = vunpack.c.h.b16 %v2220
        %v2315 = vunpack.c.l.b16 %v2221
        %v2316 = vunpack.c.h.b16 %v2221
        %v2317 = vunpack.c.l.b16 %v2222
        %v2318 = vunpack.c.h.b16 %v2222
        %v2319 = vunpack.c.l.b16 %v2223
        %v2320 = vunpack.c.h.b16 %v2223
        %v2321 = vunpack.c.l.b16 %v2224
        %v2322 = vunpack.c.h.b16 %v2224
        %v2323 = vunpack.c.l.b16 %v2225
        %v2324 = vunpack.c.h.b16 %v2225
        %v2325 = vunpack.c.l.b16 %v2226
        %v2326 = vunpack.c.h.b16 %v2226
        %v2327 = vunpack.c.l.b16 %v2227
        %v2328 = vunpack.c.h.b16 %v2227
        %v2329 = vunpack.c.l.b16 %v2228
        %v2330 = vunpack.c.h.b16 %v2228
        %v2331 = vunpack.c.l.b16 %v2229
        %v2332 = vunpack.c.h.b16 %v2229
        %v2333 = vunpack.c.l.b16 %v2230
        %v2334 = vunpack.c.h.b16 %v2230
        %v2335 = vunpack.c.l.b16 %v2231
        %v2336 = vunpack.c.h.b16 %v2231
        %v2337 = vunpack.c.l.b16 %v2232
        %v2338 = vunpack.c.h.b16 %v2232
        %v2339 = vunpack.c.l.b16 %v2233
        %v2340 = vunpack.c.h.b16 %v2233
        %v2341 = vunpack.c.l.b16 %v2234
        %v2342 = vunpack.c.h.b16 %v2234
        %v2343 = vunpack.c.l.b16 %v2235
        %v2344 = vunpack.c.h.b16 %v2235
        %v2345 = vunpack.c.l.b16 %v2236
        %v2346 = vunpack.c.h.b16 %v2236
        %v2347 = vunpack.c.l.b16 %v2237
        %v2348 = vunpack.c.h.b16 %v2237
        %v2349 = vunpack.c.l.b16 %v2238
        %v2350 = vunpack.c.h.b16 %v2238
        %v2351 = vunpack.c.l.b16 %v2239
        %v2352 = vunpack.c.h.b16 %v2239
        %v2353 = vunpack.c.l.b16 %v2240
        %v2354 = vunpack.c.h.b16 %v2240
        %v2355 = vunpack.c.l.b16 %v2241
        %v2356 = vunpack.c.h.b16 %v2241
        %v2357 = vunpack.c.l.b16 %v2242
        %v2358 = vunpack.c.h.b16 %v2242
        %v2359 = vunpack.c.l.b16 %v2243
        %v2360 = vunpack.c.h.b16 %v2243
        %v2361 = vunpack.c.l.b16 %v2244
        %v2362 = vunpack.c.h.b16 %v2244
        %v2363 = vpack.c.b16 %v2303, %v2299
        %v2364 = vpack.c.b16 %v2304, %v2300
        %v2365 = vpack.c.b16 %v2305, %v2301
        %v2366 = vpack.c.b16 %v2306, %v2302
        %v2367 = vpack.c.b16 %v2311, %v2307
        %v2368 = vpack.c.b16 %v2312, %v2308
        %v2369 = vpack.c.b16 %v2313, %v2309
        %v2370 = vpack.c.b16 %v2314, %v2310
        %v2371 = vpack.c.b16 %v2319, %v2315
        %v2372 = vpack.c.b16 %v2320, %v2316
        %v2373 = vpack.c.b16 %v2321, %v2317
        %v2374 = vpack.c.b16 %v2322, %v2318
        %v2375 = vpack.c.b16 %v2327, %v2323
        %v2376 = vpack.c.b16 %v2328, %v2324
        %v2377 = vpack.c.b16 %v2329, %v2325
        %v2378 = vpack.c.b16 %v2330, %v2326
        %v2379 = vpack.c.b16 %v2335, %v2331
        %v2380 = vpack.c.b16 %v2336, %v2332
        %v2381 = vpack.c.b16 %v2337, %v2333
        %v2382 = vpack.c.b16 %v2338, %v2334
        %v2383 = vpack.c.b16 %v2343, %v2339
        %v2384 = vpack.c.b16 %v2344, %v2340
        %v2385 = vpack.c.b16 %v2345, %v2341
        %v2386 = vpack.c.b16 %v2346, %v2342
        %v2387 = vpack.c.b16 %v2351, %v2347
        %v2388 = vpack.c.b16 %v2352, %v2348
        %v2389 = vpack.c.b16 %v2353, %v2349
        %v2390 = vpack.c.b16 %v2354, %v2350
        %v2391 = vpack.c.b16 %v2359, %v2355
        %v2392 = vpack.c.b16 %v2360, %v2356
        %v2393 = vpack.c.b16 %v2361, %v2357
        %v2394 = vpack.c.b16 %v2362, %v2358
        %2427 = vmatprep.subr.bf16.mxu0 %v2392
        %2428 = vmatpush1.bf16.msra.mxu0 %v2391
        %2429 = vmatprep.subr.bf16.mxu0 %v2388
        %2430 = vmatpush1.bf16.msra.mxu0 %v2387
        %2431 = vmatprep.subr.bf16.mxu0 %v2384
        %2432 = vmatpush1.bf16.msra.mxu0 %v2383
        %2433 = vmatprep.subr.bf16.mxu0 %v2380
        %2434 = vmatpush1.bf16.msra.mxu0 %v2379
        %2435 = vmatprep.subr.bf16.mxu0 %v2376
        %2436 = vmatpush1.bf16.msra.mxu0 %v2375
        %2437 = vmatprep.subr.bf16.mxu0 %v2372
        %2438 = vmatpush1.bf16.msra.mxu0 %v2371
        %2439 = vmatprep.subr.bf16.mxu0 %v2368
        %2440 = vmatpush1.bf16.msra.mxu0 %v2367
        %2441 = vmatprep.subr.bf16.mxu0 %v2364
        %2442 = vmatpush1.bf16.msra.mxu0 %v2363
        %2443 = vmatprep.subr.bf16.mxu0 0
        %2444 = vmatpush2.bf16.msra.mxu0 0
        %2445 = vmatprep.subr.bf16.mxu0 0
        %2446 = vmatpush2.bf16.msra.mxu0 0
        %2447 = vmatprep.subr.bf16.mxu0 0
        %2448 = vmatpush2.bf16.msra.mxu0 0
        %2449 = vmatprep.subr.bf16.mxu0 0
        %2450 = vmatpush2.bf16.msra.mxu0 0
        %2451 = vmatprep.subr.bf16.mxu0 0
        %2452 = vmatpush2.bf16.msra.mxu0 0
        %2453 = vmatprep.subr.bf16.mxu0 0
        %2454 = vmatpush2.bf16.msra.mxu0 0
        %2455 = vmatprep.subr.bf16.mxu0 0
        %2456 = vmatpush2.bf16.msra.mxu0 0
        %2457 = vmatprep.subr.bf16.mxu0 0
        %2458 = vmatpush2.bf16.msra.mxu0 0
        %2459 = vmatprep.mubr.bf16.mxu0 0
        %2460 = vmatmul.mubr.bf16.gmra.mxu0 %v2212
        %v2461 = vpop.f32.mrf.mxu0
        %v2462 = vadd.f32 %v2250, %v2461
        %v2463 = vpop.f32.mrf.mxu0
        %v2464 = vadd.f32 %v2254, %v2463
        %v2465 = vpop.f32.mrf.mxu0
        %v2466 = vadd.f32 %v2250, %v2465
        %v2467 = vpop.f32.mrf.mxu0
        %v2468 = vadd.f32 %v2254, %v2467
        %2469 = vdwg.mxu0
        %2470 = vmatprep.subr.bf16.mxu0 %v2394
        %2471 = vmatpush1.bf16.msra.mxu0 %v2393
        %2472 = vmatprep.subr.bf16.mxu0 %v2390
        %2473 = vmatpush1.bf16.msra.mxu0 %v2389
        %2474 = vmatprep.subr.bf16.mxu0 %v2386
        %2475 = vmatpush1.bf16.msra.mxu0 %v2385
        %2476 = vmatprep.subr.bf16.mxu0 %v2382
        %2477 = vmatpush1.bf16.msra.mxu0 %v2381
        %2478 = vmatprep.subr.bf16.mxu0 %v2378
        %2479 = vmatpush1.bf16.msra.mxu0 %v2377
        %2480 = vmatprep.subr.bf16.mxu0 %v2374
        %2481 = vmatpush1.bf16.msra.mxu0 %v2373
        %2482 = vmatprep.subr.bf16.mxu0 %v2370
        %2483 = vmatpush1.bf16.msra.mxu0 %v2369
        %2484 = vmatprep.subr.bf16.mxu0 %v2366
        %2485 = vmatpush1.bf16.msra.mxu0 %v2365
        %2486 = vmatprep.subr.bf16.mxu0 0
        %2487 = vmatpush2.bf16.msra.mxu0 0
        %2488 = vmatprep.subr.bf16.mxu0 0
        %2489 = vmatpush2.bf16.msra.mxu0 0
        %2490 = vmatprep.subr.bf16.mxu0 0
        %2491 = vmatpush2.bf16.msra.mxu0 0
        %2492 = vmatprep.subr.bf16.mxu0 0
        %2493 = vmatpush2.bf16.msra.mxu0 0
        %2494 = vmatprep.subr.bf16.mxu0 0
        %2495 = vmatpush2.bf16.msra.mxu0 0
        %2496 = vmatprep.subr.bf16.mxu0 0
        %2497 = vmatpush2.bf16.msra.mxu0 0
        %2498 = vmatprep.subr.bf16.mxu0 0
        %2499 = vmatpush2.bf16.msra.mxu0 0
        %2500 = vmatprep.subr.bf16.mxu0 0
        %2501 = vmatpush2.bf16.msra.mxu0 0
        %2502 = vmatprep.mubr.bf16.mxu0 0
        %2503 = vmatmul.mubr.bf16.gmra.mxu0 %v2212
        %v2504 = vpop.f32.mrf.mxu0
        %v2505 = vadd.f32 %v2258, %v2504
        %v2506 = vpop.f32.mrf.mxu0
        %v2507 = vadd.f32 %v2262, %v2506
        %v2508 = vpop.f32.mrf.mxu0
        %v2509 = vadd.f32 %v2258, %v2508
        %v2510 = vpop.f32.mrf.mxu0
        %v2511 = vadd.f32 %v2262, %v2510
        %2512 = vdwg.mxu0
        %v2513 = vmax.f32 %v2462, 0.0
        %v2514 = vmax.f32 %v2464, 0.0
        %v2515 = vmax.f32 %v2505, 0.0
        %v2516 = vmax.f32 %v2507, 0.0
        %v2517 = vmax.f32 %v2466, 0.0
        %v2518 = vmax.f32 %v2468, 0.0
        %v2519 = vmax.f32 %v2509, 0.0
        %v2520 = vmax.f32 %v2511, 0.0
        %v2521 = vpack.c.bf16 %v2517, %v2513
        %v2522 = vpack.c.bf16 %v2518, %v2514
        %v2523 = vpack.c.bf16 %v2519, %v2515
        %v2524 = vpack.c.bf16 %v2520, %v2516
        %v2525 = vld [vmem:[%s7] sm:$0xff]
        %v2526 = vld [vmem:[%s7 + $0x8] sm:$0xff]
        %v2527 = vld [vmem:[%s7 + $0x10] sm:$0xff]
        %v2528 = vld [vmem:[%s7 + $0x18] sm:$0xf]
        %v2529 = vld [vmem:[%s7 + $0x1c] sm:$0xff]
        %v2530 = vld [vmem:[%s7 + $0x24] sm:$0xff]
        %v2531 = vld [vmem:[%s7 + $0x2c] sm:$0xff]
        %v2532 = vld [vmem:[%s7 + $0x34] sm:$0xf]
        %v2533 = vld [vmem:[%s7 + $0x38] sm:$0xff]
        %v2534 = vld [vmem:[%s7 + $0x40] sm:$0xff]
        %v2535 = vld [vmem:[%s7 + $0x48] sm:$0xff]
        %v2536 = vld [vmem:[%s7 + $0x50] sm:$0xf]
        %v2537 = vld [vmem:[%s7 + $0x54] sm:$0xff]
        %v2538 = vld [vmem:[%s7 + $0x5c] sm:$0xff]
        %v2539 = vld [vmem:[%s7 + $0x64] sm:$0xff]
        %v2540 = vld [vmem:[%s7 + $0x6c] sm:$0xf]
        %v2541 = vld [vmem:[%s7 + $0x70] sm:$0xff]
        %v2542 = vld [vmem:[%s7 + $0x78] sm:$0xff]
        %v2543 = vld [vmem:[%s7 + $0x80] sm:$0xff]
        %v2544 = vld [vmem:[%s7 + $0x88] sm:$0xf]
        %v2545 = vld [vmem:[%s7 + $0x8c] sm:$0xff]
        %v2546 = vld [vmem:[%s7 + $0x94] sm:$0xff]
        %v2547 = vld [vmem:[%s7 + $0x9c] sm:$0xff]
        %v2548 = vld [vmem:[%s7 + $0xa4] sm:$0xf]
        %v2549 = vld [vmem:[%s7 + $0xa8] sm:$0xff]
        %v2550 = vld [vmem:[%s7 + $0xb0] sm:$0xff]
        %v2551 = vld [vmem:[%s7 + $0xb8] sm:$0xff]
        %v2552 = vld [vmem:[%s7 + $0xc0] sm:$0xf]
        %v2553 = vld [vmem:[%s7 + $0xc4] sm:$0xff]
        %v2554 = vld [vmem:[%s7 + $0xcc] sm:$0xff]
        %v2555 = vld [vmem:[%s7 + $0xd4] sm:$0xff]
        %v2556 = vld [vmem:[%s7 + $0xdc] sm:$0xf]
        %v2557 = vld [vmem:[%s7 + $0xe0] sm:$0xff]
        %v2558 = vld [vmem:[%s7 + $0xe8] sm:$0xff]
        %v2559 = vld [vmem:[%s7 + $0xf0] sm:$0xff]
        %v2560 = vld [vmem:[%s7 + $0xf8] sm:$0xf]
        %v2561 = vld [vmem:[%s7 + $0xfc] sm:$0xff]
        %v2562 = vld [vmem:[%s7 + $0x104] sm:$0xff]
        %v2563 = vld [vmem:[%s7 + $0x10c] sm:$0xff]
        %v2564 = vld [vmem:[%s7 + $0x114] sm:$0xf]
        %v2565 = vld [vmem:[%s7 + $0x118] sm:$0xff]
        %v2566 = vld [vmem:[%s7 + $0x120] sm:$0xff]
        %v2567 = vld [vmem:[%s7 + $0x128] sm:$0xff]
        %v2568 = vld [vmem:[%s7 + $0x130] sm:$0xf]
        %v2569 = vld [vmem:[%s7 + $0x134] sm:$0xff]
        %v2570 = vld [vmem:[%s7 + $0x13c] sm:$0xff]
        %v2571 = vld [vmem:[%s7 + $0x144] sm:$0xff]
        %v2572 = vld [vmem:[%s7 + $0x14c] sm:$0xf]
        %v2573 = vld [vmem:[%s7 + $0x150] sm:$0xff]
        %v2574 = vld [vmem:[%s7 + $0x158] sm:$0xff]
        %v2575 = vld [vmem:[%s7 + $0x160] sm:$0xff]
        %v2576 = vld [vmem:[%s7 + $0x168] sm:$0xf]
        %v2577 = vld [vmem:[%s7 + $0x16c] sm:$0xff]
        %v2578 = vld [vmem:[%s7 + $0x174] sm:$0xff]
        %v2579 = vld [vmem:[%s7 + $0x17c] sm:$0xff]
        %v2580 = vld [vmem:[%s7 + $0x184] sm:$0xf]
        %v2581 = vld [vmem:[%s7 + $0x188] sm:$0xff]
        %v2582 = vld [vmem:[%s7 + $0x190] sm:$0xff]
        %v2583 = vld [vmem:[%s7 + $0x198] sm:$0xff]
        %v2584 = vld [vmem:[%s7 + $0x1a0] sm:$0xf]
        %v2585 = vld [vmem:[%s7 + $0x1a4] sm:$0xff]
        %v2586 = vld [vmem:[%s7 + $0x1ac] sm:$0xff]
        %v2587 = vld [vmem:[%s7 + $0x1b4] sm:$0xff]
        %v2588 = vld [vmem:[%s7 + $0x1bc] sm:$0xf]
        %v2589 = vld [vmem:[%s7 + $0x1c0] sm:$0xff]
        %v2590 = vld [vmem:[%s7 + $0x1c8] sm:$0xff]
        %v2591 = vld [vmem:[%s7 + $0x1d0] sm:$0xff]
        %v2592 = vld [vmem:[%s7 + $0x1d8] sm:$0xf]
        %v2593 = vld [vmem:[%s7 + $0x1dc] sm:$0xff]
        %v2594 = vld [vmem:[%s7 + $0x1e4] sm:$0xff]
        %v2595 = vld [vmem:[%s7 + $0x1ec] sm:$0xff]
        %v2596 = vld [vmem:[%s7 + $0x1f4] sm:$0xf]
        %v2597 = vld [vmem:[%s7 + $0x1f8] sm:$0xff]
        %v2598 = vld [vmem:[%s7 + $0x200] sm:$0xff]
        %v2599 = vld [vmem:[%s7 + $0x208] sm:$0xff]
        %v2600 = vld [vmem:[%s7 + $0x210] sm:$0xf]
        %v2601 = vld [vmem:[%s7 + $0x214] sm:$0xff]
        %v2602 = vld [vmem:[%s7 + $0x21c] sm:$0xff]
        %v2603 = vld [vmem:[%s7 + $0x224] sm:$0xff]
        %v2604 = vld [vmem:[%s7 + $0x22c] sm:$0xf]
        %v2605 = vld [vmem:[%s7 + $0x230] sm:$0xff]
        %v2606 = vld [vmem:[%s7 + $0x238] sm:$0xff]
        %v2607 = vld [vmem:[%s7 + $0x240] sm:$0xff]
        %v2608 = vld [vmem:[%s7 + $0x248] sm:$0xf]
        %v2609 = vld [vmem:[%s7 + $0x24c] sm:$0xff]
        %v2610 = vld [vmem:[%s7 + $0x254] sm:$0xff]
        %v2611 = vld [vmem:[%s7 + $0x25c] sm:$0xff]
        %v2612 = vld [vmem:[%s7 + $0x264] sm:$0xf]
        %v2613 = vld [vmem:[%s7 + $0x268] sm:$0xff]
        %v2614 = vld [vmem:[%s7 + $0x270] sm:$0xff]
        %v2615 = vld [vmem:[%s7 + $0x278] sm:$0xff]
        %v2616 = vld [vmem:[%s7 + $0x280] sm:$0xf]
        %v2617 = vld [vmem:[%s7 + $0x284] sm:$0xff]
        %v2618 = vld [vmem:[%s7 + $0x28c] sm:$0xff]
        %v2619 = vld [vmem:[%s7 + $0x294] sm:$0xff]
        %v2620 = vld [vmem:[%s7 + $0x29c] sm:$0xf]
        %v2621 = vld [vmem:[%s7 + $0x2a0] sm:$0xff]
        %v2622 = vld [vmem:[%s7 + $0x2a8] sm:$0xff]
        %v2623 = vld [vmem:[%s7 + $0x2b0] sm:$0xff]
        %v2624 = vld [vmem:[%s7 + $0x2b8] sm:$0xf]
        %v2625 = vld [vmem:[%s7 + $0x2bc] sm:$0xff]
        %v2626 = vld [vmem:[%s7 + $0x2c4] sm:$0xff]
        %v2627 = vld [vmem:[%s7 + $0x2cc] sm:$0xff]
        %v2628 = vld [vmem:[%s7 + $0x2d4] sm:$0xf]
        %v2629 = vld [vmem:[%s7 + $0x2d8] sm:$0xff]
        %v2630 = vld [vmem:[%s7 + $0x2e0] sm:$0xff]
        %v2631 = vld [vmem:[%s7 + $0x2e8] sm:$0xff]
        %v2632 = vld [vmem:[%s7 + $0x2f0] sm:$0xf]
        %v2633 = vld [vmem:[%s7 + $0x2f4] sm:$0xff]
        %v2634 = vld [vmem:[%s7 + $0x2fc] sm:$0xff]
        %v2635 = vld [vmem:[%s7 + $0x304] sm:$0xff]
        %v2636 = vld [vmem:[%s7 + $0x30c] sm:$0xf]
        %v2637 = vld [vmem:[%s7 + $0x310] sm:$0xff]
        %v2638 = vld [vmem:[%s7 + $0x318] sm:$0xff]
        %v2639 = vld [vmem:[%s7 + $0x320] sm:$0xff]
        %v2640 = vld [vmem:[%s7 + $0x328] sm:$0xf]
        %v2641 = vld [vmem:[%s7 + $0x32c] sm:$0xff]
        %v2642 = vld [vmem:[%s7 + $0x334] sm:$0xff]
        %v2643 = vld [vmem:[%s7 + $0x33c] sm:$0xff]
        %v2644 = vld [vmem:[%s7 + $0x344] sm:$0xf]
        %v2645 = vld [vmem:[%s7 + $0x348] sm:$0xff]
        %v2646 = vld [vmem:[%s7 + $0x350] sm:$0xff]
        %v2647 = vld [vmem:[%s7 + $0x358] sm:$0xff]
        %v2648 = vld [vmem:[%s7 + $0x360] sm:$0xf]
        %v2649 = vld [vmem:[%s7 + $0x364] sm:$0xff]
        %v2650 = vld [vmem:[%s7 + $0x36c] sm:$0xff]
        %v2651 = vld [vmem:[%s7 + $0x374] sm:$0xff]
        %v2652 = vld [vmem:[%s7 + $0x37c] sm:$0xf]
        %v2653 = vld [vmem:[%s7 + $0x380] sm:$0xff]
        %v2654 = vld [vmem:[%s7 + $0x388] sm:$0xff]
        %v2655 = vld [vmem:[%s7 + $0x390] sm:$0xff]
        %v2656 = vld [vmem:[%s7 + $0x398] sm:$0xf]
        %v2657 = vld [vmem:[%s7 + $0x39c] sm:$0xff]
        %v2658 = vld [vmem:[%s7 + $0x3a4] sm:$0xff]
        %v2659 = vld [vmem:[%s7 + $0x3ac] sm:$0xff]
        %v2660 = vld [vmem:[%s7 + $0x3b4] sm:$0xf]
        %v2661 = vld [vmem:[%s7 + $0x3b8] sm:$0xff]
        %v2662 = vld [vmem:[%s7 + $0x3c0] sm:$0xff]
        %v2663 = vld [vmem:[%s7 + $0x3c8] sm:$0xff]
        %v2664 = vld [vmem:[%s7 + $0x3d0] sm:$0xf]
        %v2665 = vld [vmem:[%s7 + $0x3d4] sm:$0xff]
        %v2666 = vld [vmem:[%s7 + $0x3dc] sm:$0xff]
        %v2667 = vld [vmem:[%s7 + $0x3e4] sm:$0xff]
        %v2668 = vld [vmem:[%s7 + $0x3ec] sm:$0xf]
        %v2669 = vld [vmem:[%s7 + $0x3f0] sm:$0xff]
        %v2670 = vld [vmem:[%s7 + $0x3f8] sm:$0xff]
        %v2671 = vld [vmem:[%s7 + $0x400] sm:$0xff]
        %v2672 = vld [vmem:[%s7 + $0x408] sm:$0xf]
        %v2673 = vld [vmem:[%s7 + $0x40c] sm:$0xff]
        %v2674 = vld [vmem:[%s7 + $0x414] sm:$0xff]
        %v2675 = vld [vmem:[%s7 + $0x41c] sm:$0xff]
        %v2676 = vld [vmem:[%s7 + $0x424] sm:$0xf]
        %v2677 = vld [vmem:[%s7 + $0x428] sm:$0xff]
        %v2678 = vld [vmem:[%s7 + $0x430] sm:$0xff]
        %v2679 = vld [vmem:[%s7 + $0x438] sm:$0xff]
        %v2680 = vld [vmem:[%s7 + $0x440] sm:$0xf]
        %v2681 = vld [vmem:[%s7 + $0x444] sm:$0xff]
        %v2682 = vld [vmem:[%s7 + $0x44c] sm:$0xff]
        %v2683 = vld [vmem:[%s7 + $0x454] sm:$0xff]
        %v2684 = vld [vmem:[%s7 + $0x45c] sm:$0xf]
        %v2685 = vld [vmem:[%s7 + $0x460] sm:$0xff]
        %v2686 = vld [vmem:[%s7 + $0x468] sm:$0xff]
        %v2687 = vld [vmem:[%s7 + $0x470] sm:$0xff]
        %v2688 = vld [vmem:[%s7 + $0x478] sm:$0xf]
        %v2689 = vld [vmem:[%s7 + $0x47c] sm:$0xff]
        %v2690 = vld [vmem:[%s7 + $0x484] sm:$0xff]
        %v2691 = vld [vmem:[%s7 + $0x48c] sm:$0xff]
        %v2692 = vld [vmem:[%s7 + $0x494] sm:$0xf]
        %v2693 = vld [vmem:[%s7 + $0x498] sm:$0xff]
        %v2694 = vld [vmem:[%s7 + $0x4a0] sm:$0xff]
        %v2695 = vld [vmem:[%s7 + $0x4a8] sm:$0xff]
        %v2696 = vld [vmem:[%s7 + $0x4b0] sm:$0xf]
        %v2697 = vld [vmem:[%s7 + $0x4b4] sm:$0xff]
        %v2698 = vld [vmem:[%s7 + $0x4bc] sm:$0xff]
        %v2699 = vld [vmem:[%s7 + $0x4c4] sm:$0xff]
        %v2700 = vld [vmem:[%s7 + $0x4cc] sm:$0xf]
        %v2701 = vld [vmem:[%s7 + $0x4d0] sm:$0xff]
        %v2702 = vld [vmem:[%s7 + $0x4d8] sm:$0xff]
        %v2703 = vld [vmem:[%s7 + $0x4e0] sm:$0xff]
        %v2704 = vld [vmem:[%s7 + $0x4e8] sm:$0xf]
        %v2705 = vld [vmem:[%s7 + $0x4ec] sm:$0xff]
        %v2706 = vld [vmem:[%s7 + $0x4f4] sm:$0xff]
        %v2707 = vld [vmem:[%s7 + $0x4fc] sm:$0xff]
        %v2708 = vld [vmem:[%s7 + $0x504] sm:$0xf]
        %v2709 = vld [vmem:[%s7 + $0x508] sm:$0xff]
        %v2710 = vld [vmem:[%s7 + $0x510] sm:$0xff]
        %v2711 = vld [vmem:[%s7 + $0x518] sm:$0xff]
        %v2712 = vld [vmem:[%s7 + $0x520] sm:$0xf]
        %v2713 = vld [vmem:[%s7 + $0x524] sm:$0xff]
        %v2714 = vld [vmem:[%s7 + $0x52c] sm:$0xff]
        %v2715 = vld [vmem:[%s7 + $0x534] sm:$0xff]
        %v2716 = vld [vmem:[%s7 + $0x53c] sm:$0xf]
        %v2717 = vld [vmem:[%s7 + $0x540] sm:$0xff]
        %v2718 = vld [vmem:[%s7 + $0x548] sm:$0xff]
        %v2719 = vld [vmem:[%s7 + $0x550] sm:$0xff]
        %v2720 = vld [vmem:[%s7 + $0x558] sm:$0xf]
        %v2721 = vld [vmem:[%s8] sm:$0x7f]
        %v2723 = vlaneseq
        %v2724 = vshrl.u32 %v2723, 7
        %v2725 = vsub.s32 0, %v2724
        %v2726 = vrot.slane %v2721, %v2725
        %v2727 = vlaneseq
        %v2728 = vshrl.u32 %v2727, 7
        %v2729 = vsub.s32 1, %v2728
        %v2730 = vrot.slane %v2721, %v2729
        %v2731 = vlaneseq
        %v2732 = vshrl.u32 %v2731, 7
        %v2733 = vsub.s32 2, %v2732
        %v2734 = vrot.slane %v2721, %v2733
        %v2735 = vlaneseq
        %v2736 = vshrl.u32 %v2735, 7
        %v2737 = vsub.s32 3, %v2736
        %v2738 = vrot.slane %v2721, %v2737
        %v2739 = vlaneseq
        %v2740 = vshrl.u32 %v2739, 7
        %v2741 = vsub.s32 4, %v2740
        %v2742 = vrot.slane %v2721, %v2741
        %v2743 = vlaneseq
        %v2744 = vshrl.u32 %v2743, 7
        %v2745 = vsub.s32 5, %v2744
        %v2746 = vrot.slane %v2721, %v2745
        %v2747 = vlaneseq
        %v2748 = vshrl.u32 %v2747, 7
        %v2749 = vsub.s32 6, %v2748
        %v2750 = vrot.slane %v2721, %v2749
        %v2954 = vunpack.c.l.b16 %v2525
        %v2955 = vunpack.c.h.b16 %v2525
        %v2956 = vunpack.c.l.b16 %v2526
        %v2957 = vunpack.c.h.b16 %v2526
        %v2958 = vunpack.c.l.b16 %v2527
        %v2959 = vunpack.c.h.b16 %v2527
        %v2960 = vunpack.c.l.b16 %v2528
        %v2961 = vunpack.c.l.b16 %v2529
        %v2962 = vunpack.c.h.b16 %v2529
        %v2963 = vunpack.c.l.b16 %v2530
        %v2964 = vunpack.c.h.b16 %v2530
        %v2965 = vunpack.c.l.b16 %v2531
        %v2966 = vunpack.c.h.b16 %v2531
        %v2967 = vunpack.c.l.b16 %v2532
        %v2968 = vunpack.c.l.b16 %v2533
        %v2969 = vunpack.c.h.b16 %v2533
        %v2970 = vunpack.c.l.b16 %v2534
        %v2971 = vunpack.c.h.b16 %v2534
        %v2972 = vunpack.c.l.b16 %v2535
        %v2973 = vunpack.c.h.b16 %v2535
        %v2974 = vunpack.c.l.b16 %v2536
        %v2975 = vunpack.c.l.b16 %v2537
        %v2976 = vunpack.c.h.b16 %v2537
        %v2977 = vunpack.c.l.b16 %v2538
        %v2978 = vunpack.c.h.b16 %v2538
        %v2979 = vunpack.c.l.b16 %v2539
        %v2980 = vunpack.c.h.b16 %v2539
        %v2981 = vunpack.c.l.b16 %v2540
        %v2982 = vunpack.c.l.b16 %v2541
        %v2983 = vunpack.c.h.b16 %v2541
        %v2984 = vunpack.c.l.b16 %v2542
        %v2985 = vunpack.c.h.b16 %v2542
        %v2986 = vunpack.c.l.b16 %v2543
        %v2987 = vunpack.c.h.b16 %v2543
        %v2988 = vunpack.c.l.b16 %v2544
        %v2989 = vunpack.c.l.b16 %v2545
        %v2990 = vunpack.c.h.b16 %v2545
        %v2991 = vunpack.c.l.b16 %v2546
        %v2992 = vunpack.c.h.b16 %v2546
        %v2993 = vunpack.c.l.b16 %v2547
        %v2994 = vunpack.c.h.b16 %v2547
        %v2995 = vunpack.c.l.b16 %v2548
        %v2996 = vunpack.c.l.b16 %v2549
        %v2997 = vunpack.c.h.b16 %v2549
        %v2998 = vunpack.c.l.b16 %v2550
        %v2999 = vunpack.c.h.b16 %v2550
        %v3000 = vunpack.c.l.b16 %v2551
        %v3001 = vunpack.c.h.b16 %v2551
        %v3002 = vunpack.c.l.b16 %v2552
        %v3003 = vunpack.c.l.b16 %v2553
        %v3004 = vunpack.c.h.b16 %v2553
        %v3005 = vunpack.c.l.b16 %v2554
        %v3006 = vunpack.c.h.b16 %v2554
        %v3007 = vunpack.c.l.b16 %v2555
        %v3008 = vunpack.c.h.b16 %v2555
        %v3009 = vunpack.c.l.b16 %v2556
        %v3010 = vunpack.c.l.b16 %v2557
        %v3011 = vunpack.c.h.b16 %v2557
        %v3012 = vunpack.c.l.b16 %v2558
        %v3013 = vunpack.c.h.b16 %v2558
        %v3014 = vunpack.c.l.b16 %v2559
        %v3015 = vunpack.c.h.b16 %v2559
        %v3016 = vunpack.c.l.b16 %v2560
        %v3017 = vunpack.c.l.b16 %v2561
        %v3018 = vunpack.c.h.b16 %v2561
        %v3019 = vunpack.c.l.b16 %v2562
        %v3020 = vunpack.c.h.b16 %v2562
        %v3021 = vunpack.c.l.b16 %v2563
        %v3022 = vunpack.c.h.b16 %v2563
        %v3023 = vunpack.c.l.b16 %v2564
        %v3024 = vunpack.c.l.b16 %v2565
        %v3025 = vunpack.c.h.b16 %v2565
        %v3026 = vunpack.c.l.b16 %v2566
        %v3027 = vunpack.c.h.b16 %v2566
        %v3028 = vunpack.c.l.b16 %v2567
        %v3029 = vunpack.c.h.b16 %v2567
        %v3030 = vunpack.c.l.b16 %v2568
        %v3031 = vunpack.c.l.b16 %v2569
        %v3032 = vunpack.c.h.b16 %v2569
        %v3033 = vunpack.c.l.b16 %v2570
        %v3034 = vunpack.c.h.b16 %v2570
        %v3035 = vunpack.c.l.b16 %v2571
        %v3036 = vunpack.c.h.b16 %v2571
        %v3037 = vunpack.c.l.b16 %v2572
        %v3038 = vunpack.c.l.b16 %v2573
        %v3039 = vunpack.c.h.b16 %v2573
        %v3040 = vunpack.c.l.b16 %v2574
        %v3041 = vunpack.c.h.b16 %v2574
        %v3042 = vunpack.c.l.b16 %v2575
        %v3043 = vunpack.c.h.b16 %v2575
        %v3044 = vunpack.c.l.b16 %v2576
        %v3045 = vunpack.c.l.b16 %v2577
        %v3046 = vunpack.c.h.b16 %v2577
        %v3047 = vunpack.c.l.b16 %v2578
        %v3048 = vunpack.c.h.b16 %v2578
        %v3049 = vunpack.c.l.b16 %v2579
        %v3050 = vunpack.c.h.b16 %v2579
        %v3051 = vunpack.c.l.b16 %v2580
        %v3052 = vunpack.c.l.b16 %v2581
        %v3053 = vunpack.c.h.b16 %v2581
        %v3054 = vunpack.c.l.b16 %v2582
        %v3055 = vunpack.c.h.b16 %v2582
        %v3056 = vunpack.c.l.b16 %v2583
        %v3057 = vunpack.c.h.b16 %v2583
        %v3058 = vunpack.c.l.b16 %v2584
        %v3059 = vunpack.c.l.b16 %v2585
        %v3060 = vunpack.c.h.b16 %v2585
        %v3061 = vunpack.c.l.b16 %v2586
        %v3062 = vunpack.c.h.b16 %v2586
        %v3063 = vunpack.c.l.b16 %v2587
        %v3064 = vunpack.c.h.b16 %v2587
        %v3065 = vunpack.c.l.b16 %v2588
        %v3066 = vunpack.c.l.b16 %v2589
        %v3067 = vunpack.c.h.b16 %v2589
        %v3068 = vunpack.c.l.b16 %v2590
        %v3069 = vunpack.c.h.b16 %v2590
        %v3070 = vunpack.c.l.b16 %v2591
        %v3071 = vunpack.c.h.b16 %v2591
        %v3072 = vunpack.c.l.b16 %v2592
        %v3073 = vunpack.c.l.b16 %v2593
        %v3074 = vunpack.c.h.b16 %v2593
        %v3075 = vunpack.c.l.b16 %v2594
        %v3076 = vunpack.c.h.b16 %v2594
        %v3077 = vunpack.c.l.b16 %v2595
        %v3078 = vunpack.c.h.b16 %v2595
        %v3079 = vunpack.c.l.b16 %v2596
        %v3080 = vunpack.c.l.b16 %v2597
        %v3081 = vunpack.c.h.b16 %v2597
        %v3082 = vunpack.c.l.b16 %v2598
        %v3083 = vunpack.c.h.b16 %v2598
        %v3084 = vunpack.c.l.b16 %v2599
        %v3085 = vunpack.c.h.b16 %v2599
        %v3086 = vunpack.c.l.b16 %v2600
        %v3087 = vunpack.c.l.b16 %v2601
        %v3088 = vunpack.c.h.b16 %v2601
        %v3089 = vunpack.c.l.b16 %v2602
        %v3090 = vunpack.c.h.b16 %v2602
        %v3091 = vunpack.c.l.b16 %v2603
        %v3092 = vunpack.c.h.b16 %v2603
        %v3093 = vunpack.c.l.b16 %v2604
        %v3094 = vunpack.c.l.b16 %v2605
        %v3095 = vunpack.c.h.b16 %v2605
        %v3096 = vunpack.c.l.b16 %v2606
        %v3097 = vunpack.c.h.b16 %v2606
        %v3098 = vunpack.c.l.b16 %v2607
        %v3099 = vunpack.c.h.b16 %v2607
        %v3100 = vunpack.c.l.b16 %v2608
        %v3101 = vunpack.c.l.b16 %v2609
        %v3102 = vunpack.c.h.b16 %v2609
        %v3103 = vunpack.c.l.b16 %v2610
        %v3104 = vunpack.c.h.b16 %v2610
        %v3105 = vunpack.c.l.b16 %v2611
        %v3106 = vunpack.c.h.b16 %v2611
        %v3107 = vunpack.c.l.b16 %v2612
        %v3108 = vunpack.c.l.b16 %v2613
        %v3109 = vunpack.c.h.b16 %v2613
        %v3110 = vunpack.c.l.b16 %v2614
        %v3111 = vunpack.c.h.b16 %v2614
        %v3112 = vunpack.c.l.b16 %v2615
        %v3113 = vunpack.c.h.b16 %v2615
        %v3114 = vunpack.c.l.b16 %v2616
        %v3115 = vunpack.c.l.b16 %v2617
        %v3116 = vunpack.c.h.b16 %v2617
        %v3117 = vunpack.c.l.b16 %v2618
        %v3118 = vunpack.c.h.b16 %v2618
        %v3119 = vunpack.c.l.b16 %v2619
        %v3120 = vunpack.c.h.b16 %v2619
        %v3121 = vunpack.c.l.b16 %v2620
        %v3122 = vunpack.c.l.b16 %v2621
        %v3123 = vunpack.c.h.b16 %v2621
        %v3124 = vunpack.c.l.b16 %v2622
        %v3125 = vunpack.c.h.b16 %v2622
        %v3126 = vunpack.c.l.b16 %v2623
        %v3127 = vunpack.c.h.b16 %v2623
        %v3128 = vunpack.c.l.b16 %v2624
        %v3129 = vunpack.c.l.b16 %v2625
        %v3130 = vunpack.c.h.b16 %v2625
        %v3131 = vunpack.c.l.b16 %v2626
        %v3132 = vunpack.c.h.b16 %v2626
        %v3133 = vunpack.c.l.b16 %v2627
        %v3134 = vunpack.c.h.b16 %v2627
        %v3135 = vunpack.c.l.b16 %v2628
        %v3136 = vunpack.c.l.b16 %v2629
        %v3137 = vunpack.c.h.b16 %v2629
        %v3138 = vunpack.c.l.b16 %v2630
        %v3139 = vunpack.c.h.b16 %v2630
        %v3140 = vunpack.c.l.b16 %v2631
        %v3141 = vunpack.c.h.b16 %v2631
        %v3142 = vunpack.c.l.b16 %v2632
        %v3143 = vunpack.c.l.b16 %v2633
        %v3144 = vunpack.c.h.b16 %v2633
        %v3145 = vunpack.c.l.b16 %v2634
        %v3146 = vunpack.c.h.b16 %v2634
        %v3147 = vunpack.c.l.b16 %v2635
        %v3148 = vunpack.c.h.b16 %v2635
        %v3149 = vunpack.c.l.b16 %v2636
        %v3150 = vunpack.c.l.b16 %v2637
        %v3151 = vunpack.c.h.b16 %v2637
        %v3152 = vunpack.c.l.b16 %v2638
        %v3153 = vunpack.c.h.b16 %v2638
        %v3154 = vunpack.c.l.b16 %v2639
        %v3155 = vunpack.c.h.b16 %v2639
        %v3156 = vunpack.c.l.b16 %v2640
        %v3157 = vunpack.c.l.b16 %v2641
        %v3158 = vunpack.c.h.b16 %v2641
        %v3159 = vunpack.c.l.b16 %v2642
        %v3160 = vunpack.c.h.b16 %v2642
        %v3161 = vunpack.c.l.b16 %v2643
        %v3162 = vunpack.c.h.b16 %v2643
        %v3163 = vunpack.c.l.b16 %v2644
        %v3164 = vunpack.c.l.b16 %v2645
        %v3165 = vunpack.c.h.b16 %v2645
        %v3166 = vunpack.c.l.b16 %v2646
        %v3167 = vunpack.c.h.b16 %v2646
        %v3168 = vunpack.c.l.b16 %v2647
        %v3169 = vunpack.c.h.b16 %v2647
        %v3170 = vunpack.c.l.b16 %v2648
        %v3171 = vunpack.c.l.b16 %v2649
        %v3172 = vunpack.c.h.b16 %v2649
        %v3173 = vunpack.c.l.b16 %v2650
        %v3174 = vunpack.c.h.b16 %v2650
        %v3175 = vunpack.c.l.b16 %v2651
        %v3176 = vunpack.c.h.b16 %v2651
        %v3177 = vunpack.c.l.b16 %v2652
        %v3178 = vunpack.c.l.b16 %v2653
        %v3179 = vunpack.c.h.b16 %v2653
        %v3180 = vunpack.c.l.b16 %v2654
        %v3181 = vunpack.c.h.b16 %v2654
        %v3182 = vunpack.c.l.b16 %v2655
        %v3183 = vunpack.c.h.b16 %v2655
        %v3184 = vunpack.c.l.b16 %v2656
        %v3185 = vunpack.c.l.b16 %v2657
        %v3186 = vunpack.c.h.b16 %v2657
        %v3187 = vunpack.c.l.b16 %v2658
        %v3188 = vunpack.c.h.b16 %v2658
        %v3189 = vunpack.c.l.b16 %v2659
        %v3190 = vunpack.c.h.b16 %v2659
        %v3191 = vunpack.c.l.b16 %v2660
        %v3192 = vunpack.c.l.b16 %v2661
        %v3193 = vunpack.c.h.b16 %v2661
        %v3194 = vunpack.c.l.b16 %v2662
        %v3195 = vunpack.c.h.b16 %v2662
        %v3196 = vunpack.c.l.b16 %v2663
        %v3197 = vunpack.c.h.b16 %v2663
        %v3198 = vunpack.c.l.b16 %v2664
        %v3199 = vunpack.c.l.b16 %v2665
        %v3200 = vunpack.c.h.b16 %v2665
        %v3201 = vunpack.c.l.b16 %v2666
        %v3202 = vunpack.c.h.b16 %v2666
        %v3203 = vunpack.c.l.b16 %v2667
        %v3204 = vunpack.c.h.b16 %v2667
        %v3205 = vunpack.c.l.b16 %v2668
        %v3206 = vunpack.c.l.b16 %v2669
        %v3207 = vunpack.c.h.b16 %v2669
        %v3208 = vunpack.c.l.b16 %v2670
        %v3209 = vunpack.c.h.b16 %v2670
        %v3210 = vunpack.c.l.b16 %v2671
        %v3211 = vunpack.c.h.b16 %v2671
        %v3212 = vunpack.c.l.b16 %v2672
        %v3213 = vunpack.c.l.b16 %v2673
        %v3214 = vunpack.c.h.b16 %v2673
        %v3215 = vunpack.c.l.b16 %v2674
        %v3216 = vunpack.c.h.b16 %v2674
        %v3217 = vunpack.c.l.b16 %v2675
        %v3218 = vunpack.c.h.b16 %v2675
        %v3219 = vunpack.c.l.b16 %v2676
        %v3220 = vunpack.c.l.b16 %v2677
        %v3221 = vunpack.c.h.b16 %v2677
        %v3222 = vunpack.c.l.b16 %v2678
        %v3223 = vunpack.c.h.b16 %v2678
        %v3224 = vunpack.c.l.b16 %v2679
        %v3225 = vunpack.c.h.b16 %v2679
        %v3226 = vunpack.c.l.b16 %v2680
        %v3227 = vunpack.c.l.b16 %v2681
        %v3228 = vunpack.c.h.b16 %v2681
        %v3229 = vunpack.c.l.b16 %v2682
        %v3230 = vunpack.c.h.b16 %v2682
        %v3231 = vunpack.c.l.b16 %v2683
        %v3232 = vunpack.c.h.b16 %v2683
        %v3233 = vunpack.c.l.b16 %v2684
        %v3234 = vunpack.c.l.b16 %v2685
        %v3235 = vunpack.c.h.b16 %v2685
        %v3236 = vunpack.c.l.b16 %v2686
        %v3237 = vunpack.c.h.b16 %v2686
        %v3238 = vunpack.c.l.b16 %v2687
        %v3239 = vunpack.c.h.b16 %v2687
        %v3240 = vunpack.c.l.b16 %v2688
        %v3241 = vunpack.c.l.b16 %v2689
        %v3242 = vunpack.c.h.b16 %v2689
        %v3243 = vunpack.c.l.b16 %v2690
        %v3244 = vunpack.c.h.b16 %v2690
        %v3245 = vunpack.c.l.b16 %v2691
        %v3246 = vunpack.c.h.b16 %v2691
        %v3247 = vunpack.c.l.b16 %v2692
        %v3248 = vunpack.c.l.b16 %v2693
        %v3249 = vunpack.c.h.b16 %v2693
        %v3250 = vunpack.c.l.b16 %v2694
        %v3251 = vunpack.c.h.b16 %v2694
        %v3252 = vunpack.c.l.b16 %v2695
        %v3253 = vunpack.c.h.b16 %v2695
        %v3254 = vunpack.c.l.b16 %v2696
        %v3255 = vunpack.c.l.b16 %v2697
        %v3256 = vunpack.c.h.b16 %v2697
        %v3257 = vunpack.c.l.b16 %v2698
        %v3258 = vunpack.c.h.b16 %v2698
        %v3259 = vunpack.c.l.b16 %v2699
        %v3260 = vunpack.c.h.b16 %v2699
        %v3261 = vunpack.c.l.b16 %v2700
        %v3262 = vunpack.c.l.b16 %v2701
        %v3263 = vunpack.c.h.b16 %v2701
        %v3264 = vunpack.c.l.b16 %v2702
        %v3265 = vunpack.c.h.b16 %v2702
        %v3266 = vunpack.c.l.b16 %v2703
        %v3267 = vunpack.c.h.b16 %v2703
        %v3268 = vunpack.c.l.b16 %v2704
        %v3269 = vunpack.c.l.b16 %v2705
        %v3270 = vunpack.c.h.b16 %v2705
        %v3271 = vunpack.c.l.b16 %v2706
        %v3272 = vunpack.c.h.b16 %v2706
        %v3273 = vunpack.c.l.b16 %v2707
        %v3274 = vunpack.c.h.b16 %v2707
        %v3275 = vunpack.c.l.b16 %v2708
        %v3276 = vunpack.c.l.b16 %v2709
        %v3277 = vunpack.c.h.b16 %v2709
        %v3278 = vunpack.c.l.b16 %v2710
        %v3279 = vunpack.c.h.b16 %v2710
        %v3280 = vunpack.c.l.b16 %v2711
        %v3281 = vunpack.c.h.b16 %v2711
        %v3282 = vunpack.c.l.b16 %v2712
        %v3283 = vunpack.c.l.b16 %v2713
        %v3284 = vunpack.c.h.b16 %v2713
        %v3285 = vunpack.c.l.b16 %v2714
        %v3286 = vunpack.c.h.b16 %v2714
        %v3287 = vunpack.c.l.b16 %v2715
        %v3288 = vunpack.c.h.b16 %v2715
        %v3289 = vunpack.c.l.b16 %v2716
        %v3290 = vunpack.c.l.b16 %v2717
        %v3291 = vunpack.c.h.b16 %v2717
        %v3292 = vunpack.c.l.b16 %v2718
        %v3293 = vunpack.c.h.b16 %v2718
        %v3294 = vunpack.c.l.b16 %v2719
        %v3295 = vunpack.c.h.b16 %v2719
        %v3296 = vunpack.c.l.b16 %v2720
        %v3297 = vpack.c.b16 %v2961, %v2954
        %v3298 = vpack.c.b16 %v2962, %v2955
        %v3299 = vpack.c.b16 %v2963, %v2956
        %v3300 = vpack.c.b16 %v2964, %v2957
        %v3301 = vpack.c.b16 %v2965, %v2958
        %v3302 = vpack.c.b16 %v2966, %v2959
        %v3303 = vpack.c.b16 %v2967, %v2960
        %v3304 = vpack.c.b16 %v2975, %v2968
        %v3305 = vpack.c.b16 %v2976, %v2969
        %v3306 = vpack.c.b16 %v2977, %v2970
        %v3307 = vpack.c.b16 %v2978, %v2971
        %v3308 = vpack.c.b16 %v2979, %v2972
        %v3309 = vpack.c.b16 %v2980, %v2973
        %v3310 = vpack.c.b16 %v2981, %v2974
        %v3311 = vpack.c.b16 %v2989, %v2982
        %v3312 = vpack.c.b16 %v2990, %v2983
        %v3313 = vpack.c.b16 %v2991, %v2984
        %v3314 = vpack.c.b16 %v2992, %v2985
        %v3315 = vpack.c.b16 %v2993, %v2986
        %v3316 = vpack.c.b16 %v2994, %v2987
        %v3317 = vpack.c.b16 %v2995, %v2988
        %v3318 = vpack.c.b16 %v3003, %v2996
        %v3319 = vpack.c.b16 %v3004, %v2997
        %v3320 = vpack.c.b16 %v3005, %v2998
        %v3321 = vpack.c.b16 %v3006, %v2999
        %v3322 = vpack.c.b16 %v3007, %v3000
        %v3323 = vpack.c.b16 %v3008, %v3001
        %v3324 = vpack.c.b16 %v3009, %v3002
        %v3325 = vpack.c.b16 %v3017, %v3010
        %v3326 = vpack.c.b16 %v3018, %v3011
        %v3327 = vpack.c.b16 %v3019, %v3012
        %v3328 = vpack.c.b16 %v3020, %v3013
        %v3329 = vpack.c.b16 %v3021, %v3014
        %v3330 = vpack.c.b16 %v3022, %v3015
        %v3331 = vpack.c.b16 %v3023, %v3016
        %v3332 = vpack.c.b16 %v3031, %v3024
        %v3333 = vpack.c.b16 %v3032, %v3025
        %v3334 = vpack.c.b16 %v3033, %v3026
        %v3335 = vpack.c.b16 %v3034, %v3027
        %v3336 = vpack.c.b16 %v3035, %v3028
        %v3337 = vpack.c.b16 %v3036, %v3029
        %v3338 = vpack.c.b16 %v3037, %v3030
        %v3339 = vpack.c.b16 %v3045, %v3038
        %v3340 = vpack.c.b16 %v3046, %v3039
        %v3341 = vpack.c.b16 %v3047, %v3040
        %v3342 = vpack.c.b16 %v3048, %v3041
        %v3343 = vpack.c.b16 %v3049, %v3042
        %v3344 = vpack.c.b16 %v3050, %v3043
        %v3345 = vpack.c.b16 %v3051, %v3044
        %v3346 = vpack.c.b16 %v3059, %v3052
        %v3347 = vpack.c.b16 %v3060, %v3053
        %v3348 = vpack.c.b16 %v3061, %v3054
        %v3349 = vpack.c.b16 %v3062, %v3055
        %v3350 = vpack.c.b16 %v3063, %v3056
        %v3351 = vpack.c.b16 %v3064, %v3057
        %v3352 = vpack.c.b16 %v3065, %v3058
        %v3353 = vpack.c.b16 %v3073, %v3066
        %v3354 = vpack.c.b16 %v3074, %v3067
        %v3355 = vpack.c.b16 %v3075, %v3068
        %v3356 = vpack.c.b16 %v3076, %v3069
        %v3357 = vpack.c.b16 %v3077, %v3070
        %v3358 = vpack.c.b16 %v3078, %v3071
        %v3359 = vpack.c.b16 %v3079, %v3072
        %v3360 = vpack.c.b16 %v3087, %v3080
        %v3361 = vpack.c.b16 %v3088, %v3081
        %v3362 = vpack.c.b16 %v3089, %v3082
        %v3363 = vpack.c.b16 %v3090, %v3083
        %v3364 = vpack.c.b16 %v3091, %v3084
        %v3365 = vpack.c.b16 %v3092, %v3085
        %v3366 = vpack.c.b16 %v3093, %v3086
        %v3367 = vpack.c.b16 %v3101, %v3094
        %v3368 = vpack.c.b16 %v3102, %v3095
        %v3369 = vpack.c.b16 %v3103, %v3096
        %v3370 = vpack.c.b16 %v3104, %v3097
        %v3371 = vpack.c.b16 %v3105, %v3098
        %v3372 = vpack.c.b16 %v3106, %v3099
        %v3373 = vpack.c.b16 %v3107, %v3100
        %v3374 = vpack.c.b16 %v3115, %v3108
        %v3375 = vpack.c.b16 %v3116, %v3109
        %v3376 = vpack.c.b16 %v3117, %v3110
        %v3377 = vpack.c.b16 %v3118, %v3111
        %v3378 = vpack.c.b16 %v3119, %v3112
        %v3379 = vpack.c.b16 %v3120, %v3113
        %v3380 = vpack.c.b16 %v3121, %v3114
        %v3381 = vpack.c.b16 %v3129, %v3122
        %v3382 = vpack.c.b16 %v3130, %v3123
        %v3383 = vpack.c.b16 %v3131, %v3124
        %v3384 = vpack.c.b16 %v3132, %v3125
        %v3385 = vpack.c.b16 %v3133, %v3126
        %v3386 = vpack.c.b16 %v3134, %v3127
        %v3387 = vpack.c.b16 %v3135, %v3128
        %v3388 = vpack.c.b16 %v3143, %v3136
        %v3389 = vpack.c.b16 %v3144, %v3137
        %v3390 = vpack.c.b16 %v3145, %v3138
        %v3391 = vpack.c.b16 %v3146, %v3139
        %v3392 = vpack.c.b16 %v3147, %v3140
        %v3393 = vpack.c.b16 %v3148, %v3141
        %v3394 = vpack.c.b16 %v3149, %v3142
        %v3395 = vpack.c.b16 %v3157, %v3150
        %v3396 = vpack.c.b16 %v3158, %v3151
        %v3397 = vpack.c.b16 %v3159, %v3152
        %v3398 = vpack.c.b16 %v3160, %v3153
        %v3399 = vpack.c.b16 %v3161, %v3154
        %v3400 = vpack.c.b16 %v3162, %v3155
        %v3401 = vpack.c.b16 %v3163, %v3156
        %v3402 = vpack.c.b16 %v3171, %v3164
        %v3403 = vpack.c.b16 %v3172, %v3165
        %v3404 = vpack.c.b16 %v3173, %v3166
        %v3405 = vpack.c.b16 %v3174, %v3167
        %v3406 = vpack.c.b16 %v3175, %v3168
        %v3407 = vpack.c.b16 %v3176, %v3169
        %v3408 = vpack.c.b16 %v3177, %v3170
        %v3409 = vpack.c.b16 %v3185, %v3178
        %v3410 = vpack.c.b16 %v3186, %v3179
        %v3411 = vpack.c.b16 %v3187, %v3180
        %v3412 = vpack.c.b16 %v3188, %v3181
        %v3413 = vpack.c.b16 %v3189, %v3182
        %v3414 = vpack.c.b16 %v3190, %v3183
        %v3415 = vpack.c.b16 %v3191, %v3184
        %v3416 = vpack.c.b16 %v3199, %v3192
        %v3417 = vpack.c.b16 %v3200, %v3193
        %v3418 = vpack.c.b16 %v3201, %v3194
        %v3419 = vpack.c.b16 %v3202, %v3195
        %v3420 = vpack.c.b16 %v3203, %v3196
        %v3421 = vpack.c.b16 %v3204, %v3197
        %v3422 = vpack.c.b16 %v3205, %v3198
        %v3423 = vpack.c.b16 %v3213, %v3206
        %v3424 = vpack.c.b16 %v3214, %v3207
        %v3425 = vpack.c.b16 %v3215, %v3208
        %v3426 = vpack.c.b16 %v3216, %v3209
        %v3427 = vpack.c.b16 %v3217, %v3210
        %v3428 = vpack.c.b16 %v3218, %v3211
        %v3429 = vpack.c.b16 %v3219, %v3212
        %v3430 = vpack.c.b16 %v3227, %v3220
        %v3431 = vpack.c.b16 %v3228, %v3221
        %v3432 = vpack.c.b16 %v3229, %v3222
        %v3433 = vpack.c.b16 %v3230, %v3223
        %v3434 = vpack.c.b16 %v3231, %v3224
        %v3435 = vpack.c.b16 %v3232, %v3225
        %v3436 = vpack.c.b16 %v3233, %v3226
        %v3437 = vpack.c.b16 %v3241, %v3234
        %v3438 = vpack.c.b16 %v3242, %v3235
        %v3439 = vpack.c.b16 %v3243, %v3236
        %v3440 = vpack.c.b16 %v3244, %v3237
        %v3441 = vpack.c.b16 %v3245, %v3238
        %v3442 = vpack.c.b16 %v3246, %v3239
        %v3443 = vpack.c.b16 %v3247, %v3240
        %v3444 = vpack.c.b16 %v3255, %v3248
        %v3445 = vpack.c.b16 %v3256, %v3249
        %v3446 = vpack.c.b16 %v3257, %v3250
        %v3447 = vpack.c.b16 %v3258, %v3251
        %v3448 = vpack.c.b16 %v3259, %v3252
        %v3449 = vpack.c.b16 %v3260, %v3253
        %v3450 = vpack.c.b16 %v3261, %v3254
        %v3451 = vpack.c.b16 %v3269, %v3262
        %v3452 = vpack.c.b16 %v3270, %v3263
        %v3453 = vpack.c.b16 %v3271, %v3264
        %v3454 = vpack.c.b16 %v3272, %v3265
        %v3455 = vpack.c.b16 %v3273, %v3266
        %v3456 = vpack.c.b16 %v3274, %v3267
        %v3457 = vpack.c.b16 %v3275, %v3268
        %v3458 = vpack.c.b16 %v3283, %v3276
        %v3459 = vpack.c.b16 %v3284, %v3277
        %v3460 = vpack.c.b16 %v3285, %v3278
        %v3461 = vpack.c.b16 %v3286, %v3279
        %v3462 = vpack.c.b16 %v3287, %v3280
        %v3463 = vpack.c.b16 %v3288, %v3281
        %v3464 = vpack.c.b16 %v3289, %v3282
        %v3465 = vpack.c.b16 %v3290, %v3290
        %v3466 = vpack.c.b16 %v3291, %v3291
        %v3467 = vpack.c.b16 %v3292, %v3292
        %v3468 = vpack.c.b16 %v3293, %v3293
        %v3469 = vpack.c.b16 %v3294, %v3294
        %v3470 = vpack.c.b16 %v3295, %v3295
        %v3471 = vpack.c.b16 %v3296, %v3296
        %v3641 = vsel %vm2120, %v2524, 0
        %v3644 = vsel %vm2124, %v3465, 0
        %v3647 = vsel %vm2124, %v3466, 0
        %v3650 = vsel %vm2124, %v3467, 0
        %v3653 = vsel %vm2124, %v3468, 0
        %v3656 = vsel %vm2124, %v3469, 0
        %v3659 = vsel %vm2124, %v3470, 0
        %v3662 = vsel %vm2124, %v3471, 0
        %3664 = vmatprep.subr.bf16.mxu0 %v3347
        %3665 = vmatpush1.bf16.msra.mxu0 %v3346
        %3666 = vmatprep.subr.bf16.mxu0 %v3340
        %3667 = vmatpush1.bf16.msra.mxu0 %v3339
        %3668 = vmatprep.subr.bf16.mxu0 %v3333
        %3669 = vmatpush1.bf16.msra.mxu0 %v3332
        %3670 = vmatprep.subr.bf16.mxu0 %v3326
        %3671 = vmatpush1.bf16.msra.mxu0 %v3325
        %3672 = vmatprep.subr.bf16.mxu0 %v3319
        %3673 = vmatpush1.bf16.msra.mxu0 %v3318
        %3674 = vmatprep.subr.bf16.mxu0 %v3312
        %3675 = vmatpush1.bf16.msra.mxu0 %v3311
        %3676 = vmatprep.subr.bf16.mxu0 %v3305
        %3677 = vmatpush1.bf16.msra.mxu0 %v3304
        %3678 = vmatprep.subr.bf16.mxu0 %v3298
        %3679 = vmatpush1.bf16.msra.mxu0 %v3297
        %3680 = vmatprep.subr.bf16.mxu0 %v3403
        %3681 = vmatpush2.bf16.msra.mxu0 %v3402
        %3682 = vmatprep.subr.bf16.mxu0 %v3396
        %3683 = vmatpush2.bf16.msra.mxu0 %v3395
        %3684 = vmatprep.subr.bf16.mxu0 %v3389
        %3685 = vmatpush2.bf16.msra.mxu0 %v3388
        %3686 = vmatprep.subr.bf16.mxu0 %v3382
        %3687 = vmatpush2.bf16.msra.mxu0 %v3381
        %3688 = vmatprep.subr.bf16.mxu0 %v3375
        %3689 = vmatpush2.bf16.msra.mxu0 %v3374
        %3690 = vmatprep.subr.bf16.mxu0 %v3368
        %3691 = vmatpush2.bf16.msra.mxu0 %v3367
        %3692 = vmatprep.subr.bf16.mxu0 %v3361
        %3693 = vmatpush2.bf16.msra.mxu0 %v3360
        %3694 = vmatprep.subr.bf16.mxu0 %v3354
        %3695 = vmatpush2.bf16.msra.mxu0 %v3353
        %3696 = vmatprep.mubr.bf16.mxu0 %v2522
        %3697 = vmatmul.mubr.bf16.gmra.mxu0 %v2521
        %v3698 = vpop.f32.mrf.mxu0
        %v3699 = vadd.f32 %v2726, %v3698
        %v3700 = vpop.f32.mrf.mxu0
        %v3701 = vadd.f32 %v2730, %v3700
        %v3702 = vpop.f32.mrf.mxu0
        %v3703 = vadd.f32 %v2726, %v3702
        %v3704 = vpop.f32.mrf.mxu0
        %v3705 = vadd.f32 %v2730, %v3704
        %3706 = vdwg.mxu0
        %3707 = vmatprep.subr.bf16.mxu0 %v3459
        %3708 = vmatpush1.bf16.msra.mxu0 %v3458
        %3709 = vmatprep.subr.bf16.mxu0 %v3452
        %3710 = vmatpush1.bf16.msra.mxu0 %v3451
        %3711 = vmatprep.subr.bf16.mxu0 %v3445
        %3712 = vmatpush1.bf16.msra.mxu0 %v3444
        %3713 = vmatprep.subr.bf16.mxu0 %v3438
        %3714 = vmatpush1.bf16.msra.mxu0 %v3437
        %3715 = vmatprep.subr.bf16.mxu0 %v3431
        %3716 = vmatpush1.bf16.msra.mxu0 %v3430
        %3717 = vmatprep.subr.bf16.mxu0 %v3424
        %3718 = vmatpush1.bf16.msra.mxu0 %v3423
        %3719 = vmatprep.subr.bf16.mxu0 %v3417
        %3720 = vmatpush1.bf16.msra.mxu0 %v3416
        %3721 = vmatprep.subr.bf16.mxu0 %v3410
        %3722 = vmatpush1.bf16.msra.mxu0 %v3409
        %3723 = vmatprep.subr.bf16.mxu0 0
        %3724 = vmatpush2.bf16.msra.mxu0 0
        %3725 = vmatprep.subr.bf16.mxu0 0
        %3726 = vmatpush2.bf16.msra.mxu0 0
        %3727 = vmatprep.subr.bf16.mxu0 0
        %3728 = vmatpush2.bf16.msra.mxu0 0
        %3729 = vmatprep.subr.bf16.mxu0 0
        %3730 = vmatpush2.bf16.msra.mxu0 0
        %3731 = vmatprep.subr.bf16.mxu0 0
        %3732 = vmatpush2.bf16.msra.mxu0 0
        %3733 = vmatprep.subr.bf16.mxu0 0
        %3734 = vmatpush2.bf16.msra.mxu0 0
        %3735 = vmatprep.subr.bf16.mxu0 0
        %3736 = vmatpush2.bf16.msra.mxu0 0
        %3737 = vmatprep.subr.bf16.mxu0 %v3647
        %3738 = vmatpush2.bf16.msra.mxu0 %v3644
        %3739 = vmatprep.mubr.bf16.mxu0 %v3641
        %3740 = vmatmul.mubr.bf16.gmra.mxu0 %v2523
        %v3741 = vpop.f32.mrf.mxu0
        %v3742 = vadd.f32 %v3699, %v3741
        %v3743 = vpop.f32.mrf.mxu0
        %v3744 = vadd.f32 %v3701, %v3743
        %v3745 = vpop.f32.mrf.mxu0
        %v3746 = vadd.f32 %v3703, %v3745
        %v3747 = vpop.f32.mrf.mxu0
        %v3748 = vadd.f32 %v3705, %v3747
        %3749 = vdwg.mxu0
        %3750 = vmatprep.subr.bf16.mxu0 %v3349
        %3751 = vmatpush1.bf16.msra.mxu0 %v3348
        %3752 = vmatprep.subr.bf16.mxu0 %v3342
        %3753 = vmatpush1.bf16.msra.mxu0 %v3341
        %3754 = vmatprep.subr.bf16.mxu0 %v3335
        %3755 = vmatpush1.bf16.msra.mxu0 %v3334
        %3756 = vmatprep.subr.bf16.mxu0 %v3328
        %3757 = vmatpush1.bf16.msra.mxu0 %v3327
        %3758 = vmatprep.subr.bf16.mxu0 %v3321
        %3759 = vmatpush1.bf16.msra.mxu0 %v3320
        %3760 = vmatprep.subr.bf16.mxu0 %v3314
        %3761 = vmatpush1.bf16.msra.mxu0 %v3313
        %3762 = vmatprep.subr.bf16.mxu0 %v3307
        %3763 = vmatpush1.bf16.msra.mxu0 %v3306
        %3764 = vmatprep.subr.bf16.mxu0 %v3300
        %3765 = vmatpush1.bf16.msra.mxu0 %v3299
        %3766 = vmatprep.subr.bf16.mxu0 %v3405
        %3767 = vmatpush2.bf16.msra.mxu0 %v3404
        %3768 = vmatprep.subr.bf16.mxu0 %v3398
        %3769 = vmatpush2.bf16.msra.mxu0 %v3397
        %3770 = vmatprep.subr.bf16.mxu0 %v3391
        %3771 = vmatpush2.bf16.msra.mxu0 %v3390
        %3772 = vmatprep.subr.bf16.mxu0 %v3384
        %3773 = vmatpush2.bf16.msra.mxu0 %v3383
        %3774 = vmatprep.subr.bf16.mxu0 %v3377
        %3775 = vmatpush2.bf16.msra.mxu0 %v3376
        %3776 = vmatprep.subr.bf16.mxu0 %v3370
        %3777 = vmatpush2.bf16.msra.mxu0 %v3369
        %3778 = vmatprep.subr.bf16.mxu0 %v3363
        %3779 = vmatpush2.bf16.msra.mxu0 %v3362
        %3780 = vmatprep.subr.bf16.mxu0 %v3356
        %3781 = vmatpush2.bf16.msra.mxu0 %v3355
        %3782 = vmatprep.mubr.bf16.mxu0 %v2522
        %3783 = vmatmul.mubr.bf16.gmra.mxu0 %v2521
        %v3784 = vpop.f32.mrf.mxu0
        %v3785 = vadd.f32 %v2734, %v3784
        %v3786 = vpop.f32.mrf.mxu0
        %v3787 = vadd.f32 %v2738, %v3786
        %v3788 = vpop.f32.mrf.mxu0
        %v3789 = vadd.f32 %v2734, %v3788
        %v3790 = vpop.f32.mrf.mxu0
        %v3791 = vadd.f32 %v2738, %v3790
        %3792 = vdwg.mxu0
        %3793 = vmatprep.subr.bf16.mxu0 %v3461
        %3794 = vmatpush1.bf16.msra.mxu0 %v3460
        %3795 = vmatprep.subr.bf16.mxu0 %v3454
        %3796 = vmatpush1.bf16.msra.mxu0 %v3453
        %3797 = vmatprep.subr.bf16.mxu0 %v3447
        %3798 = vmatpush1.bf16.msra.mxu0 %v3446
        %3799 = vmatprep.subr.bf16.mxu0 %v3440
        %3800 = vmatpush1.bf16.msra.mxu0 %v3439
        %3801 = vmatprep.subr.bf16.mxu0 %v3433
        %3802 = vmatpush1.bf16.msra.mxu0 %v3432
        %3803 = vmatprep.subr.bf16.mxu0 %v3426
        %3804 = vmatpush1.bf16.msra.mxu0 %v3425
        %3805 = vmatprep.subr.bf16.mxu0 %v3419
        %3806 = vmatpush1.bf16.msra.mxu0 %v3418
        %3807 = vmatprep.subr.bf16.mxu0 %v3412
        %3808 = vmatpush1.bf16.msra.mxu0 %v3411
        %3809 = vmatprep.subr.bf16.mxu0 0
        %3810 = vmatpush2.bf16.msra.mxu0 0
        %3811 = vmatprep.subr.bf16.mxu0 0
        %3812 = vmatpush2.bf16.msra.mxu0 0
        %3813 = vmatprep.subr.bf16.mxu0 0
        %3814 = vmatpush2.bf16.msra.mxu0 0
        %3815 = vmatprep.subr.bf16.mxu0 0
        %3816 = vmatpush2.bf16.msra.mxu0 0
        %3817 = vmatprep.subr.bf16.mxu0 0
        %3818 = vmatpush2.bf16.msra.mxu0 0
        %3819 = vmatprep.subr.bf16.mxu0 0
        %3820 = vmatpush2.bf16.msra.mxu0 0
        %3821 = vmatprep.subr.bf16.mxu0 0
        %3822 = vmatpush2.bf16.msra.mxu0 0
        %3823 = vmatprep.subr.bf16.mxu0 %v3653
        %3824 = vmatpush2.bf16.msra.mxu0 %v3650
        %3825 = vmatprep.mubr.bf16.mxu0 %v3641
        %3826 = vmatmul.mubr.bf16.gmra.mxu0 %v2523
        %v3827 = vpop.f32.mrf.mxu0
        %v3828 = vadd.f32 %v3785, %v3827
        %v3829 = vpop.f32.mrf.mxu0
        %v3830 = vadd.f32 %v3787, %v3829
        %v3831 = vpop.f32.mrf.mxu0
        %v3832 = vadd.f32 %v3789, %v3831
        %v3833 = vpop.f32.mrf.mxu0
        %v3834 = vadd.f32 %v3791, %v3833
        %3835 = vdwg.mxu0
        %3836 = vmatprep.subr.bf16.mxu0 %v3351
        %3837 = vmatpush1.bf16.msra.mxu0 %v3350
        %3838 = vmatprep.subr.bf16.mxu0 %v3344
        %3839 = vmatpush1.bf16.msra.mxu0 %v3343
        %3840 = vmatprep.subr.bf16.mxu0 %v3337
        %3841 = vmatpush1.bf16.msra.mxu0 %v3336
        %3842 = vmatprep.subr.bf16.mxu0 %v3330
        %3843 = vmatpush1.bf16.msra.mxu0 %v3329
        %3844 = vmatprep.subr.bf16.mxu0 %v3323
        %3845 = vmatpush1.bf16.msra.mxu0 %v3322
        %3846 = vmatprep.subr.bf16.mxu0 %v3316
        %3847 = vmatpush1.bf16.msra.mxu0 %v3315
        %3848 = vmatprep.subr.bf16.mxu0 %v3309
        %3849 = vmatpush1.bf16.msra.mxu0 %v3308
        %3850 = vmatprep.subr.bf16.mxu0 %v3302
        %3851 = vmatpush1.bf16.msra.mxu0 %v3301
        %3852 = vmatprep.subr.bf16.mxu0 %v3407
        %3853 = vmatpush2.bf16.msra.mxu0 %v3406
        %3854 = vmatprep.subr.bf16.mxu0 %v3400
        %3855 = vmatpush2.bf16.msra.mxu0 %v3399
        %3856 = vmatprep.subr.bf16.mxu0 %v3393
        %3857 = vmatpush2.bf16.msra.mxu0 %v3392
        %3858 = vmatprep.subr.bf16.mxu0 %v3386
        %3859 = vmatpush2.bf16.msra.mxu0 %v3385
        %3860 = vmatprep.subr.bf16.mxu0 %v3379
        %3861 = vmatpush2.bf16.msra.mxu0 %v3378
        %3862 = vmatprep.subr.bf16.mxu0 %v3372
        %3863 = vmatpush2.bf16.msra.mxu0 %v3371
        %3864 = vmatprep.subr.bf16.mxu0 %v3365
        %3865 = vmatpush2.bf16.msra.mxu0 %v3364
        %3866 = vmatprep.subr.bf16.mxu0 %v3358
        %3867 = vmatpush2.bf16.msra.mxu0 %v3357
        %3868 = vmatprep.mubr.bf16.mxu0 %v2522
        %3869 = vmatmul.mubr.bf16.gmra.mxu0 %v2521
        %v3870 = vpop.f32.mrf.mxu0
        %v3871 = vadd.f32 %v2742, %v3870
        %v3872 = vpop.f32.mrf.mxu0
        %v3873 = vadd.f32 %v2746, %v3872
        %v3874 = vpop.f32.mrf.mxu0
        %v3875 = vadd.f32 %v2742, %v3874
        %v3876 = vpop.f32.mrf.mxu0
        %v3877 = vadd.f32 %v2746, %v3876
        %3878 = vdwg.mxu0
        %3879 = vmatprep.subr.bf16.mxu0 %v3463
        %3880 = vmatpush1.bf16.msra.mxu0 %v3462
        %3881 = vmatprep.subr.bf16.mxu0 %v3456
        %3882 = vmatpush1.bf16.msra.mxu0 %v3455
        %3883 = vmatprep.subr.bf16.mxu0 %v3449
        %3884 = vmatpush1.bf16.msra.mxu0 %v3448
        %3885 = vmatprep.subr.bf16.mxu0 %v3442
        %3886 = vmatpush1.bf16.msra.mxu0 %v3441
        %3887 = vmatprep.subr.bf16.mxu0 %v3435
        %3888 = vmatpush1.bf16.msra.mxu0 %v3434
        %3889 = vmatprep.subr.bf16.mxu0 %v3428
        %3890 = vmatpush1.bf16.msra.mxu0 %v3427
        %3891 = vmatprep.subr.bf16.mxu0 %v3421
        %3892 = vmatpush1.bf16.msra.mxu0 %v3420
        %3893 = vmatprep.subr.bf16.mxu0 %v3414
        %3894 = vmatpush1.bf16.msra.mxu0 %v3413
        %3895 = vmatprep.subr.bf16.mxu0 0
        %3896 = vmatpush2.bf16.msra.mxu0 0
        %3897 = vmatprep.subr.bf16.mxu0 0
        %3898 = vmatpush2.bf16.msra.mxu0 0
        %3899 = vmatprep.subr.bf16.mxu0 0
        %3900 = vmatpush2.bf16.msra.mxu0 0
        %3901 = vmatprep.subr.bf16.mxu0 0
        %3902 = vmatpush2.bf16.msra.mxu0 0
        %3903 = vmatprep.subr.bf16.mxu0 0
        %3904 = vmatpush2.bf16.msra.mxu0 0
        %3905 = vmatprep.subr.bf16.mxu0 0
        %3906 = vmatpush2.bf16.msra.mxu0 0
        %3907 = vmatprep.subr.bf16.mxu0 0
        %3908 = vmatpush2.bf16.msra.mxu0 0
        %3909 = vmatprep.subr.bf16.mxu0 %v3659
        %3910 = vmatpush2.bf16.msra.mxu0 %v3656
        %3911 = vmatprep.mubr.bf16.mxu0 %v3641
        %3912 = vmatmul.mubr.bf16.gmra.mxu0 %v2523
        %v3913 = vpop.f32.mrf.mxu0
        %v3914 = vadd.f32 %v3871, %v3913
        %v3915 = vpop.f32.mrf.mxu0
        %v3916 = vadd.f32 %v3873, %v3915
        %v3917 = vpop.f32.mrf.mxu0
        %v3918 = vadd.f32 %v3875, %v3917
        %v3919 = vpop.f32.mrf.mxu0
        %v3920 = vadd.f32 %v3877, %v3919
        %3921 = vdwg.mxu0
        %3922 = vmatprep.subr.bf16.mxu0 0
        %3923 = vmatpush1.bf16.msra.mxu0 %v3352
        %3924 = vmatprep.subr.bf16.mxu0 0
        %3925 = vmatpush1.bf16.msra.mxu0 %v3345
        %3926 = vmatprep.subr.bf16.mxu0 0
        %3927 = vmatpush1.bf16.msra.mxu0 %v3338
        %3928 = vmatprep.subr.bf16.mxu0 0
        %3929 = vmatpush1.bf16.msra.mxu0 %v3331
        %3930 = vmatprep.subr.bf16.mxu0 0
        %3931 = vmatpush1.bf16.msra.mxu0 %v3324
        %3932 = vmatprep.subr.bf16.mxu0 0
        %3933 = vmatpush1.bf16.msra.mxu0 %v3317
        %3934 = vmatprep.subr.bf16.mxu0 0
        %3935 = vmatpush1.bf16.msra.mxu0 %v3310
        %3936 = vmatprep.subr.bf16.mxu0 0
        %3937 = vmatpush1.bf16.msra.mxu0 %v3303
        %3938 = vmatprep.subr.bf16.mxu0 0
        %3939 = vmatpush2.bf16.msra.mxu0 %v3408
        %3940 = vmatprep.subr.bf16.mxu0 0
        %3941 = vmatpush2.bf16.msra.mxu0 %v3401
        %3942 = vmatprep.subr.bf16.mxu0 0
        %3943 = vmatpush2.bf16.msra.mxu0 %v3394
        %3944 = vmatprep.subr.bf16.mxu0 0
        %3945 = vmatpush2.bf16.msra.mxu0 %v3387
        %3946 = vmatprep.subr.bf16.mxu0 0
        %3947 = vmatpush2.bf16.msra.mxu0 %v3380
        %3948 = vmatprep.subr.bf16.mxu0 0
        %3949 = vmatpush2.bf16.msra.mxu0 %v3373
        %3950 = vmatprep.subr.bf16.mxu0 0
        %3951 = vmatpush2.bf16.msra.mxu0 %v3366
        %3952 = vmatprep.subr.bf16.mxu0 0
        %3953 = vmatpush2.bf16.msra.mxu0 %v3359
        %3954 = vmatprep.mubr.bf16.mxu0 %v2522
        %3955 = vmatmul.mubr.bf16.gmra.mxu0 %v2521
        %v3956 = vpop.f32.mrf.mxu0
        %v3957 = vadd.f32 %v2750, %v3956
        %v3958 = vpop.f32.mrf.mxu0
        %v3959 = vpop.f32.mrf.mxu0
        %v3960 = vadd.f32 %v2750, %v3959
        %v3961 = vpop.f32.mrf.mxu0
        %3962 = vdwg.mxu0
        %3963 = vmatprep.subr.bf16.mxu0 0
        %3964 = vmatpush1.bf16.msra.mxu0 %v3464
        %3965 = vmatprep.subr.bf16.mxu0 0
        %3966 = vmatpush1.bf16.msra.mxu0 %v3457
        %3967 = vmatprep.subr.bf16.mxu0 0
        %3968 = vmatpush1.bf16.msra.mxu0 %v3450
        %3969 = vmatprep.subr.bf16.mxu0 0
        %3970 = vmatpush1.bf16.msra.mxu0 %v3443
        %3971 = vmatprep.subr.bf16.mxu0 0
        %3972 = vmatpush1.bf16.msra.mxu0 %v3436
        %3973 = vmatprep.subr.bf16.mxu0 0
        %3974 = vmatpush1.bf16.msra.mxu0 %v3429
        %3975 = vmatprep.subr.bf16.mxu0 0
        %3976 = vmatpush1.bf16.msra.mxu0 %v3422
        %3977 = vmatprep.subr.bf16.mxu0 0
        %3978 = vmatpush1.bf16.msra.mxu0 %v3415
        %3979 = vmatprep.subr.bf16.mxu0 0
        %3980 = vmatpush2.bf16.msra.mxu0 0
        %3981 = vmatprep.subr.bf16.mxu0 0
        %3982 = vmatpush2.bf16.msra.mxu0 0
        %3983 = vmatprep.subr.bf16.mxu0 0
        %3984 = vmatpush2.bf16.msra.mxu0 0
        %3985 = vmatprep.subr.bf16.mxu0 0
        %3986 = vmatpush2.bf16.msra.mxu0 0
        %3987 = vmatprep.subr.bf16.mxu0 0
        %3988 = vmatpush2.bf16.msra.mxu0 0
        %3989 = vmatprep.subr.bf16.mxu0 0
        %3990 = vmatpush2.bf16.msra.mxu0 0
        %3991 = vmatprep.subr.bf16.mxu0 0
        %3992 = vmatpush2.bf16.msra.mxu0 0
        %3993 = vmatprep.subr.bf16.mxu0 0
        %3994 = vmatpush2.bf16.msra.mxu0 %v3662
        %3995 = vmatprep.mubr.bf16.mxu0 %v3641
        %3996 = vmatmul.mubr.bf16.gmra.mxu0 %v2523
        %v3997 = vpop.f32.mrf.mxu0
        %v3998 = vadd.f32 %v3957, %v3997
        %v3999 = vpop.f32.mrf.mxu0
        %v4000 = vpop.f32.mrf.mxu0
        %v4001 = vadd.f32 %v3960, %v4000
        %v4002 = vpop.f32.mrf.mxu0
        %4003 = vdwg.mxu0
        %v4004 = vxor.u32 %v3742, 2147483648
        %v4005 = vxor.u32 %v3744, 2147483648
        %v4006 = vxor.u32 %v3828, 2147483648
        %v4007 = vxor.u32 %v3830, 2147483648
        %v4008 = vxor.u32 %v3914, 2147483648
        %v4009 = vxor.u32 %v3916, 2147483648
        %v4010 = vxor.u32 %v3998, 2147483648
        %v4011 = vxor.u32 %v3746, 2147483648
        %v4012 = vxor.u32 %v3748, 2147483648
        %v4013 = vxor.u32 %v3832, 2147483648
        %v4014 = vxor.u32 %v3834, 2147483648
        %v4015 = vxor.u32 %v3918, 2147483648
        %v4016 = vxor.u32 %v3920, 2147483648
        %v4017 = vxor.u32 %v4001, 2147483648
        %v4018 = vmul.f32 %v4004, 1.442695
        %v4019 = vpow.pop %v4018
        %v4020 = vmul.f32 %v4005, 1.442695
        %v4021 = vpow.pop %v4020
        %v4022 = vmul.f32 %v4006, 1.442695
        %v4023 = vpow.pop %v4022
        %v4024 = vmul.f32 %v4007, 1.442695
        %v4025 = vpow.pop %v4024
        %v4026 = vmul.f32 %v4008, 1.442695
        %v4027 = vpow.pop %v4026
        %v4028 = vmul.f32 %v4009, 1.442695
        %v4029 = vpow.pop %v4028
        %v4030 = vmul.f32 %v4010, 1.442695
        %v4031 = vpow.pop %v4030
        %v4032 = vmul.f32 %v4011, 1.442695
        %v4033 = vpow.pop %v4032
        %v4034 = vmul.f32 %v4012, 1.442695
        %v4035 = vpow.pop %v4034
        %v4036 = vmul.f32 %v4013, 1.442695
        %v4037 = vpow.pop %v4036
        %v4038 = vmul.f32 %v4014, 1.442695
        %v4039 = vpow.pop %v4038
        %v4040 = vmul.f32 %v4015, 1.442695
        %v4041 = vpow.pop %v4040
        %v4042 = vmul.f32 %v4016, 1.442695
        %v4043 = vpow.pop %v4042
        %v4044 = vmul.f32 %v4017, 1.442695
        %v4045 = vpow.pop %v4044
        %v4046 = vadd.f32 %v4019, 1.0
        %v4047 = vadd.f32 %v4021, 1.0
        %v4048 = vadd.f32 %v4023, 1.0
        %v4049 = vadd.f32 %v4025, 1.0
        %v4050 = vadd.f32 %v4027, 1.0
        %v4051 = vadd.f32 %v4029, 1.0
        %v4052 = vadd.f32 %v4031, 1.0
        %v4053 = vadd.f32 %v4033, 1.0
        %v4054 = vadd.f32 %v4035, 1.0
        %v4055 = vadd.f32 %v4037, 1.0
        %v4056 = vadd.f32 %v4039, 1.0
        %v4057 = vadd.f32 %v4041, 1.0
        %v4058 = vadd.f32 %v4043, 1.0
        %v4059 = vadd.f32 %v4045, 1.0
        %v4060 = vrcp.pop %v4046
        %v4061 = vmul.f32 1.0, %v4060
        %v4062 = vrcp.pop %v4047
        %v4063 = vmul.f32 1.0, %v4062
        %v4064 = vrcp.pop %v4048
        %v4065 = vmul.f32 1.0, %v4064
        %v4066 = vrcp.pop %v4049
        %v4067 = vmul.f32 1.0, %v4066
        %v4068 = vrcp.pop %v4050
        %v4069 = vmul.f32 1.0, %v4068
        %v4070 = vrcp.pop %v4051
        %v4071 = vmul.f32 1.0, %v4070
        %v4072 = vrcp.pop %v4052
        %v4073 = vmul.f32 1.0, %v4072
        %v4074 = vrcp.pop %v4053
        %v4075 = vmul.f32 1.0, %v4074
        %v4076 = vrcp.pop %v4054
        %v4077 = vmul.f32 1.0, %v4076
        %v4078 = vrcp.pop %v4055
        %v4079 = vmul.f32 1.0, %v4078
        %v4080 = vrcp.pop %v4056
        %v4081 = vmul.f32 1.0, %v4080
        %v4082 = vrcp.pop %v4057
        %v4083 = vmul.f32 1.0, %v4082
        %v4084 = vrcp.pop %v4058
        %v4085 = vmul.f32 1.0, %v4084
        %v4086 = vrcp.pop %v4059
        %v4087 = vmul.f32 1.0, %v4086
        %4088 = vst [vmem:[%s328] sm:$0xff] %v4061
        %4089 = vst [vmem:[%s328 + $0x8] sm:$0xff] %v4063
        %4090 = vst [vmem:[%s328 + $0x10] sm:$0xff] %v4065
        %4091 = vst [vmem:[%s328 + $0x18] sm:$0xff] %v4067
        %4092 = vst [vmem:[%s328 + $0x20] sm:$0xff] %v4069
        %4093 = vst [vmem:[%s328 + $0x28] sm:$0xff] %v4071
        %4094 = vst.msk [vmem:[%s328 + $0x30] sm:$0xff] %vm1557, %v4073
        %4095 = vst [vmem:[%s328 + $0x38] sm:$0xff] %v4075
        %4096 = vst [vmem:[%s328 + $0x40] sm:$0xff] %v4077
        %4097 = vst [vmem:[%s328 + $0x48] sm:$0xff] %v4079
        %4098 = vst [vmem:[%s328 + $0x50] sm:$0xff] %v4081
        %4099 = vst [vmem:[%s328 + $0x58] sm:$0xff] %v4083
        %4100 = vst [vmem:[%s328 + $0x60] sm:$0xff] %v4085
        %4101 = vst.msk [vmem:[%s328 + $0x68] sm:$0xff] %vm1557, %v4087
        %s4102 = sand.u32 %s225, 1
        %s4103 = scalar_lea.sflag [#allocation3], %s4102
        %s4104 = sand.u32 %s225, 1
        %s4105 = smul.addr %s4104, 112
        %s4106 = scalar_lea.vmem [#allocation2], %s4105
        // Predicated region
        $region57: #{tpu_custom_call.1} parent=55 // pred_check
          %p4107 = pneg %p235
        $region58: #{tpu_custom_call.1} parent=55 // pred_check_branch
          %4109 = sbr.rel (%p4107) target = $region60
        $region59: #{tpu_custom_call.1} parent=55 // pred_region
          %s4110 = smul.u32 2, %s23
          %s4112 = ssub.s32 1792, 1792
          %4113 = vsyncadd %s4103, %s4112
          %s4114 = smul.addr %s4110, 7
          %s4115 = smul.addr %s4114, 128
          %s4116 = scalar_lea.hbm %s9, %s4115
          %s4117 = sshll.u32 %s4106, 4
          %s4118 = int_to_ptr.vmem [resolvable:$true] %s4117
          %4123 = dma.vmem_to_hbm [thread:$0]  %s4118, 1792, %s4116, %s4103, 896, 896, 56
        $region60: #{tpu_custom_call.1} parent=55 // pred_fallthru
          _
      $region56: #{tpu_custom_call.1} parent=5 // pred_fallthru
        _
      %p4124 = scmp.le.s32.totalorder 2, %s18
      // Predicated region
      $region61: #{tpu_custom_call.1} parent=5 // pred_check
        %p4125 = pneg %p4124
      $region62: #{tpu_custom_call.1} parent=5 // pred_check_branch
        %4127 = sbr.rel (%p4125) target = $region64
      $region63: #{tpu_custom_call.1} parent=5 // pred_region
        %s4128 = ssub.s32 %s18, 2
        // Predicated region
        $region65: #{tpu_custom_call.1} parent=63 // pred_check
          %p4129 = pneg %p241
        $region66: #{tpu_custom_call.1} parent=63 // pred_check_branch
          %4131 = sbr.rel (%p4129) target = $region68
        $region67: #{tpu_custom_call.1} parent=63 // pred_region
          %s4132 = sand.u32 %s226, 1
          %s4133 = scalar_lea.sflag [#allocation3], %s4132
          %s4134 = sand.u32 %s226, 1
          %s4135 = smul.addr %s4134, 112
          %s4136 = scalar_lea.vmem [#allocation2], %s4135
          %4137 = dma.done %s4133, 1792
        $region68: #{tpu_custom_call.1} parent=63 // pred_fallthru
          _
      $region64: #{tpu_custom_call.1} parent=5 // pred_fallthru
        _
    $region6: #{tpu_custom_call.1} parent=1 // loop_footer
      %s22 = sadd.s32 1, %s18
    $region7: #{tpu_custom_call.1} parent=1 // loop_footer_branch
      %17 = sbr.rel target = $region3
    $region8: #{tpu_custom_call.1} parent=1 // loop_exit
      _
    %4138 = vsyncpa [#allocation3], 1
    %s4139 = scalar_lea.sflag [#allocation3], 1
    %4140 = vsyncpa %s4139, 1

</llo_original>
